<compile_context>
chip_gen: v7x
topology: tpu7x:2x2x1
jax: 0.10.0
libtpu: 0.0.40
codegen_flags: <defaults>
</compile_context>

<pallas_src>
import jax
import jax.numpy as jnp
import numpy as np
from jax.experimental import pallas as pl
from jax.experimental.pallas import tpu as pltpu

EMBED = 1000                    # hidden_size1 in the module
NUM_HEADS = 10
HEAD_DIM = EMBED // NUM_HEADS   # 100
PADDED_E = 1024                 # lane-aligned embed dim (zero padded)
COL_TILE = 512                  # column tile of the fused QKV weight


# --------------------------------------------------------------------------
# Kernel 1: fused Q/K/V projection, pipelined over weight column tiles.
# --------------------------------------------------------------------------
def qkv_proj_kernel(feat_ref, w_ref, b_ref, qkv_ref):
    # feat_ref: (B, EMBED) bf16            -- same block every grid step
    # w_ref:    (1, EMBED, COL_TILE) bf16  -- streamed weight tile
    # b_ref:    (1, 1, COL_TILE) f32
    # qkv_ref:  (1, B, COL_TILE) f32
    acc = jnp.dot(feat_ref[...], w_ref[0],
                  preferred_element_type=jnp.float32)
    qkv_ref[0] = acc + b_ref[0]


# --------------------------------------------------------------------------
# Kernel 2: attention epilogue (mean-query, per-head softmax over the B keys,
# context, fused out_proj+classifier).  Tiny, grid-less, aligned math only.
# --------------------------------------------------------------------------
def attn_epilogue_kernel(qkv_ref, woc_ref, boc_ref, out_ref):
    # qkv_ref: (3, B, PADDED_E) f32 ; woc_ref: (1, PADDED_E) f32
    # boc_ref/out_ref: (1, 1) f32
    scale = jnp.float32(1.0 / (HEAD_DIM ** 0.5))
    q = jnp.mean(qkv_ref[0], axis=0, keepdims=True) * scale       # (1, PE)
    k = qkv_ref[1]                                                # (B, PE)
    v = qkv_ref[2]                                                # (B, PE)

    # Head-segment matrix: seg[e, h] = 1 iff lane e belongs to head h.
    # (padded lanes e >= EMBED belong to no head -> contribute zero)
    e_idx = jax.lax.broadcasted_iota(jnp.int32, (PADDED_E, NUM_HEADS), 0)
    h_idx = jax.lax.broadcasted_iota(jnp.int32, (PADDED_E, NUM_HEADS), 1)
    seg = ((e_idx >= h_idx * HEAD_DIM) &
           (e_idx < (h_idx + 1) * HEAD_DIM)).astype(jnp.float32)  # (PE, H)

    qk = q * k                                                    # (B, PE) VPU
    scores = jnp.dot(qk, seg, preferred_element_type=jnp.float32)  # (B, H)

    # softmax over the key axis (the B feature rows)
    m = jnp.max(scores, axis=0, keepdims=True)
    p = jnp.exp(scores - m)
    p = p / jnp.sum(p, axis=0, keepdims=True)                     # (B, H)

    # Broadcast per-head weights back onto embed lanes, reduce over keys.
    p_full = jax.lax.dot_general(p, seg, (((1,), (1,)), ((), ())),
                                 preferred_element_type=jnp.float32)  # (B, PE)
    ctx = jnp.sum(p_full * v, axis=0, keepdims=True)              # (1, PE)

    # Fused out_proj + classifier: out = ctx @ (Wc @ Wo)^T + (Wc @ bo + bc)
    out_ref[...] = (jnp.sum(ctx * woc_ref[...], axis=-1, keepdims=True)
                    + boc_ref[...])


# --------------------------------------------------------------------------
# One-time parameter re-layout (run OUTSIDE the jitted forward).
# --------------------------------------------------------------------------
def prepare_params(in_proj_w, in_proj_b, out_proj_w, out_proj_b, cls_w, cls_b):
    E, PE = EMBED, PADDED_E
    pad = PE - E
    # (3E, E) -> (3, E_out, E_in) -> (3, E_in, E_out) so the kernel does x @ W.
    w = jnp.transpose(in_proj_w.reshape(3, E, E), (0, 2, 1))
    w_qkv = jnp.pad(w, ((0, 0), (0, 0), (0, pad))).astype(jnp.bfloat16)
    b_qkv = jnp.pad(in_proj_b.reshape(3, 1, E),
                    ((0, 0), (0, 0), (0, pad))).astype(jnp.float32)
    # Fold out_proj and the classifier into one row + scalar (pure linear alg.)
    w_oc = jnp.pad(cls_w @ out_proj_w, ((0, 0), (0, pad))).astype(jnp.float32)
    b_oc = (cls_w @ out_proj_b + cls_b).reshape(1, 1).astype(jnp.float32)
    return w_qkv, b_qkv, w_oc, b_oc


def _full_spec(shape):
    n = len(shape)
    return pl.BlockSpec(shape, lambda *args, n=n: (0,) * n)


@jax.jit
def maxvit_attention_head(features, w_qkv, b_qkv, w_oc, b_oc):
    B = features.shape[0]
    feats_bf = features.astype(jnp.bfloat16)

    qkv = pl.pallas_call(
        qkv_proj_kernel,
        out_shape=jax.ShapeDtypeStruct((3, B, PADDED_E), jnp.float32),
        grid_spec=pltpu.PrefetchScalarGridSpec(
            num_scalar_prefetch=0,
            grid=(3, PADDED_E // COL_TILE),
            in_specs=[
                pl.BlockSpec((B, EMBED), lambda p, c: (0, 0)),
                pl.BlockSpec((1, EMBED, COL_TILE), lambda p, c: (p, 0, c)),
                pl.BlockSpec((1, 1, COL_TILE), lambda p, c: (p, 0, c)),
            ],
            out_specs=pl.BlockSpec((1, B, COL_TILE), lambda p, c: (p, 0, c)),
        ),
        compiler_params=pltpu.CompilerParams(
            dimension_semantics=("parallel", "parallel")),
        cost_estimate=pl.CostEstimate(
            flops=2 * B * EMBED * 3 * PADDED_E,
            transcendentals=0,
            bytes_accessed=(3 * EMBED * PADDED_E * 2 + B * EMBED * 2
                            + 3 * B * PADDED_E * 4 + 3 * PADDED_E * 4)),
    )(feats_bf, w_qkv, b_qkv)

    out = pl.pallas_call(
        attn_epilogue_kernel,
        out_shape=jax.ShapeDtypeStruct((1, 1), jnp.float32),
        in_specs=[_full_spec((3, B, PADDED_E)),
                  _full_spec((1, PADDED_E)),
                  _full_spec((1, 1))],
        out_specs=_full_spec((1, 1)),
    )(qkv, w_oc, b_oc)
    return out


def reference_forward(features, in_proj_w, in_proj_b,
                      out_proj_w, out_proj_b, cls_w, cls_b):
    """Pure-JAX f32 reference mirroring nn.MultiheadAttention + Linear."""
    E, H, D = EMBED, NUM_HEADS, HEAD_DIM
    B = features.shape[0]
    q_in = features.mean(0, keepdims=True)                  # (1, E)
    q = q_in @ in_proj_w[:E].T + in_proj_b[:E]
    k = features @ in_proj_w[E:2 * E].T + in_proj_b[E:2 * E]
    v = features @ in_proj_w[2 * E:].T + in_proj_b[2 * E:]
    qh = q.reshape(1, H, D).transpose(1, 0, 2)              # (H, 1, D)
    kh = k.reshape(B, H, D).transpose(1, 0, 2)              # (H, B, D)
    vh = v.reshape(B, H, D).transpose(1, 0, 2)
    scores = jnp.einsum('hqd,hkd->hqk', qh, kh) / jnp.float32(D ** 0.5)
    p = jax.nn.softmax(scores, axis=-1)
    ctx = jnp.einsum('hqk,hkd->hqd', p, vh)                 # (H, 1, D)
    attn = ctx.transpose(1, 0, 2).reshape(1, E)
    out = attn @ out_proj_w.T + out_proj_b
    return out @ cls_w.T + cls_b


if __name__ == "__main__":
    B = 8  # small batch of images -> B feature vectors from the backbone

    key = jax.random.PRNGKey(0)
    keys = jax.random.split(key, 8)
    init = lambda k, shape, s=0.02: (jax.random.normal(k, shape, jnp.float32) * s)

    # Stand-in for feature_extractor(x): (B, 1000) features.
    features = jax.random.normal(keys[0], (B, EMBED), jnp.float32)

    # nn.MultiheadAttention(1000, 10) parameters.
    in_proj_w = init(keys[1], (3 * EMBED, EMBED))
    in_proj_b = init(keys[2], (3 * EMBED,))
    out_proj_w = init(keys[3], (EMBED, EMBED))
    out_proj_b = init(keys[4], (EMBED,))
    # nn.Linear(1000, 1) classifier parameters.
    cls_w = init(keys[5], (1, EMBED))
    cls_b = init(keys[6], (1,))

    # One-time weight re-layout (outside jit, not on the per-call path).
    w_qkv, b_qkv, w_oc, b_oc = prepare_params(
        in_proj_w, in_proj_b, out_proj_w, out_proj_b, cls_w, cls_b)

    out = maxvit_attention_head(features, w_qkv, b_qkv, w_oc, b_oc)
    out = jax.block_until_ready(out)

    ref = reference_forward(features, in_proj_w, in_proj_b,
                            out_proj_w, out_proj_b, cls_w, cls_b)
    np.testing.assert_allclose(np.asarray(out), np.asarray(ref),
                               rtol=5e-2, atol=5e-2)
    print("KERNEL_OK")
</pallas_src>

<mosaic_0001>
module attributes {stable_mosaic.version = 11 : i64} {
  func.func @attn_epilogue_kernel(%arg0: memref<3x8x1024xf32, #tpu.memory_space<vmem>>, %arg1: memref<1x1024xf32, #tpu.memory_space<vmem>>, %arg2: memref<1x1xf32, #tpu.memory_space<vmem>>, %arg3: memref<1x1xf32, #tpu.memory_space<vmem>>) attributes {dimension_semantics = [], scalar_prefetch = 0 : i64, scratch_operands = 0 : i64, tpu.core_type = #tpu.core_type<tc>} {
    %c0 = arith.constant 0 : index
    %c0_0 = arith.constant 0 : index
    %c0_1 = arith.constant 0 : index
    %0 = vector.load %arg0[%c0, %c0_0, %c0_1] : memref<3x8x1024xf32, #tpu.memory_space<vmem>>, vector<1x8x1024xf32>
    %1 = vector.shape_cast %0 : vector<1x8x1024xf32> to vector<8x1024xf32>
    %cst = arith.constant dense<0.000000e+00> : vector<1024xf32>
    %2 = vector.multi_reduction <add>, %1, %cst [0] : vector<8x1024xf32> to vector<1024xf32>
    %3 = vector.shape_cast %2 : vector<1024xf32> to vector<1x1024xf32>
    %cst_2 = arith.constant 8.000000e+00 : f32
    %4 = vector.broadcast %cst_2 : f32 to vector<1x1024xf32>
    %5 = arith.divf %3, %4 : vector<1x1024xf32>
    %cst_3 = arith.constant 1.000000e-01 : f32
    %6 = vector.broadcast %cst_3 : f32 to vector<1x1024xf32>
    %7 = arith.mulf %5, %6 : vector<1x1024xf32>
    %c1 = arith.constant 1 : index
    %c0_4 = arith.constant 0 : index
    %c0_5 = arith.constant 0 : index
    %8 = vector.load %arg0[%c1, %c0_4, %c0_5] : memref<3x8x1024xf32, #tpu.memory_space<vmem>>, vector<1x8x1024xf32>
    %9 = vector.shape_cast %8 : vector<1x8x1024xf32> to vector<8x1024xf32>
    %c2 = arith.constant 2 : index
    %c0_6 = arith.constant 0 : index
    %c0_7 = arith.constant 0 : index
    %10 = vector.load %arg0[%c2, %c0_6, %c0_7] : memref<3x8x1024xf32, #tpu.memory_space<vmem>>, vector<1x8x1024xf32>
    %11 = vector.shape_cast %10 : vector<1x8x1024xf32> to vector<8x1024xf32>
    %12 = tpu.iota {dimensions = array<i32: 0>} : vector<1024x10xi32>
    %13 = tpu.iota {dimensions = array<i32: 1>} : vector<1024x10xi32>
    %c100_i32 = arith.constant 100 : i32
    %14 = vector.broadcast %c100_i32 : i32 to vector<1024x10xi32>
    %15 = arith.muli %13, %14 : vector<1024x10xi32>
    %16 = arith.cmpi sge, %12, %15 : vector<1024x10xi32>
    %c1_i32 = arith.constant 1 : i32
    %17 = vector.broadcast %c1_i32 : i32 to vector<1024x10xi32>
    %18 = arith.addi %13, %17 : vector<1024x10xi32>
    %c100_i32_8 = arith.constant 100 : i32
    %19 = vector.broadcast %c100_i32_8 : i32 to vector<1024x10xi32>
    %20 = arith.muli %18, %19 : vector<1024x10xi32>
    %21 = arith.cmpi slt, %12, %20 : vector<1024x10xi32>
    %22 = arith.andi %16, %21 : vector<1024x10xi1>
    %23 = arith.extui %22 : vector<1024x10xi1> to vector<1024x10xi32>
    %24 = arith.sitofp %23 : vector<1024x10xi32> to vector<1024x10xf32>
    %25 = vector.broadcast %7 : vector<1x1024xf32> to vector<8x1024xf32>
    %26 = arith.mulf %25, %9 : vector<8x1024xf32>
    %cst_9 = arith.constant dense<0.000000e+00> : vector<8x10xf32>
    %27 = tpu.matmul %26, %24, %cst_9 {dimension_numbers = #tpu.dot_dimension_numbers<[1], [0], [0], [1], [0, 0, 1, 1], [], []>} : vector<8x1024xf32>, vector<1024x10xf32>, vector<8x10xf32> -> vector<8x10xf32>
    %cst_10 = arith.constant dense<0xFF800000> : vector<10xf32>
    %28 = vector.multi_reduction <maximumf>, %27, %cst_10 [0] : vector<8x10xf32> to vector<10xf32>
    %29 = vector.shape_cast %28 : vector<10xf32> to vector<1x10xf32>
    %30 = vector.broadcast %29 : vector<1x10xf32> to vector<8x10xf32>
    %31 = arith.subf %27, %30 : vector<8x10xf32>
    %32 = math.exp %31 : vector<8x10xf32>
    %cst_11 = arith.constant dense<0.000000e+00> : vector<10xf32>
    %33 = vector.multi_reduction <add>, %32, %cst_11 [0] : vector<8x10xf32> to vector<10xf32>
    %34 = vector.shape_cast %33 : vector<10xf32> to vector<1x10xf32>
    %35 = vector.broadcast %34 : vector<1x10xf32> to vector<8x10xf32>
    %36 = arith.divf %32, %35 : vector<8x10xf32>
    %cst_12 = arith.constant dense<0.000000e+00> : vector<8x1024xf32>
    %37 = tpu.matmul %36, %24, %cst_12 {dimension_numbers = #tpu.dot_dimension_numbers<[1], [1], [0], [0], [0, 0, 1, 0], [], []>} : vector<8x10xf32>, vector<1024x10xf32>, vector<8x1024xf32> -> vector<8x1024xf32>
    %38 = arith.mulf %37, %11 : vector<8x1024xf32>
    %cst_13 = arith.constant dense<0.000000e+00> : vector<1024xf32>
    %39 = vector.multi_reduction <add>, %38, %cst_13 [0] : vector<8x1024xf32> to vector<1024xf32>
    %40 = vector.shape_cast %39 : vector<1024xf32> to vector<1x1024xf32>
    %c0_14 = arith.constant 0 : index
    %c0_15 = arith.constant 0 : index
    %41 = vector.load %arg1[%c0_14, %c0_15] : memref<1x1024xf32, #tpu.memory_space<vmem>>, vector<1x1024xf32>
    %42 = arith.mulf %40, %41 : vector<1x1024xf32>
    %cst_16 = arith.constant dense<0.000000e+00> : vector<1xf32>
    %43 = vector.multi_reduction <add>, %42, %cst_16 [1] : vector<1x1024xf32> to vector<1xf32>
    %44 = vector.shape_cast %43 : vector<1xf32> to vector<1x1xf32>
    %c0_17 = arith.constant 0 : index
    %c0_18 = arith.constant 0 : index
    %45 = vector.load %arg2[%c0_17, %c0_18] : memref<1x1xf32, #tpu.memory_space<vmem>>, vector<1x1xf32>
    %46 = arith.addf %44, %45 : vector<1x1xf32>
    %c0_19 = arith.constant 0 : index
    %c0_20 = arith.constant 0 : index
    %47 = vector.load %arg3[%c0_19, %c0_20] : memref<1x1xf32, #tpu.memory_space<vmem>>, vector<1x1xf32>
    tpu.vector_store %arg3[%c0_19, %c0_20], %46 {strides = array<i32>} : memref<1x1xf32, #tpu.memory_space<vmem>>, vector<1x1xf32>,
    return
  }
}

module attributes {stable_mosaic.version = 11 : i64} {
  func.func @qkv_proj_kernel(%arg0: i32, %arg1: i32, %arg2: memref<8x1000xbf16, #tpu.memory_space<vmem>>, %arg3: memref<1x1000x512xbf16, #tpu.memory_space<vmem>>, %arg4: memref<1x1x512xf32, #tpu.memory_space<vmem>>, %arg5: memref<1x8x512xf32, #tpu.memory_space<vmem>>) attributes {dimension_semantics = [#tpu.dimension_semantics<parallel>, #tpu.dimension_semantics<parallel>], iteration_bounds = array<i64: 3, 2>, scalar_prefetch = 0 : i64, scratch_operands = 0 : i64, tpu.core_type = #tpu.core_type<tc>, window_params = [{pipeline_mode = #tpu.pipeline_mode<synchronous>, transform_indices = @transform_0, window_bounds = array<i64: 8, 1000>}, {transform_indices = @transform_1, window_bounds = array<i64: 1, 1000, 512>}, {transform_indices = @transform_2, window_bounds = array<i64: 1, 1, 512>}, {transform_indices = @transform_3, window_bounds = array<i64: 1, 8, 512>}]} {
    %c0 = arith.constant 0 : index
    %c0_0 = arith.constant 0 : index
    %0 = vector.load %arg2[%c0, %c0_0] : memref<8x1000xbf16, #tpu.memory_space<vmem>>, vector<8x1000xbf16>
    %c0_1 = arith.constant 0 : index
    %c0_2 = arith.constant 0 : index
    %c0_3 = arith.constant 0 : index
    %1 = vector.load %arg3[%c0_1, %c0_2, %c0_3] : memref<1x1000x512xbf16, #tpu.memory_space<vmem>>, vector<1x1000x512xbf16>
    %2 = vector.shape_cast %1 : vector<1x1000x512xbf16> to vector<1000x512xbf16>
    %cst = arith.constant dense<0.000000e+00> : vector<8x512xf32>
    %3 = tpu.matmul %0, %2, %cst {dimension_numbers = #tpu.dot_dimension_numbers<[1], [0], [0], [1], [0, 0, 1, 1], [], []>} : vector<8x1000xbf16>, vector<1000x512xbf16>, vector<8x512xf32> -> vector<8x512xf32>
    %c0_4 = arith.constant 0 : index
    %c0_5 = arith.constant 0 : index
    %c0_6 = arith.constant 0 : index
    %4 = vector.load %arg4[%c0_4, %c0_5, %c0_6] : memref<1x1x512xf32, #tpu.memory_space<vmem>>, vector<1x1x512xf32>
    %5 = vector.shape_cast %4 : vector<1x1x512xf32> to vector<1x512xf32>
    %6 = vector.broadcast %5 : vector<1x512xf32> to vector<8x512xf32>
    %7 = arith.addf %3, %6 : vector<8x512xf32>
    %c0_7 = arith.constant 0 : index
    %c0_8 = arith.constant 0 : index
    %c0_9 = arith.constant 0 : index
    %8 = vector.load %arg5[%c0_7, %c0_8, %c0_9] : memref<1x8x512xf32, #tpu.memory_space<vmem>>, vector<1x8x512xf32>
    %9 = vector.shape_cast %8 : vector<1x8x512xf32> to vector<8x512xf32>
    %10 = vector.shape_cast %7 : vector<8x512xf32> to vector<1x8x512xf32>
    tpu.vector_store %arg5[%c0_7, %c0_8, %c0_9], %10 {strides = array<i32>} : memref<1x8x512xf32, #tpu.memory_space<vmem>>, vector<1x8x512xf32>,
    return
  }
  func.func @transform_0(%arg0: i32, %arg1: i32) -> (i32, i32) {
    %c0_i32 = arith.constant 0 : i32
    %c0_i32_0 = arith.constant 0 : i32
    %c0_i32_1 = arith.constant 0 : i32
    return %c0_i32, %c0_i32_0 : i32, i32
  }
  func.func @transform_1(%arg0: i32, %arg1: i32) -> (i32, i32, i32) {
    %c0_i32 = arith.constant 0 : i32
    %c0_i32_0 = arith.constant 0 : i32
    return %arg0, %c0_i32, %arg1 : i32, i32, i32
  }
  func.func @transform_2(%arg0: i32, %arg1: i32) -> (i32, i32, i32) {
    %c0_i32 = arith.constant 0 : i32
    %c0_i32_0 = arith.constant 0 : i32
    return %arg0, %c0_i32, %arg1 : i32, i32, i32
  }
  func.func @transform_3(%arg0: i32, %arg1: i32) -> (i32, i32, i32) {
    %c0_i32 = arith.constant 0 : i32
    %c0_i32_0 = arith.constant 0 : i32
    return %arg0, %c0_i32, %arg1 : i32, i32, i32
  }
}

</mosaic_0001>

<llo_original>
// kernel: maxvit_attention_head.3
$region0: #{maxvit_attention_head.3}
  #allocation0 [shape = 'u32[]', space=smem, size = 0x4, offset = 0x4, fixed_abs, tag = 'smem constant byte address 0x4 - core index']
  #allocation1 [shape = 'u32[144,128]{1,0:T(1,128)}', space=vmem, size = 0x12000, scoped, tag = 'internal scratch']
  #allocation2 [shape = 'f32[1,1]{1,0:T(1,128)S(1)}', space=vmem, size = 0x200, scoped, tag = 'scoped memory for maxvit_attention_head.3']
  %s0 = inlined_call_operand.vmem [shape: f32[3,8,1024], index: 0, kind: input, shape index: {}]
  %s1 = inlined_call_operand.vmem [shape: f32[1,1024], index: 1, kind: input, shape index: {}]
  %s2 = inlined_call_operand.<no memory space> [shape: f32[1,1], index: 2, kind: input, shape index: {}]
  %s3 = inlined_call_operand.hbm [shape: f32[1,1], index: 3, kind: output, shape index: {}]
  %s4 = sld [smem:[#allocation0]]
  $region22: #{maxvit_attention_head.3} parent=0
    _
  %s6 = ssub.s32 1, %s4
  %s7 = scalar_select 0, %s6, %s4
  %v8 = vstv %s2
  %9 = vst [vmem:[#allocation2] sm:$0x1] %v8
  $region1: #{maxvit_attention_head.3} parent=0
    #allocation3 [shape = 'u8[512]{0}', space=vmem, size = 0x400, scoped, tag = 'output window, operand 0, single buffered']
    #allocation4 [shape = 's32[1]{0}', space=sflag, size = 0x4, scoped, tag = 'scoped memory for maxvit_attention_head.3']
    %10 = vsyncpa [#allocation4], 0
    // Predicated region
    $region2: #{maxvit_attention_head.3} parent=1 // pred_check
      _
    $region3: #{maxvit_attention_head.3} parent=1 // pred_check_branch
      %12 = sbr.rel (0) target = $region5
    $region4: #{maxvit_attention_head.3} parent=1 // pred_region
      _
    $region5: #{maxvit_attention_head.3} parent=1 // pred_fallthru
      _
    // Predicated region
    $region6: #{maxvit_attention_head.3} parent=1 // pred_check
      _
    $region7: #{maxvit_attention_head.3} parent=1 // pred_check_branch
      %14 = sbr.rel (0) target = $region9
    $region8: #{maxvit_attention_head.3} parent=1 // pred_region
      _
    $region9: #{maxvit_attention_head.3} parent=1 // pred_fallthru
      _
    // Predicated region
    $region10: #{maxvit_attention_head.3} parent=1 // pred_check
      _
    $region11: #{maxvit_attention_head.3} parent=1 // pred_check_branch
      %16 = sbr.rel (0) target = $region13
    $region12: #{maxvit_attention_head.3} parent=1 // pred_region
      _
    $region13: #{maxvit_attention_head.3} parent=1 // pred_fallthru
      _
    %v17 = vld [vmem:[%s0] sm:$0xff]
    %v18 = vld [vmem:[%s0 + $0x8] sm:$0xff]
    %v19 = vld [vmem:[%s0 + $0x10] sm:$0xff]
    %v20 = vld [vmem:[%s0 + $0x18] sm:$0xff]
    %v21 = vld [vmem:[%s0 + $0x20] sm:$0xff]
    %v22 = vld [vmem:[%s0 + $0x28] sm:$0xff]
    %v23 = vld [vmem:[%s0 + $0x30] sm:$0xff]
    %v24 = vld [vmem:[%s0 + $0x38] sm:$0xff]
    %v25 = vrot.slane %v17, 4
    %v26 = vadd.f32 %v17, %v25
    %v27 = vrot.slane %v26, 2
    %v28 = vadd.f32 %v26, %v27
    %v29 = vrot.slane %v28, 1
    %v30 = vadd.f32 %v28, %v29
    %v31 = vrot.slane %v18, 4
    %v32 = vadd.f32 %v18, %v31
    %v33 = vrot.slane %v32, 2
    %v34 = vadd.f32 %v32, %v33
    %v35 = vrot.slane %v34, 1
    %v36 = vadd.f32 %v34, %v35
    %v37 = vrot.slane %v19, 4
    %v38 = vadd.f32 %v19, %v37
    %v39 = vrot.slane %v38, 2
    %v40 = vadd.f32 %v38, %v39
    %v41 = vrot.slane %v40, 1
    %v42 = vadd.f32 %v40, %v41
    %v43 = vrot.slane %v20, 4
    %v44 = vadd.f32 %v20, %v43
    %v45 = vrot.slane %v44, 2
    %v46 = vadd.f32 %v44, %v45
    %v47 = vrot.slane %v46, 1
    %v48 = vadd.f32 %v46, %v47
    %v49 = vrot.slane %v21, 4
    %v50 = vadd.f32 %v21, %v49
    %v51 = vrot.slane %v50, 2
    %v52 = vadd.f32 %v50, %v51
    %v53 = vrot.slane %v52, 1
    %v54 = vadd.f32 %v52, %v53
    %v55 = vrot.slane %v22, 4
    %v56 = vadd.f32 %v22, %v55
    %v57 = vrot.slane %v56, 2
    %v58 = vadd.f32 %v56, %v57
    %v59 = vrot.slane %v58, 1
    %v60 = vadd.f32 %v58, %v59
    %v61 = vrot.slane %v23, 4
    %v62 = vadd.f32 %v23, %v61
    %v63 = vrot.slane %v62, 2
    %v64 = vadd.f32 %v62, %v63
    %v65 = vrot.slane %v64, 1
    %v66 = vadd.f32 %v64, %v65
    %v67 = vrot.slane %v24, 4
    %v68 = vadd.f32 %v24, %v67
    %v69 = vrot.slane %v68, 2
    %v70 = vadd.f32 %v68, %v69
    %v71 = vrot.slane %v70, 1
    %v72 = vadd.f32 %v70, %v71
    %v73 = vrcp.pop 8.0
    %v74 = vmul.f32 %v30, %v73
    %v75 = vmul.f32 %v36, %v73
    %v76 = vmul.f32 %v42, %v73
    %v77 = vmul.f32 %v48, %v73
    %v78 = vmul.f32 %v54, %v73
    %v79 = vmul.f32 %v60, %v73
    %v80 = vmul.f32 %v66, %v73
    %v81 = vmul.f32 %v72, %v73
    %v82 = vmul.f32 %v74, 0.1
    %v83 = vmul.f32 %v75, 0.1
    %v84 = vmul.f32 %v76, 0.1
    %v85 = vmul.f32 %v77, 0.1
    %v86 = vmul.f32 %v78, 0.1
    %v87 = vmul.f32 %v79, 0.1
    %v88 = vmul.f32 %v80, 0.1
    %v89 = vmul.f32 %v81, 0.1
    %s90 = scalar_lea.vmem %s0, 64
    %v91 = vld [vmem:[%s90] sm:$0xff]
    %v92 = vld [vmem:[%s90 + $0x8] sm:$0xff]
    %v93 = vld [vmem:[%s90 + $0x10] sm:$0xff]
    %v94 = vld [vmem:[%s90 + $0x18] sm:$0xff]
    %v95 = vld [vmem:[%s90 + $0x20] sm:$0xff]
    %v96 = vld [vmem:[%s90 + $0x28] sm:$0xff]
    %v97 = vld [vmem:[%s90 + $0x30] sm:$0xff]
    %v98 = vld [vmem:[%s90 + $0x38] sm:$0xff]
    %s99 = scalar_lea.vmem %s0, 128
    %v100 = vld [vmem:[%s99] sm:$0xff]
    %v101 = vld [vmem:[%s99 + $0x8] sm:$0xff]
    %v102 = vld [vmem:[%s99 + $0x10] sm:$0xff]
    %v103 = vld [vmem:[%s99 + $0x18] sm:$0xff]
    %v104 = vld [vmem:[%s99 + $0x20] sm:$0xff]
    %v105 = vld [vmem:[%s99 + $0x28] sm:$0xff]
    %v106 = vld [vmem:[%s99 + $0x30] sm:$0xff]
    %v107 = vld [vmem:[%s99 + $0x38] sm:$0xff]
    %v108 = vlaneseq
    %v109 = vshrl.u32 %v108, 7
    %v110 = vadd.s32 %v109, 8
    %v111 = vadd.s32 %v109, 16
    %v112 = vadd.s32 %v109, 24
    %v113 = vadd.s32 %v109, 32
    %v114 = vadd.s32 %v109, 40
    %v115 = vadd.s32 %v109, 48
    %v116 = vadd.s32 %v109, 56
    %v117 = vadd.s32 %v109, 64
    %v118 = vadd.s32 %v109, 72
    %v119 = vadd.s32 %v109, 80
    %v120 = vadd.s32 %v109, 88
    %v121 = vadd.s32 %v109, 96
    %v122 = vadd.s32 %v109, 104
    %v123 = vadd.s32 %v109, 112
    %v124 = vadd.s32 %v109, 120
    %v125 = vadd.s32 %v109, 128
    %v126 = vadd.s32 %v109, 136
    %v127 = vadd.s32 %v109, 144
    %v128 = vadd.s32 %v109, 152
    %v129 = vadd.s32 %v109, 160
    %v130 = vadd.s32 %v109, 168
    %v131 = vadd.s32 %v109, 176
    %v132 = vadd.s32 %v109, 184
    %v133 = vadd.s32 %v109, 192
    %v134 = vadd.s32 %v109, 200
    %v135 = vadd.s32 %v109, 208
    %v136 = vadd.s32 %v109, 216
    %v137 = vadd.s32 %v109, 224
    %v138 = vadd.s32 %v109, 232
    %v139 = vadd.s32 %v109, 240
    %v140 = vadd.s32 %v109, 248
    %v141 = vadd.s32 %v109, 256
    %v142 = vadd.s32 %v109, 264
    %v143 = vadd.s32 %v109, 272
    %v144 = vadd.s32 %v109, 280
    %v145 = vadd.s32 %v109, 288
    %v146 = vadd.s32 %v109, 296
    %v147 = vadd.s32 %v109, 304
    %v148 = vadd.s32 %v109, 312
    %v149 = vadd.s32 %v109, 320
    %v150 = vadd.s32 %v109, 328
    %v151 = vadd.s32 %v109, 336
    %v152 = vadd.s32 %v109, 344
    %v153 = vadd.s32 %v109, 352
    %v154 = vadd.s32 %v109, 360
    %v155 = vadd.s32 %v109, 368
    %v156 = vadd.s32 %v109, 376
    %v157 = vadd.s32 %v109, 384
    %v158 = vadd.s32 %v109, 392
    %v159 = vadd.s32 %v109, 400
    %v160 = vadd.s32 %v109, 408
    %v161 = vadd.s32 %v109, 416
    %v162 = vadd.s32 %v109, 424
    %v163 = vadd.s32 %v109, 432
    %v164 = vadd.s32 %v109, 440
    %v165 = vadd.s32 %v109, 448
    %v166 = vadd.s32 %v109, 456
    %v167 = vadd.s32 %v109, 464
    %v168 = vadd.s32 %v109, 472
    %v169 = vadd.s32 %v109, 480
    %v170 = vadd.s32 %v109, 488
    %v171 = vadd.s32 %v109, 496
    %v172 = vadd.s32 %v109, 504
    %v173 = vadd.s32 %v109, 512
    %v174 = vadd.s32 %v109, 520
    %v175 = vadd.s32 %v109, 528
    %v176 = vadd.s32 %v109, 536
    %v177 = vadd.s32 %v109, 544
    %v178 = vadd.s32 %v109, 552
    %v179 = vadd.s32 %v109, 560
    %v180 = vadd.s32 %v109, 568
    %v181 = vadd.s32 %v109, 576
    %v182 = vadd.s32 %v109, 584
    %v183 = vadd.s32 %v109, 592
    %v184 = vadd.s32 %v109, 600
    %v185 = vadd.s32 %v109, 608
    %v186 = vadd.s32 %v109, 616
    %v187 = vadd.s32 %v109, 624
    %v188 = vadd.s32 %v109, 632
    %v189 = vadd.s32 %v109, 640
    %v190 = vadd.s32 %v109, 648
    %v191 = vadd.s32 %v109, 656
    %v192 = vadd.s32 %v109, 664
    %v193 = vadd.s32 %v109, 672
    %v194 = vadd.s32 %v109, 680
    %v195 = vadd.s32 %v109, 688
    %v196 = vadd.s32 %v109, 696
    %v197 = vadd.s32 %v109, 704
    %v198 = vadd.s32 %v109, 712
    %v199 = vadd.s32 %v109, 720
    %v200 = vadd.s32 %v109, 728
    %v201 = vadd.s32 %v109, 736
    %v202 = vadd.s32 %v109, 744
    %v203 = vadd.s32 %v109, 752
    %v204 = vadd.s32 %v109, 760
    %v205 = vadd.s32 %v109, 768
    %v206 = vadd.s32 %v109, 776
    %v207 = vadd.s32 %v109, 784
    %v208 = vadd.s32 %v109, 792
    %v209 = vadd.s32 %v109, 800
    %v210 = vadd.s32 %v109, 808
    %v211 = vadd.s32 %v109, 816
    %v212 = vadd.s32 %v109, 824
    %v213 = vadd.s32 %v109, 832
    %v214 = vadd.s32 %v109, 840
    %v215 = vadd.s32 %v109, 848
    %v216 = vadd.s32 %v109, 856
    %v217 = vadd.s32 %v109, 864
    %v218 = vadd.s32 %v109, 872
    %v219 = vadd.s32 %v109, 880
    %v220 = vadd.s32 %v109, 888
    %v221 = vadd.s32 %v109, 896
    %v222 = vadd.s32 %v109, 904
    %v223 = vadd.s32 %v109, 912
    %v224 = vadd.s32 %v109, 920
    %v225 = vadd.s32 %v109, 928
    %v226 = vadd.s32 %v109, 936
    %v227 = vadd.s32 %v109, 944
    %v228 = vadd.s32 %v109, 952
    %v229 = vadd.s32 %v109, 960
    %v230 = vadd.s32 %v109, 968
    %v231 = vadd.s32 %v109, 976
    %v232 = vadd.s32 %v109, 984
    %v233 = vadd.s32 %v109, 992
    %v234 = vadd.s32 %v109, 1000
    %v235 = vadd.s32 %v109, 1008
    %v236 = vadd.s32 %v109, 1016
    %v237 = vlaneseq
    %v238 = vand.u32 %v237, 127
    %v239 = vmul.u32 %v238, 100
    %vm240 = vcmp.ge.s32.totalorder %v109, %v239
    %vm241 = vcmp.ge.s32.totalorder %v110, %v239
    %vm242 = vcmp.ge.s32.totalorder %v111, %v239
    %vm243 = vcmp.ge.s32.totalorder %v112, %v239
    %vm244 = vcmp.ge.s32.totalorder %v113, %v239
    %vm245 = vcmp.ge.s32.totalorder %v114, %v239
    %vm246 = vcmp.ge.s32.totalorder %v115, %v239
    %vm247 = vcmp.ge.s32.totalorder %v116, %v239
    %vm248 = vcmp.ge.s32.totalorder %v117, %v239
    %vm249 = vcmp.ge.s32.totalorder %v118, %v239
    %vm250 = vcmp.ge.s32.totalorder %v119, %v239
    %vm251 = vcmp.ge.s32.totalorder %v120, %v239
    %vm252 = vcmp.ge.s32.totalorder %v121, %v239
    %vm253 = vcmp.ge.s32.totalorder %v122, %v239
    %vm254 = vcmp.ge.s32.totalorder %v123, %v239
    %vm255 = vcmp.ge.s32.totalorder %v124, %v239
    %vm256 = vcmp.ge.s32.totalorder %v125, %v239
    %vm257 = vcmp.ge.s32.totalorder %v126, %v239
    %vm258 = vcmp.ge.s32.totalorder %v127, %v239
    %vm259 = vcmp.ge.s32.totalorder %v128, %v239
    %vm260 = vcmp.ge.s32.totalorder %v129, %v239
    %vm261 = vcmp.ge.s32.totalorder %v130, %v239
    %vm262 = vcmp.ge.s32.totalorder %v131, %v239
    %vm263 = vcmp.ge.s32.totalorder %v132, %v239
    %vm264 = vcmp.ge.s32.totalorder %v133, %v239
    %vm265 = vcmp.ge.s32.totalorder %v134, %v239
    %vm266 = vcmp.ge.s32.totalorder %v135, %v239
    %vm267 = vcmp.ge.s32.totalorder %v136, %v239
    %vm268 = vcmp.ge.s32.totalorder %v137, %v239
    %vm269 = vcmp.ge.s32.totalorder %v138, %v239
    %vm270 = vcmp.ge.s32.totalorder %v139, %v239
    %vm271 = vcmp.ge.s32.totalorder %v140, %v239
    %vm272 = vcmp.ge.s32.totalorder %v141, %v239
    %vm273 = vcmp.ge.s32.totalorder %v142, %v239
    %vm274 = vcmp.ge.s32.totalorder %v143, %v239
    %vm275 = vcmp.ge.s32.totalorder %v144, %v239
    %vm276 = vcmp.ge.s32.totalorder %v145, %v239
    %vm277 = vcmp.ge.s32.totalorder %v146, %v239
    %vm278 = vcmp.ge.s32.totalorder %v147, %v239
    %vm279 = vcmp.ge.s32.totalorder %v148, %v239
    %vm280 = vcmp.ge.s32.totalorder %v149, %v239
    %vm281 = vcmp.ge.s32.totalorder %v150, %v239
    %vm282 = vcmp.ge.s32.totalorder %v151, %v239
    %vm283 = vcmp.ge.s32.totalorder %v152, %v239
    %vm284 = vcmp.ge.s32.totalorder %v153, %v239
    %vm285 = vcmp.ge.s32.totalorder %v154, %v239
    %vm286 = vcmp.ge.s32.totalorder %v155, %v239
    %vm287 = vcmp.ge.s32.totalorder %v156, %v239
    %vm288 = vcmp.ge.s32.totalorder %v157, %v239
    %vm289 = vcmp.ge.s32.totalorder %v158, %v239
    %vm290 = vcmp.ge.s32.totalorder %v159, %v239
    %vm291 = vcmp.ge.s32.totalorder %v160, %v239
    %vm292 = vcmp.ge.s32.totalorder %v161, %v239
    %vm293 = vcmp.ge.s32.totalorder %v162, %v239
    %vm294 = vcmp.ge.s32.totalorder %v163, %v239
    %vm295 = vcmp.ge.s32.totalorder %v164, %v239
    %vm296 = vcmp.ge.s32.totalorder %v165, %v239
    %vm297 = vcmp.ge.s32.totalorder %v166, %v239
    %vm298 = vcmp.ge.s32.totalorder %v167, %v239
    %vm299 = vcmp.ge.s32.totalorder %v168, %v239
    %vm300 = vcmp.ge.s32.totalorder %v169, %v239
    %vm301 = vcmp.ge.s32.totalorder %v170, %v239
    %vm302 = vcmp.ge.s32.totalorder %v171, %v239
    %vm303 = vcmp.ge.s32.totalorder %v172, %v239
    %vm304 = vcmp.ge.s32.totalorder %v173, %v239
    %vm305 = vcmp.ge.s32.totalorder %v174, %v239
    %vm306 = vcmp.ge.s32.totalorder %v175, %v239
    %vm307 = vcmp.ge.s32.totalorder %v176, %v239
    %vm308 = vcmp.ge.s32.totalorder %v177, %v239
    %vm309 = vcmp.ge.s32.totalorder %v178, %v239
    %vm310 = vcmp.ge.s32.totalorder %v179, %v239
    %vm311 = vcmp.ge.s32.totalorder %v180, %v239
    %vm312 = vcmp.ge.s32.totalorder %v181, %v239
    %vm313 = vcmp.ge.s32.totalorder %v182, %v239
    %vm314 = vcmp.ge.s32.totalorder %v183, %v239
    %vm315 = vcmp.ge.s32.totalorder %v184, %v239
    %vm316 = vcmp.ge.s32.totalorder %v185, %v239
    %vm317 = vcmp.ge.s32.totalorder %v186, %v239
    %vm318 = vcmp.ge.s32.totalorder %v187, %v239
    %vm319 = vcmp.ge.s32.totalorder %v188, %v239
    %vm320 = vcmp.ge.s32.totalorder %v189, %v239
    %vm321 = vcmp.ge.s32.totalorder %v190, %v239
    %vm322 = vcmp.ge.s32.totalorder %v191, %v239
    %vm323 = vcmp.ge.s32.totalorder %v192, %v239
    %vm324 = vcmp.ge.s32.totalorder %v193, %v239
    %vm325 = vcmp.ge.s32.totalorder %v194, %v239
    %vm326 = vcmp.ge.s32.totalorder %v195, %v239
    %vm327 = vcmp.ge.s32.totalorder %v196, %v239
    %vm328 = vcmp.ge.s32.totalorder %v197, %v239
    %vm329 = vcmp.ge.s32.totalorder %v198, %v239
    %vm330 = vcmp.ge.s32.totalorder %v199, %v239
    %vm331 = vcmp.ge.s32.totalorder %v200, %v239
    %vm332 = vcmp.ge.s32.totalorder %v201, %v239
    %vm333 = vcmp.ge.s32.totalorder %v202, %v239
    %vm334 = vcmp.ge.s32.totalorder %v203, %v239
    %vm335 = vcmp.ge.s32.totalorder %v204, %v239
    %vm336 = vcmp.ge.s32.totalorder %v205, %v239
    %vm337 = vcmp.ge.s32.totalorder %v206, %v239
    %vm338 = vcmp.ge.s32.totalorder %v207, %v239
    %vm339 = vcmp.ge.s32.totalorder %v208, %v239
    %vm340 = vcmp.ge.s32.totalorder %v209, %v239
    %vm341 = vcmp.ge.s32.totalorder %v210, %v239
    %vm342 = vcmp.ge.s32.totalorder %v211, %v239
    %vm343 = vcmp.ge.s32.totalorder %v212, %v239
    %vm344 = vcmp.ge.s32.totalorder %v213, %v239
    %vm345 = vcmp.ge.s32.totalorder %v214, %v239
    %vm346 = vcmp.ge.s32.totalorder %v215, %v239
    %vm347 = vcmp.ge.s32.totalorder %v216, %v239
    %vm348 = vcmp.ge.s32.totalorder %v217, %v239
    %vm349 = vcmp.ge.s32.totalorder %v218, %v239
    %vm350 = vcmp.ge.s32.totalorder %v219, %v239
    %vm351 = vcmp.ge.s32.totalorder %v220, %v239
    %vm352 = vcmp.ge.s32.totalorder %v221, %v239
    %vm353 = vcmp.ge.s32.totalorder %v222, %v239
    %vm354 = vcmp.ge.s32.totalorder %v223, %v239
    %vm355 = vcmp.ge.s32.totalorder %v224, %v239
    %vm356 = vcmp.ge.s32.totalorder %v225, %v239
    %vm357 = vcmp.ge.s32.totalorder %v226, %v239
    %vm358 = vcmp.ge.s32.totalorder %v227, %v239
    %vm359 = vcmp.ge.s32.totalorder %v228, %v239
    %vm360 = vcmp.ge.s32.totalorder %v229, %v239
    %vm361 = vcmp.ge.s32.totalorder %v230, %v239
    %vm362 = vcmp.ge.s32.totalorder %v231, %v239
    %vm363 = vcmp.ge.s32.totalorder %v232, %v239
    %vm364 = vcmp.ge.s32.totalorder %v233, %v239
    %vm365 = vcmp.ge.s32.totalorder %v234, %v239
    %vm366 = vcmp.ge.s32.totalorder %v235, %v239
    %vm367 = vcmp.ge.s32.totalorder %v236, %v239
    %v368 = vadd.s32 %v238, 1
    %v369 = vmul.u32 %v368, 100
    %vm370 = vcmp.lt.s32.totalorder %v109, %v369
    %vm371 = vcmp.lt.s32.totalorder %v110, %v369
    %vm372 = vcmp.lt.s32.totalorder %v111, %v369
    %vm373 = vcmp.lt.s32.totalorder %v112, %v369
    %vm374 = vcmp.lt.s32.totalorder %v113, %v369
    %vm375 = vcmp.lt.s32.totalorder %v114, %v369
    %vm376 = vcmp.lt.s32.totalorder %v115, %v369
    %vm377 = vcmp.lt.s32.totalorder %v116, %v369
    %vm378 = vcmp.lt.s32.totalorder %v117, %v369
    %vm379 = vcmp.lt.s32.totalorder %v118, %v369
    %vm380 = vcmp.lt.s32.totalorder %v119, %v369
    %vm381 = vcmp.lt.s32.totalorder %v120, %v369
    %vm382 = vcmp.lt.s32.totalorder %v121, %v369
    %vm383 = vcmp.lt.s32.totalorder %v122, %v369
    %vm384 = vcmp.lt.s32.totalorder %v123, %v369
    %vm385 = vcmp.lt.s32.totalorder %v124, %v369
    %vm386 = vcmp.lt.s32.totalorder %v125, %v369
    %vm387 = vcmp.lt.s32.totalorder %v126, %v369
    %vm388 = vcmp.lt.s32.totalorder %v127, %v369
    %vm389 = vcmp.lt.s32.totalorder %v128, %v369
    %vm390 = vcmp.lt.s32.totalorder %v129, %v369
    %vm391 = vcmp.lt.s32.totalorder %v130, %v369
    %vm392 = vcmp.lt.s32.totalorder %v131, %v369
    %vm393 = vcmp.lt.s32.totalorder %v132, %v369
    %vm394 = vcmp.lt.s32.totalorder %v133, %v369
    %vm395 = vcmp.lt.s32.totalorder %v134, %v369
    %vm396 = vcmp.lt.s32.totalorder %v135, %v369
    %vm397 = vcmp.lt.s32.totalorder %v136, %v369
    %vm398 = vcmp.lt.s32.totalorder %v137, %v369
    %vm399 = vcmp.lt.s32.totalorder %v138, %v369
    %vm400 = vcmp.lt.s32.totalorder %v139, %v369
    %vm401 = vcmp.lt.s32.totalorder %v140, %v369
    %vm402 = vcmp.lt.s32.totalorder %v141, %v369
    %vm403 = vcmp.lt.s32.totalorder %v142, %v369
    %vm404 = vcmp.lt.s32.totalorder %v143, %v369
    %vm405 = vcmp.lt.s32.totalorder %v144, %v369
    %vm406 = vcmp.lt.s32.totalorder %v145, %v369
    %vm407 = vcmp.lt.s32.totalorder %v146, %v369
    %vm408 = vcmp.lt.s32.totalorder %v147, %v369
    %vm409 = vcmp.lt.s32.totalorder %v148, %v369
    %vm410 = vcmp.lt.s32.totalorder %v149, %v369
    %vm411 = vcmp.lt.s32.totalorder %v150, %v369
    %vm412 = vcmp.lt.s32.totalorder %v151, %v369
    %vm413 = vcmp.lt.s32.totalorder %v152, %v369
    %vm414 = vcmp.lt.s32.totalorder %v153, %v369
    %vm415 = vcmp.lt.s32.totalorder %v154, %v369
    %vm416 = vcmp.lt.s32.totalorder %v155, %v369
    %vm417 = vcmp.lt.s32.totalorder %v156, %v369
    %vm418 = vcmp.lt.s32.totalorder %v157, %v369
    %vm419 = vcmp.lt.s32.totalorder %v158, %v369
    %vm420 = vcmp.lt.s32.totalorder %v159, %v369
    %vm421 = vcmp.lt.s32.totalorder %v160, %v369
    %vm422 = vcmp.lt.s32.totalorder %v161, %v369
    %vm423 = vcmp.lt.s32.totalorder %v162, %v369
    %vm424 = vcmp.lt.s32.totalorder %v163, %v369
    %vm425 = vcmp.lt.s32.totalorder %v164, %v369
    %vm426 = vcmp.lt.s32.totalorder %v165, %v369
    %vm427 = vcmp.lt.s32.totalorder %v166, %v369
    %vm428 = vcmp.lt.s32.totalorder %v167, %v369
    %vm429 = vcmp.lt.s32.totalorder %v168, %v369
    %vm430 = vcmp.lt.s32.totalorder %v169, %v369
    %vm431 = vcmp.lt.s32.totalorder %v170, %v369
    %vm432 = vcmp.lt.s32.totalorder %v171, %v369
    %vm433 = vcmp.lt.s32.totalorder %v172, %v369
    %vm434 = vcmp.lt.s32.totalorder %v173, %v369
    %vm435 = vcmp.lt.s32.totalorder %v174, %v369
    %vm436 = vcmp.lt.s32.totalorder %v175, %v369
    %vm437 = vcmp.lt.s32.totalorder %v176, %v369
    %vm438 = vcmp.lt.s32.totalorder %v177, %v369
    %vm439 = vcmp.lt.s32.totalorder %v178, %v369
    %vm440 = vcmp.lt.s32.totalorder %v179, %v369
    %vm441 = vcmp.lt.s32.totalorder %v180, %v369
    %vm442 = vcmp.lt.s32.totalorder %v181, %v369
    %vm443 = vcmp.lt.s32.totalorder %v182, %v369
    %vm444 = vcmp.lt.s32.totalorder %v183, %v369
    %vm445 = vcmp.lt.s32.totalorder %v184, %v369
    %vm446 = vcmp.lt.s32.totalorder %v185, %v369
    %vm447 = vcmp.lt.s32.totalorder %v186, %v369
    %vm448 = vcmp.lt.s32.totalorder %v187, %v369
    %vm449 = vcmp.lt.s32.totalorder %v188, %v369
    %vm450 = vcmp.lt.s32.totalorder %v189, %v369
    %vm451 = vcmp.lt.s32.totalorder %v190, %v369
    %vm452 = vcmp.lt.s32.totalorder %v191, %v369
    %vm453 = vcmp.lt.s32.totalorder %v192, %v369
    %vm454 = vcmp.lt.s32.totalorder %v193, %v369
    %vm455 = vcmp.lt.s32.totalorder %v194, %v369
    %vm456 = vcmp.lt.s32.totalorder %v195, %v369
    %vm457 = vcmp.lt.s32.totalorder %v196, %v369
    %vm458 = vcmp.lt.s32.totalorder %v197, %v369
    %vm459 = vcmp.lt.s32.totalorder %v198, %v369
    %vm460 = vcmp.lt.s32.totalorder %v199, %v369
    %vm461 = vcmp.lt.s32.totalorder %v200, %v369
    %vm462 = vcmp.lt.s32.totalorder %v201, %v369
    %vm463 = vcmp.lt.s32.totalorder %v202, %v369
    %vm464 = vcmp.lt.s32.totalorder %v203, %v369
    %vm465 = vcmp.lt.s32.totalorder %v204, %v369
    %vm466 = vcmp.lt.s32.totalorder %v205, %v369
    %vm467 = vcmp.lt.s32.totalorder %v206, %v369
    %vm468 = vcmp.lt.s32.totalorder %v207, %v369
    %vm469 = vcmp.lt.s32.totalorder %v208, %v369
    %vm470 = vcmp.lt.s32.totalorder %v209, %v369
    %vm471 = vcmp.lt.s32.totalorder %v210, %v369
    %vm472 = vcmp.lt.s32.totalorder %v211, %v369
    %vm473 = vcmp.lt.s32.totalorder %v212, %v369
    %vm474 = vcmp.lt.s32.totalorder %v213, %v369
    %vm475 = vcmp.lt.s32.totalorder %v214, %v369
    %vm476 = vcmp.lt.s32.totalorder %v215, %v369
    %vm477 = vcmp.lt.s32.totalorder %v216, %v369
    %vm478 = vcmp.lt.s32.totalorder %v217, %v369
    %vm479 = vcmp.lt.s32.totalorder %v218, %v369
    %vm480 = vcmp.lt.s32.totalorder %v219, %v369
    %vm481 = vcmp.lt.s32.totalorder %v220, %v369
    %vm482 = vcmp.lt.s32.totalorder %v221, %v369
    %vm483 = vcmp.lt.s32.totalorder %v222, %v369
    %vm484 = vcmp.lt.s32.totalorder %v223, %v369
    %vm485 = vcmp.lt.s32.totalorder %v224, %v369
    %vm486 = vcmp.lt.s32.totalorder %v225, %v369
    %vm487 = vcmp.lt.s32.totalorder %v226, %v369
    %vm488 = vcmp.lt.s32.totalorder %v227, %v369
    %vm489 = vcmp.lt.s32.totalorder %v228, %v369
    %vm490 = vcmp.lt.s32.totalorder %v229, %v369
    %vm491 = vcmp.lt.s32.totalorder %v230, %v369
    %vm492 = vcmp.lt.s32.totalorder %v231, %v369
    %vm493 = vcmp.lt.s32.totalorder %v232, %v369
    %vm494 = vcmp.lt.s32.totalorder %v233, %v369
    %vm495 = vcmp.lt.s32.totalorder %v234, %v369
    %vm496 = vcmp.lt.s32.totalorder %v235, %v369
    %vm497 = vcmp.lt.s32.totalorder %v236, %v369
    %vm498 = vmand %vm240, %vm370
    %vm499 = vmand %vm241, %vm371
    %vm500 = vmand %vm242, %vm372
    %vm501 = vmand %vm243, %vm373
    %vm502 = vmand %vm244, %vm374
    %vm503 = vmand %vm245, %vm375
    %vm504 = vmand %vm246, %vm376
    %vm505 = vmand %vm247, %vm377
    %vm506 = vmand %vm248, %vm378
    %vm507 = vmand %vm249, %vm379
    %vm508 = vmand %vm250, %vm380
    %vm509 = vmand %vm251, %vm381
    %vm510 = vmand %vm252, %vm382
    %vm511 = vmand %vm253, %vm383
    %vm512 = vmand %vm254, %vm384
    %vm513 = vmand %vm255, %vm385
    %vm514 = vmand %vm256, %vm386
    %vm515 = vmand %vm257, %vm387
    %vm516 = vmand %vm258, %vm388
    %vm517 = vmand %vm259, %vm389
    %vm518 = vmand %vm260, %vm390
    %vm519 = vmand %vm261, %vm391
    %vm520 = vmand %vm262, %vm392
    %vm521 = vmand %vm263, %vm393
    %vm522 = vmand %vm264, %vm394
    %vm523 = vmand %vm265, %vm395
    %vm524 = vmand %vm266, %vm396
    %vm525 = vmand %vm267, %vm397
    %vm526 = vmand %vm268, %vm398
    %vm527 = vmand %vm269, %vm399
    %vm528 = vmand %vm270, %vm400
    %vm529 = vmand %vm271, %vm401
    %vm530 = vmand %vm272, %vm402
    %vm531 = vmand %vm273, %vm403
    %vm532 = vmand %vm274, %vm404
    %vm533 = vmand %vm275, %vm405
    %vm534 = vmand %vm276, %vm406
    %vm535 = vmand %vm277, %vm407
    %vm536 = vmand %vm278, %vm408
    %vm537 = vmand %vm279, %vm409
    %vm538 = vmand %vm280, %vm410
    %vm539 = vmand %vm281, %vm411
    %vm540 = vmand %vm282, %vm412
    %vm541 = vmand %vm283, %vm413
    %vm542 = vmand %vm284, %vm414
    %vm543 = vmand %vm285, %vm415
    %vm544 = vmand %vm286, %vm416
    %vm545 = vmand %vm287, %vm417
    %vm546 = vmand %vm288, %vm418
    %vm547 = vmand %vm289, %vm419
    %vm548 = vmand %vm290, %vm420
    %vm549 = vmand %vm291, %vm421
    %vm550 = vmand %vm292, %vm422
    %vm551 = vmand %vm293, %vm423
    %vm552 = vmand %vm294, %vm424
    %vm553 = vmand %vm295, %vm425
    %vm554 = vmand %vm296, %vm426
    %vm555 = vmand %vm297, %vm427
    %vm556 = vmand %vm298, %vm428
    %vm557 = vmand %vm299, %vm429
    %vm558 = vmand %vm300, %vm430
    %vm559 = vmand %vm301, %vm431
    %vm560 = vmand %vm302, %vm432
    %vm561 = vmand %vm303, %vm433
    %vm562 = vmand %vm304, %vm434
    %vm563 = vmand %vm305, %vm435
    %vm564 = vmand %vm306, %vm436
    %vm565 = vmand %vm307, %vm437
    %vm566 = vmand %vm308, %vm438
    %vm567 = vmand %vm309, %vm439
    %vm568 = vmand %vm310, %vm440
    %vm569 = vmand %vm311, %vm441
    %vm570 = vmand %vm312, %vm442
    %vm571 = vmand %vm313, %vm443
    %vm572 = vmand %vm314, %vm444
    %vm573 = vmand %vm315, %vm445
    %vm574 = vmand %vm316, %vm446
    %vm575 = vmand %vm317, %vm447
    %vm576 = vmand %vm318, %vm448
    %vm577 = vmand %vm319, %vm449
    %vm578 = vmand %vm320, %vm450
    %vm579 = vmand %vm321, %vm451
    %vm580 = vmand %vm322, %vm452
    %vm581 = vmand %vm323, %vm453
    %vm582 = vmand %vm324, %vm454
    %vm583 = vmand %vm325, %vm455
    %vm584 = vmand %vm326, %vm456
    %vm585 = vmand %vm327, %vm457
    %vm586 = vmand %vm328, %vm458
    %vm587 = vmand %vm329, %vm459
    %vm588 = vmand %vm330, %vm460
    %vm589 = vmand %vm331, %vm461
    %vm590 = vmand %vm332, %vm462
    %vm591 = vmand %vm333, %vm463
    %vm592 = vmand %vm334, %vm464
    %vm593 = vmand %vm335, %vm465
    %vm594 = vmand %vm336, %vm466
    %vm595 = vmand %vm337, %vm467
    %vm596 = vmand %vm338, %vm468
    %vm597 = vmand %vm339, %vm469
    %vm598 = vmand %vm340, %vm470
    %vm599 = vmand %vm341, %vm471
    %vm600 = vmand %vm342, %vm472
    %vm601 = vmand %vm343, %vm473
    %vm602 = vmand %vm344, %vm474
    %vm603 = vmand %vm345, %vm475
    %vm604 = vmand %vm346, %vm476
    %vm605 = vmand %vm347, %vm477
    %vm606 = vmand %vm348, %vm478
    %vm607 = vmand %vm349, %vm479
    %vm608 = vmand %vm350, %vm480
    %vm609 = vmand %vm351, %vm481
    %vm610 = vmand %vm352, %vm482
    %vm611 = vmand %vm353, %vm483
    %vm612 = vmand %vm354, %vm484
    %vm613 = vmand %vm355, %vm485
    %vm614 = vmand %vm356, %vm486
    %vm615 = vmand %vm357, %vm487
    %vm616 = vmand %vm358, %vm488
    %vm617 = vmand %vm359, %vm489
    %vm618 = vmand %vm360, %vm490
    %vm619 = vmand %vm361, %vm491
    %vm620 = vmand %vm362, %vm492
    %vm621 = vmand %vm363, %vm493
    %vm622 = vmand %vm364, %vm494
    %vm623 = vmand %vm365, %vm495
    %vm624 = vmand %vm366, %vm496
    %vm625 = vmand %vm367, %vm497
    %v626 = vsel %vm498, 1, 0
    %v627 = vsel %vm499, 1, 0
    %v628 = vsel %vm500, 1, 0
    %v629 = vsel %vm501, 1, 0
    %v630 = vsel %vm502, 1, 0
    %v631 = vsel %vm503, 1, 0
    %v632 = vsel %vm504, 1, 0
    %v633 = vsel %vm505, 1, 0
    %v634 = vsel %vm506, 1, 0
    %v635 = vsel %vm507, 1, 0
    %v636 = vsel %vm508, 1, 0
    %v637 = vsel %vm509, 1, 0
    %v638 = vsel %vm510, 1, 0
    %v639 = vsel %vm511, 1, 0
    %v640 = vsel %vm512, 1, 0
    %v641 = vsel %vm513, 1, 0
    %v642 = vsel %vm514, 1, 0
    %v643 = vsel %vm515, 1, 0
    %v644 = vsel %vm516, 1, 0
    %v645 = vsel %vm517, 1, 0
    %v646 = vsel %vm518, 1, 0
    %v647 = vsel %vm519, 1, 0
    %v648 = vsel %vm520, 1, 0
    %v649 = vsel %vm521, 1, 0
    %v650 = vsel %vm522, 1, 0
    %v651 = vsel %vm523, 1, 0
    %v652 = vsel %vm524, 1, 0
    %v653 = vsel %vm525, 1, 0
    %v654 = vsel %vm526, 1, 0
    %v655 = vsel %vm527, 1, 0
    %v656 = vsel %vm528, 1, 0
    %v657 = vsel %vm529, 1, 0
    %v658 = vsel %vm530, 1, 0
    %v659 = vsel %vm531, 1, 0
    %v660 = vsel %vm532, 1, 0
    %v661 = vsel %vm533, 1, 0
    %v662 = vsel %vm534, 1, 0
    %v663 = vsel %vm535, 1, 0
    %v664 = vsel %vm536, 1, 0
    %v665 = vsel %vm537, 1, 0
    %v666 = vsel %vm538, 1, 0
    %v667 = vsel %vm539, 1, 0
    %v668 = vsel %vm540, 1, 0
    %v669 = vsel %vm541, 1, 0
    %v670 = vsel %vm542, 1, 0
    %v671 = vsel %vm543, 1, 0
    %v672 = vsel %vm544, 1, 0
    %v673 = vsel %vm545, 1, 0
    %v674 = vsel %vm546, 1, 0
    %v675 = vsel %vm547, 1, 0
    %v676 = vsel %vm548, 1, 0
    %v677 = vsel %vm549, 1, 0
    %v678 = vsel %vm550, 1, 0
    %v679 = vsel %vm551, 1, 0
    %v680 = vsel %vm552, 1, 0
    %v681 = vsel %vm553, 1, 0
    %v682 = vsel %vm554, 1, 0
    %v683 = vsel %vm555, 1, 0
    %v684 = vsel %vm556, 1, 0
    %v685 = vsel %vm557, 1, 0
    %v686 = vsel %vm558, 1, 0
    %v687 = vsel %vm559, 1, 0
    %v688 = vsel %vm560, 1, 0
    %v689 = vsel %vm561, 1, 0
    %v690 = vsel %vm562, 1, 0
    %v691 = vsel %vm563, 1, 0
    %v692 = vsel %vm564, 1, 0
    %v693 = vsel %vm565, 1, 0
    %v694 = vsel %vm566, 1, 0
    %v695 = vsel %vm567, 1, 0
    %v696 = vsel %vm568, 1, 0
    %v697 = vsel %vm569, 1, 0
    %v698 = vsel %vm570, 1, 0
    %v699 = vsel %vm571, 1, 0
    %v700 = vsel %vm572, 1, 0
    %v701 = vsel %vm573, 1, 0
    %v702 = vsel %vm574, 1, 0
    %v703 = vsel %vm575, 1, 0
    %v704 = vsel %vm576, 1, 0
    %v705 = vsel %vm577, 1, 0
    %v706 = vsel %vm578, 1, 0
    %v707 = vsel %vm579, 1, 0
    %v708 = vsel %vm580, 1, 0
    %v709 = vsel %vm581, 1, 0
    %v710 = vsel %vm582, 1, 0
    %v711 = vsel %vm583, 1, 0
    %v712 = vsel %vm584, 1, 0
    %v713 = vsel %vm585, 1, 0
    %v714 = vsel %vm586, 1, 0
    %v715 = vsel %vm587, 1, 0
    %v716 = vsel %vm588, 1, 0
    %v717 = vsel %vm589, 1, 0
    %v718 = vsel %vm590, 1, 0
    %v719 = vsel %vm591, 1, 0
    %v720 = vsel %vm592, 1, 0
    %v721 = vsel %vm593, 1, 0
    %v722 = vsel %vm594, 1, 0
    %v723 = vsel %vm595, 1, 0
    %v724 = vsel %vm596, 1, 0
    %v725 = vsel %vm597, 1, 0
    %v726 = vsel %vm598, 1, 0
    %v727 = vsel %vm599, 1, 0
    %v728 = vsel %vm600, 1, 0
    %v729 = vsel %vm601, 1, 0
    %v730 = vsel %vm602, 1, 0
    %v731 = vsel %vm603, 1, 0
    %v732 = vsel %vm604, 1, 0
    %v733 = vsel %vm605, 1, 0
    %v734 = vsel %vm606, 1, 0
    %v735 = vsel %vm607, 1, 0
    %v736 = vsel %vm608, 1, 0
    %v737 = vsel %vm609, 1, 0
    %v738 = vsel %vm610, 1, 0
    %v739 = vsel %vm611, 1, 0
    %v740 = vsel %vm612, 1, 0
    %v741 = vsel %vm613, 1, 0
    %v742 = vsel %vm614, 1, 0
    %v743 = vsel %vm615, 1, 0
    %v744 = vsel %vm616, 1, 0
    %v745 = vsel %vm617, 1, 0
    %v746 = vsel %vm618, 1, 0
    %v747 = vsel %vm619, 1, 0
    %v748 = vsel %vm620, 1, 0
    %v749 = vsel %vm621, 1, 0
    %v750 = vsel %vm622, 1, 0
    %v751 = vsel %vm623, 1, 0
    %v752 = vsel %vm624, 1, 0
    %v753 = vsel %vm625, 1, 0
    %v754 = vcvt.s32.f32 %v626
    %v755 = vcvt.s32.f32 %v627
    %v756 = vcvt.s32.f32 %v628
    %v757 = vcvt.s32.f32 %v629
    %v758 = vcvt.s32.f32 %v630
    %v759 = vcvt.s32.f32 %v631
    %v760 = vcvt.s32.f32 %v632
    %v761 = vcvt.s32.f32 %v633
    %v762 = vcvt.s32.f32 %v634
    %v763 = vcvt.s32.f32 %v635
    %v764 = vcvt.s32.f32 %v636
    %v765 = vcvt.s32.f32 %v637
    %v766 = vcvt.s32.f32 %v638
    %v767 = vcvt.s32.f32 %v639
    %v768 = vcvt.s32.f32 %v640
    %v769 = vcvt.s32.f32 %v641
    %v770 = vcvt.s32.f32 %v642
    %v771 = vcvt.s32.f32 %v643
    %v772 = vcvt.s32.f32 %v644
    %v773 = vcvt.s32.f32 %v645
    %v774 = vcvt.s32.f32 %v646
    %v775 = vcvt.s32.f32 %v647
    %v776 = vcvt.s32.f32 %v648
    %v777 = vcvt.s32.f32 %v649
    %v778 = vcvt.s32.f32 %v650
    %v779 = vcvt.s32.f32 %v651
    %v780 = vcvt.s32.f32 %v652
    %v781 = vcvt.s32.f32 %v653
    %v782 = vcvt.s32.f32 %v654
    %v783 = vcvt.s32.f32 %v655
    %v784 = vcvt.s32.f32 %v656
    %v785 = vcvt.s32.f32 %v657
    %v786 = vcvt.s32.f32 %v658
    %v787 = vcvt.s32.f32 %v659
    %v788 = vcvt.s32.f32 %v660
    %v789 = vcvt.s32.f32 %v661
    %v790 = vcvt.s32.f32 %v662
    %v791 = vcvt.s32.f32 %v663
    %v792 = vcvt.s32.f32 %v664
    %v793 = vcvt.s32.f32 %v665
    %v794 = vcvt.s32.f32 %v666
    %v795 = vcvt.s32.f32 %v667
    %v796 = vcvt.s32.f32 %v668
    %v797 = vcvt.s32.f32 %v669
    %v798 = vcvt.s32.f32 %v670
    %v799 = vcvt.s32.f32 %v671
    %v800 = vcvt.s32.f32 %v672
    %v801 = vcvt.s32.f32 %v673
    %v802 = vcvt.s32.f32 %v674
    %v803 = vcvt.s32.f32 %v675
    %v804 = vcvt.s32.f32 %v676
    %v805 = vcvt.s32.f32 %v677
    %v806 = vcvt.s32.f32 %v678
    %v807 = vcvt.s32.f32 %v679
    %v808 = vcvt.s32.f32 %v680
    %v809 = vcvt.s32.f32 %v681
    %v810 = vcvt.s32.f32 %v682
    %v811 = vcvt.s32.f32 %v683
    %v812 = vcvt.s32.f32 %v684
    %v813 = vcvt.s32.f32 %v685
    %v814 = vcvt.s32.f32 %v686
    %v815 = vcvt.s32.f32 %v687
    %v816 = vcvt.s32.f32 %v688
    %v817 = vcvt.s32.f32 %v689
    %v818 = vcvt.s32.f32 %v690
    %v819 = vcvt.s32.f32 %v691
    %v820 = vcvt.s32.f32 %v692
    %v821 = vcvt.s32.f32 %v693
    %v822 = vcvt.s32.f32 %v694
    %v823 = vcvt.s32.f32 %v695
    %v824 = vcvt.s32.f32 %v696
    %v825 = vcvt.s32.f32 %v697
    %v826 = vcvt.s32.f32 %v698
    %v827 = vcvt.s32.f32 %v699
    %v828 = vcvt.s32.f32 %v700
    %v829 = vcvt.s32.f32 %v701
    %v830 = vcvt.s32.f32 %v702
    %v831 = vcvt.s32.f32 %v703
    %v832 = vcvt.s32.f32 %v704
    %v833 = vcvt.s32.f32 %v705
    %v834 = vcvt.s32.f32 %v706
    %v835 = vcvt.s32.f32 %v707
    %v836 = vcvt.s32.f32 %v708
    %v837 = vcvt.s32.f32 %v709
    %v838 = vcvt.s32.f32 %v710
    %v839 = vcvt.s32.f32 %v711
    %v840 = vcvt.s32.f32 %v712
    %v841 = vcvt.s32.f32 %v713
    %v842 = vcvt.s32.f32 %v714
    %v843 = vcvt.s32.f32 %v715
    %v844 = vcvt.s32.f32 %v716
    %v845 = vcvt.s32.f32 %v717
    %v846 = vcvt.s32.f32 %v718
    %v847 = vcvt.s32.f32 %v719
    %v848 = vcvt.s32.f32 %v720
    %v849 = vcvt.s32.f32 %v721
    %v850 = vcvt.s32.f32 %v722
    %v851 = vcvt.s32.f32 %v723
    %v852 = vcvt.s32.f32 %v724
    %v853 = vcvt.s32.f32 %v725
    %v854 = vcvt.s32.f32 %v726
    %v855 = vcvt.s32.f32 %v727
    %v856 = vcvt.s32.f32 %v728
    %v857 = vcvt.s32.f32 %v729
    %v858 = vcvt.s32.f32 %v730
    %v859 = vcvt.s32.f32 %v731
    %v860 = vcvt.s32.f32 %v732
    %v861 = vcvt.s32.f32 %v733
    %v862 = vcvt.s32.f32 %v734
    %v863 = vcvt.s32.f32 %v735
    %v864 = vcvt.s32.f32 %v736
    %v865 = vcvt.s32.f32 %v737
    %v866 = vcvt.s32.f32 %v738
    %v867 = vcvt.s32.f32 %v739
    %v868 = vcvt.s32.f32 %v740
    %v869 = vcvt.s32.f32 %v741
    %v870 = vcvt.s32.f32 %v742
    %v871 = vcvt.s32.f32 %v743
    %v872 = vcvt.s32.f32 %v744
    %v873 = vcvt.s32.f32 %v745
    %v874 = vcvt.s32.f32 %v746
    %v875 = vcvt.s32.f32 %v747
    %v876 = vcvt.s32.f32 %v748
    %v877 = vcvt.s32.f32 %v749
    %v878 = vcvt.s32.f32 %v750
    %v879 = vcvt.s32.f32 %v751
    %v880 = vcvt.s32.f32 %v752
    %v881 = vcvt.s32.f32 %v753
    %v882 = vmul.f32 %v82, %v91
    %v883 = vmul.f32 %v83, %v92
    %v884 = vmul.f32 %v84, %v93
    %v885 = vmul.f32 %v85, %v94
    %v886 = vmul.f32 %v86, %v95
    %v887 = vmul.f32 %v87, %v96
    %v888 = vmul.f32 %v88, %v97
    %v889 = vmul.f32 %v89, %v98
    %890 = vmatprep.subr.mxu0 0.0
    %891 = vmatpush1.msra.mxu0 %v754
    %892 = vmatprep.subr.mxu0 0.0
    %893 = vmatpush1.msra.mxu0 %v755
    %894 = vmatprep.subr.mxu0 0.0
    %895 = vmatpush1.msra.mxu0 %v756
    %896 = vmatprep.subr.mxu0 0.0
    %897 = vmatpush1.msra.mxu0 %v757
    %898 = vmatprep.subr.mxu0 0.0
    %899 = vmatpush1.msra.mxu0 %v758
    %900 = vmatprep.subr.mxu0 0.0
    %901 = vmatpush1.msra.mxu0 %v759
    %902 = vmatprep.subr.mxu0 0.0
    %903 = vmatpush1.msra.mxu0 %v760
    %904 = vmatprep.subr.mxu0 0.0
    %905 = vmatpush1.msra.mxu0 %v761
    %906 = vmatprep.subr.mxu0 0.0
    %907 = vmatpush1.msra.mxu0 %v762
    %908 = vmatprep.subr.mxu0 0.0
    %909 = vmatpush1.msra.mxu0 %v763
    %910 = vmatprep.subr.mxu0 0.0
    %911 = vmatpush1.msra.mxu0 %v764
    %912 = vmatprep.subr.mxu0 0.0
    %913 = vmatpush1.msra.mxu0 %v765
    %914 = vmatprep.subr.mxu0 0.0
    %915 = vmatpush1.msra.mxu0 %v766
    %916 = vmatprep.subr.mxu0 0.0
    %917 = vmatpush1.msra.mxu0 %v767
    %918 = vmatprep.subr.mxu0 0.0
    %919 = vmatpush1.msra.mxu0 %v768
    %920 = vmatprep.subr.mxu0 0.0
    %921 = vmatpush1.msra.mxu0 %v769
    %922 = vmatprep.subr.mxu0 0.0
    %923 = vmatpush1.msra.mxu0 %v770
    %924 = vmatprep.subr.mxu0 0.0
    %925 = vmatpush1.msra.mxu0 %v771
    %926 = vmatprep.subr.mxu0 0.0
    %927 = vmatpush1.msra.mxu0 %v772
    %928 = vmatprep.subr.mxu0 0.0
    %929 = vmatpush1.msra.mxu0 %v773
    %930 = vmatprep.subr.mxu0 0.0
    %931 = vmatpush1.msra.mxu0 %v774
    %932 = vmatprep.subr.mxu0 0.0
    %933 = vmatpush1.msra.mxu0 %v775
    %934 = vmatprep.subr.mxu0 0.0
    %935 = vmatpush1.msra.mxu0 %v776
    %936 = vmatprep.subr.mxu0 0.0
    %937 = vmatpush1.msra.mxu0 %v777
    %938 = vmatprep.subr.mxu0 0.0
    %939 = vmatpush1.msra.mxu0 %v778
    %940 = vmatprep.subr.mxu0 0.0
    %941 = vmatpush1.msra.mxu0 %v779
    %942 = vmatprep.subr.mxu0 0.0
    %943 = vmatpush1.msra.mxu0 %v780
    %944 = vmatprep.subr.mxu0 0.0
    %945 = vmatpush1.msra.mxu0 %v781
    %946 = vmatprep.subr.mxu0 0.0
    %947 = vmatpush1.msra.mxu0 %v782
    %948 = vmatprep.subr.mxu0 0.0
    %949 = vmatpush1.msra.mxu0 %v783
    %950 = vmatprep.subr.mxu0 0.0
    %951 = vmatpush1.msra.mxu0 %v784
    %952 = vmatprep.subr.mxu0 0.0
    %953 = vmatpush1.msra.mxu0 %v785
    %954 = vmatprep.mubr.f32.mxu0 %v883
    %955 = vmatmul.mubr.f32.gmra.mrb[0].mxu0 %v882
    %v956 = vpop.f32.mrb[0].mxu0
    %v957 = vadd.f32 0.0, %v956
    %v958 = vpop.f32.mrb[0].mxu0
    %959 = vdwg.mxu0
    %960 = vmatprep.subr.mxu0 0.0
    %961 = vmatpush1.msra.mxu0 %v786
    %962 = vmatprep.subr.mxu0 0.0
    %963 = vmatpush1.msra.mxu0 %v787
    %964 = vmatprep.subr.mxu0 0.0
    %965 = vmatpush1.msra.mxu0 %v788
    %966 = vmatprep.subr.mxu0 0.0
    %967 = vmatpush1.msra.mxu0 %v789
    %968 = vmatprep.subr.mxu0 0.0
    %969 = vmatpush1.msra.mxu0 %v790
    %970 = vmatprep.subr.mxu0 0.0
    %971 = vmatpush1.msra.mxu0 %v791
    %972 = vmatprep.subr.mxu0 0.0
    %973 = vmatpush1.msra.mxu0 %v792
    %974 = vmatprep.subr.mxu0 0.0
    %975 = vmatpush1.msra.mxu0 %v793
    %976 = vmatprep.subr.mxu0 0.0
    %977 = vmatpush1.msra.mxu0 %v794
    %978 = vmatprep.subr.mxu0 0.0
    %979 = vmatpush1.msra.mxu0 %v795
    %980 = vmatprep.subr.mxu0 0.0
    %981 = vmatpush1.msra.mxu0 %v796
    %982 = vmatprep.subr.mxu0 0.0
    %983 = vmatpush1.msra.mxu0 %v797
    %984 = vmatprep.subr.mxu0 0.0
    %985 = vmatpush1.msra.mxu0 %v798
    %986 = vmatprep.subr.mxu0 0.0
    %987 = vmatpush1.msra.mxu0 %v799
    %988 = vmatprep.subr.mxu0 0.0
    %989 = vmatpush1.msra.mxu0 %v800
    %990 = vmatprep.subr.mxu0 0.0
    %991 = vmatpush1.msra.mxu0 %v801
    %992 = vmatprep.subr.mxu0 0.0
    %993 = vmatpush1.msra.mxu0 %v802
    %994 = vmatprep.subr.mxu0 0.0
    %995 = vmatpush1.msra.mxu0 %v803
    %996 = vmatprep.subr.mxu0 0.0
    %997 = vmatpush1.msra.mxu0 %v804
    %998 = vmatprep.subr.mxu0 0.0
    %999 = vmatpush1.msra.mxu0 %v805
    %1000 = vmatprep.subr.mxu0 0.0
    %1001 = vmatpush1.msra.mxu0 %v806
    %1002 = vmatprep.subr.mxu0 0.0
    %1003 = vmatpush1.msra.mxu0 %v807
    %1004 = vmatprep.subr.mxu0 0.0
    %1005 = vmatpush1.msra.mxu0 %v808
    %1006 = vmatprep.subr.mxu0 0.0
    %1007 = vmatpush1.msra.mxu0 %v809
    %1008 = vmatprep.subr.mxu0 0.0
    %1009 = vmatpush1.msra.mxu0 %v810
    %1010 = vmatprep.subr.mxu0 0.0
    %1011 = vmatpush1.msra.mxu0 %v811
    %1012 = vmatprep.subr.mxu0 0.0
    %1013 = vmatpush1.msra.mxu0 %v812
    %1014 = vmatprep.subr.mxu0 0.0
    %1015 = vmatpush1.msra.mxu0 %v813
    %1016 = vmatprep.subr.mxu0 0.0
    %1017 = vmatpush1.msra.mxu0 %v814
    %1018 = vmatprep.subr.mxu0 0.0
    %1019 = vmatpush1.msra.mxu0 %v815
    %1020 = vmatprep.subr.mxu0 0.0
    %1021 = vmatpush1.msra.mxu0 %v816
    %1022 = vmatprep.subr.mxu0 0.0
    %1023 = vmatpush1.msra.mxu0 %v817
    %1024 = vmatprep.mubr.f32.mxu0 %v885
    %1025 = vmatmul.mubr.f32.gmra.mrb[0].mxu0 %v884
    %v1026 = vpop.f32.mrb[0].mxu0
    %v1027 = vadd.f32 %v957, %v1026
    %v1028 = vpop.f32.mrb[0].mxu0
    %1029 = vdwg.mxu0
    %1030 = vmatprep.subr.mxu0 0.0
    %1031 = vmatpush1.msra.mxu0 %v818
    %1032 = vmatprep.subr.mxu0 0.0
    %1033 = vmatpush1.msra.mxu0 %v819
    %1034 = vmatprep.subr.mxu0 0.0
    %1035 = vmatpush1.msra.mxu0 %v820
    %1036 = vmatprep.subr.mxu0 0.0
    %1037 = vmatpush1.msra.mxu0 %v821
    %1038 = vmatprep.subr.mxu0 0.0
    %1039 = vmatpush1.msra.mxu0 %v822
    %1040 = vmatprep.subr.mxu0 0.0
    %1041 = vmatpush1.msra.mxu0 %v823
    %1042 = vmatprep.subr.mxu0 0.0
    %1043 = vmatpush1.msra.mxu0 %v824
    %1044 = vmatprep.subr.mxu0 0.0
    %1045 = vmatpush1.msra.mxu0 %v825
    %1046 = vmatprep.subr.mxu0 0.0
    %1047 = vmatpush1.msra.mxu0 %v826
    %1048 = vmatprep.subr.mxu0 0.0
    %1049 = vmatpush1.msra.mxu0 %v827
    %1050 = vmatprep.subr.mxu0 0.0
    %1051 = vmatpush1.msra.mxu0 %v828
    %1052 = vmatprep.subr.mxu0 0.0
    %1053 = vmatpush1.msra.mxu0 %v829
    %1054 = vmatprep.subr.mxu0 0.0
    %1055 = vmatpush1.msra.mxu0 %v830
    %1056 = vmatprep.subr.mxu0 0.0
    %1057 = vmatpush1.msra.mxu0 %v831
    %1058 = vmatprep.subr.mxu0 0.0
    %1059 = vmatpush1.msra.mxu0 %v832
    %1060 = vmatprep.subr.mxu0 0.0
    %1061 = vmatpush1.msra.mxu0 %v833
    %1062 = vmatprep.subr.mxu0 0.0
    %1063 = vmatpush1.msra.mxu0 %v834
    %1064 = vmatprep.subr.mxu0 0.0
    %1065 = vmatpush1.msra.mxu0 %v835
    %1066 = vmatprep.subr.mxu0 0.0
    %1067 = vmatpush1.msra.mxu0 %v836
    %1068 = vmatprep.subr.mxu0 0.0
    %1069 = vmatpush1.msra.mxu0 %v837
    %1070 = vmatprep.subr.mxu0 0.0
    %1071 = vmatpush1.msra.mxu0 %v838
    %1072 = vmatprep.subr.mxu0 0.0
    %1073 = vmatpush1.msra.mxu0 %v839
    %1074 = vmatprep.subr.mxu0 0.0
    %1075 = vmatpush1.msra.mxu0 %v840
    %1076 = vmatprep.subr.mxu0 0.0
    %1077 = vmatpush1.msra.mxu0 %v841
    %1078 = vmatprep.subr.mxu0 0.0
    %1079 = vmatpush1.msra.mxu0 %v842
    %1080 = vmatprep.subr.mxu0 0.0
    %1081 = vmatpush1.msra.mxu0 %v843
    %1082 = vmatprep.subr.mxu0 0.0
    %1083 = vmatpush1.msra.mxu0 %v844
    %1084 = vmatprep.subr.mxu0 0.0
    %1085 = vmatpush1.msra.mxu0 %v845
    %1086 = vmatprep.subr.mxu0 0.0
    %1087 = vmatpush1.msra.mxu0 %v846
    %1088 = vmatprep.subr.mxu0 0.0
    %1089 = vmatpush1.msra.mxu0 %v847
    %1090 = vmatprep.subr.mxu0 0.0
    %1091 = vmatpush1.msra.mxu0 %v848
    %1092 = vmatprep.subr.mxu0 0.0
    %1093 = vmatpush1.msra.mxu0 %v849
    %1094 = vmatprep.mubr.f32.mxu0 %v887
    %1095 = vmatmul.mubr.f32.gmra.mrb[0].mxu0 %v886
    %v1096 = vpop.f32.mrb[0].mxu0
    %v1097 = vadd.f32 %v1027, %v1096
    %v1098 = vpop.f32.mrb[0].mxu0
    %1099 = vdwg.mxu0
    %1100 = vmatprep.subr.mxu0 0.0
    %1101 = vmatpush1.msra.mxu0 %v850
    %1102 = vmatprep.subr.mxu0 0.0
    %1103 = vmatpush1.msra.mxu0 %v851
    %1104 = vmatprep.subr.mxu0 0.0
    %1105 = vmatpush1.msra.mxu0 %v852
    %1106 = vmatprep.subr.mxu0 0.0
    %1107 = vmatpush1.msra.mxu0 %v853
    %1108 = vmatprep.subr.mxu0 0.0
    %1109 = vmatpush1.msra.mxu0 %v854
    %1110 = vmatprep.subr.mxu0 0.0
    %1111 = vmatpush1.msra.mxu0 %v855
    %1112 = vmatprep.subr.mxu0 0.0
    %1113 = vmatpush1.msra.mxu0 %v856
    %1114 = vmatprep.subr.mxu0 0.0
    %1115 = vmatpush1.msra.mxu0 %v857
    %1116 = vmatprep.subr.mxu0 0.0
    %1117 = vmatpush1.msra.mxu0 %v858
    %1118 = vmatprep.subr.mxu0 0.0
    %1119 = vmatpush1.msra.mxu0 %v859
    %1120 = vmatprep.subr.mxu0 0.0
    %1121 = vmatpush1.msra.mxu0 %v860
    %1122 = vmatprep.subr.mxu0 0.0
    %1123 = vmatpush1.msra.mxu0 %v861
    %1124 = vmatprep.subr.mxu0 0.0
    %1125 = vmatpush1.msra.mxu0 %v862
    %1126 = vmatprep.subr.mxu0 0.0
    %1127 = vmatpush1.msra.mxu0 %v863
    %1128 = vmatprep.subr.mxu0 0.0
    %1129 = vmatpush1.msra.mxu0 %v864
    %1130 = vmatprep.subr.mxu0 0.0
    %1131 = vmatpush1.msra.mxu0 %v865
    %1132 = vmatprep.subr.mxu0 0.0
    %1133 = vmatpush1.msra.mxu0 %v866
    %1134 = vmatprep.subr.mxu0 0.0
    %1135 = vmatpush1.msra.mxu0 %v867
    %1136 = vmatprep.subr.mxu0 0.0
    %1137 = vmatpush1.msra.mxu0 %v868
    %1138 = vmatprep.subr.mxu0 0.0
    %1139 = vmatpush1.msra.mxu0 %v869
    %1140 = vmatprep.subr.mxu0 0.0
    %1141 = vmatpush1.msra.mxu0 %v870
    %1142 = vmatprep.subr.mxu0 0.0
    %1143 = vmatpush1.msra.mxu0 %v871
    %1144 = vmatprep.subr.mxu0 0.0
    %1145 = vmatpush1.msra.mxu0 %v872
    %1146 = vmatprep.subr.mxu0 0.0
    %1147 = vmatpush1.msra.mxu0 %v873
    %1148 = vmatprep.subr.mxu0 0.0
    %1149 = vmatpush1.msra.mxu0 %v874
    %1150 = vmatprep.subr.mxu0 0.0
    %1151 = vmatpush1.msra.mxu0 %v875
    %1152 = vmatprep.subr.mxu0 0.0
    %1153 = vmatpush1.msra.mxu0 %v876
    %1154 = vmatprep.subr.mxu0 0.0
    %1155 = vmatpush1.msra.mxu0 %v877
    %1156 = vmatprep.subr.mxu0 0.0
    %1157 = vmatpush1.msra.mxu0 %v878
    %1158 = vmatprep.subr.mxu0 0.0
    %1159 = vmatpush1.msra.mxu0 %v879
    %1160 = vmatprep.subr.mxu0 0.0
    %1161 = vmatpush1.msra.mxu0 %v880
    %1162 = vmatprep.subr.mxu0 0.0
    %1163 = vmatpush1.msra.mxu0 %v881
    %1164 = vmatprep.mubr.f32.mxu0 %v889
    %1165 = vmatmul.mubr.f32.gmra.mrb[0].mxu0 %v888
    %v1166 = vpop.f32.mrb[0].mxu0
    %v1167 = vadd.f32 %v1097, %v1166
    %v1168 = vpop.f32.mrb[0].mxu0
    %1169 = vdwg.mxu0
    %vm1170 = vcmask 80896
    %v1171 = vsel %vm1170, %v1167, -inf
    %v1172 = vrot.slane %v1171, 4
    %v1173 = vmax.f32 %v1171, %v1172
    %v1174 = vrot.slane %v1173, 2
    %v1175 = vmax.f32 %v1173, %v1174
    %v1176 = vrot.slane %v1175, 1
    %v1177 = vmax.f32 %v1175, %v1176
    %v1178 = vsub.f32 %v1167, %v1177
    %v1179 = vmul.f32 %v1178, 1.442695
    %v1180 = vpow.pop %v1179
    %v1181 = vsel %vm1170, %v1180, 0.0
    %v1182 = vrot.slane %v1181, 4
    %v1183 = vadd.f32 %v1181, %v1182
    %v1184 = vrot.slane %v1183, 2
    %v1185 = vadd.f32 %v1183, %v1184
    %v1186 = vrot.slane %v1185, 1
    %v1187 = vadd.f32 %v1185, %v1186
    %v1188 = vrcp.pop %v1187
    %v1189 = vmul.f32 %v1180, %v1188
    %v1191 = vsel %vm1170, %v1189, 0
    %v1194 = vsel %vm1170, %v754, 0
    %v1197 = vsel %vm1170, %v755, 0
    %v1200 = vsel %vm1170, %v756, 0
    %v1203 = vsel %vm1170, %v757, 0
    %v1206 = vsel %vm1170, %v758, 0
    %v1209 = vsel %vm1170, %v759, 0
    %v1212 = vsel %vm1170, %v760, 0
    %v1215 = vsel %vm1170, %v761, 0
    %v1218 = vsel %vm1170, %v762, 0
    %v1221 = vsel %vm1170, %v763, 0
    %v1224 = vsel %vm1170, %v764, 0
    %v1227 = vsel %vm1170, %v765, 0
    %v1230 = vsel %vm1170, %v766, 0
    %v1233 = vsel %vm1170, %v767, 0
    %v1236 = vsel %vm1170, %v768, 0
    %v1239 = vsel %vm1170, %v769, 0
    %v1242 = vsel %vm1170, %v770, 0
    %v1245 = vsel %vm1170, %v771, 0
    %v1248 = vsel %vm1170, %v772, 0
    %v1251 = vsel %vm1170, %v773, 0
    %v1254 = vsel %vm1170, %v774, 0
    %v1257 = vsel %vm1170, %v775, 0
    %v1260 = vsel %vm1170, %v776, 0
    %v1263 = vsel %vm1170, %v777, 0
    %v1266 = vsel %vm1170, %v778, 0
    %v1269 = vsel %vm1170, %v779, 0
    %v1272 = vsel %vm1170, %v780, 0
    %v1275 = vsel %vm1170, %v781, 0
    %v1278 = vsel %vm1170, %v782, 0
    %v1281 = vsel %vm1170, %v783, 0
    %v1284 = vsel %vm1170, %v784, 0
    %v1287 = vsel %vm1170, %v785, 0
    %v1290 = vsel %vm1170, %v786, 0
    %v1293 = vsel %vm1170, %v787, 0
    %v1296 = vsel %vm1170, %v788, 0
    %v1299 = vsel %vm1170, %v789, 0
    %v1302 = vsel %vm1170, %v790, 0
    %v1305 = vsel %vm1170, %v791, 0
    %v1308 = vsel %vm1170, %v792, 0
    %v1311 = vsel %vm1170, %v793, 0
    %v1314 = vsel %vm1170, %v794, 0
    %v1317 = vsel %vm1170, %v795, 0
    %v1320 = vsel %vm1170, %v796, 0
    %v1323 = vsel %vm1170, %v797, 0
    %v1326 = vsel %vm1170, %v798, 0
    %v1329 = vsel %vm1170, %v799, 0
    %v1332 = vsel %vm1170, %v800, 0
    %v1335 = vsel %vm1170, %v801, 0
    %v1338 = vsel %vm1170, %v802, 0
    %v1341 = vsel %vm1170, %v803, 0
    %v1344 = vsel %vm1170, %v804, 0
    %v1347 = vsel %vm1170, %v805, 0
    %v1350 = vsel %vm1170, %v806, 0
    %v1353 = vsel %vm1170, %v807, 0
    %v1356 = vsel %vm1170, %v808, 0
    %v1359 = vsel %vm1170, %v809, 0
    %v1362 = vsel %vm1170, %v810, 0
    %v1365 = vsel %vm1170, %v811, 0
    %v1368 = vsel %vm1170, %v812, 0
    %v1371 = vsel %vm1170, %v813, 0
    %v1374 = vsel %vm1170, %v814, 0
    %v1377 = vsel %vm1170, %v815, 0
    %v1380 = vsel %vm1170, %v816, 0
    %v1383 = vsel %vm1170, %v817, 0
    %v1386 = vsel %vm1170, %v818, 0
    %v1389 = vsel %vm1170, %v819, 0
    %v1392 = vsel %vm1170, %v820, 0
    %v1395 = vsel %vm1170, %v821, 0
    %v1398 = vsel %vm1170, %v822, 0
    %v1401 = vsel %vm1170, %v823, 0
    %v1404 = vsel %vm1170, %v824, 0
    %v1407 = vsel %vm1170, %v825, 0
    %v1410 = vsel %vm1170, %v826, 0
    %v1413 = vsel %vm1170, %v827, 0
    %v1416 = vsel %vm1170, %v828, 0
    %v1419 = vsel %vm1170, %v829, 0
    %v1422 = vsel %vm1170, %v830, 0
    %v1425 = vsel %vm1170, %v831, 0
    %v1428 = vsel %vm1170, %v832, 0
    %v1431 = vsel %vm1170, %v833, 0
    %v1434 = vsel %vm1170, %v834, 0
    %v1437 = vsel %vm1170, %v835, 0
    %v1440 = vsel %vm1170, %v836, 0
    %v1443 = vsel %vm1170, %v837, 0
    %v1446 = vsel %vm1170, %v838, 0
    %v1449 = vsel %vm1170, %v839, 0
    %v1452 = vsel %vm1170, %v840, 0
    %v1455 = vsel %vm1170, %v841, 0
    %v1458 = vsel %vm1170, %v842, 0
    %v1461 = vsel %vm1170, %v843, 0
    %v1464 = vsel %vm1170, %v844, 0
    %v1467 = vsel %vm1170, %v845, 0
    %v1470 = vsel %vm1170, %v846, 0
    %v1473 = vsel %vm1170, %v847, 0
    %v1476 = vsel %vm1170, %v848, 0
    %v1479 = vsel %vm1170, %v849, 0
    %v1482 = vsel %vm1170, %v850, 0
    %v1485 = vsel %vm1170, %v851, 0
    %v1488 = vsel %vm1170, %v852, 0
    %v1491 = vsel %vm1170, %v853, 0
    %v1494 = vsel %vm1170, %v854, 0
    %v1497 = vsel %vm1170, %v855, 0
    %v1500 = vsel %vm1170, %v856, 0
    %v1503 = vsel %vm1170, %v857, 0
    %v1506 = vsel %vm1170, %v858, 0
    %v1509 = vsel %vm1170, %v859, 0
    %v1512 = vsel %vm1170, %v860, 0
    %v1515 = vsel %vm1170, %v861, 0
    %v1518 = vsel %vm1170, %v862, 0
    %v1521 = vsel %vm1170, %v863, 0
    %v1524 = vsel %vm1170, %v864, 0
    %v1527 = vsel %vm1170, %v865, 0
    %v1530 = vsel %vm1170, %v866, 0
    %v1533 = vsel %vm1170, %v867, 0
    %v1536 = vsel %vm1170, %v868, 0
    %v1539 = vsel %vm1170, %v869, 0
    %v1542 = vsel %vm1170, %v870, 0
    %v1545 = vsel %vm1170, %v871, 0
    %v1548 = vsel %vm1170, %v872, 0
    %v1551 = vsel %vm1170, %v873, 0
    %v1554 = vsel %vm1170, %v874, 0
    %v1557 = vsel %vm1170, %v875, 0
    %v1560 = vsel %vm1170, %v876, 0
    %v1563 = vsel %vm1170, %v877, 0
    %v1566 = vsel %vm1170, %v878, 0
    %v1569 = vsel %vm1170, %v879, 0
    %v1572 = vsel %vm1170, %v880, 0
    %v1575 = vsel %vm1170, %v881, 0
    %1577 = vmatprep.subr.mxu0 0.0
    %1578 = vmatpush1.xpose.msra.mxu0 %v1194
    %1579 = vmatprep.subr.mxu0 0.0
    %1580 = vmatpush1.xpose.msra.mxu0 %v1197
    %1581 = vmatprep.subr.mxu0 0.0
    %1582 = vmatpush1.xpose.msra.mxu0 %v1200
    %1583 = vmatprep.subr.mxu0 0.0
    %1584 = vmatpush1.xpose.msra.mxu0 %v1203
    %1585 = vmatprep.subr.mxu0 0.0
    %1586 = vmatpush1.xpose.msra.mxu0 %v1206
    %1587 = vmatprep.subr.mxu0 0.0
    %1588 = vmatpush1.xpose.msra.mxu0 %v1209
    %1589 = vmatprep.subr.mxu0 0.0
    %1590 = vmatpush1.xpose.msra.mxu0 %v1212
    %1591 = vmatprep.subr.mxu0 0.0
    %1592 = vmatpush1.xpose.msra.mxu0 %v1215
    %1593 = vmatprep.subr.mxu0 0.0
    %1594 = vmatpush1.xpose.msra.mxu0 %v1218
    %1595 = vmatprep.subr.mxu0 0.0
    %1596 = vmatpush1.xpose.msra.mxu0 %v1221
    %1597 = vmatprep.subr.mxu0 0.0
    %1598 = vmatpush1.xpose.msra.mxu0 %v1224
    %1599 = vmatprep.subr.mxu0 0.0
    %1600 = vmatpush1.xpose.msra.mxu0 %v1227
    %1601 = vmatprep.subr.mxu0 0.0
    %1602 = vmatpush1.xpose.msra.mxu0 %v1230
    %1603 = vmatprep.subr.mxu0 0.0
    %1604 = vmatpush1.xpose.msra.mxu0 %v1233
    %1605 = vmatprep.subr.mxu0 0.0
    %1606 = vmatpush1.xpose.msra.mxu0 %v1236
    %1607 = vmatprep.subr.mxu0 0.0
    %1608 = vmatpush1.xpose.msra.mxu0 %v1239
    %1609 = vmatprep.subr.mxu0 0.0
    %1610 = vmatpush1.xpose.msra.mxu0 %v1242
    %1611 = vmatprep.subr.mxu0 0.0
    %1612 = vmatpush1.xpose.msra.mxu0 %v1245
    %1613 = vmatprep.subr.mxu0 0.0
    %1614 = vmatpush1.xpose.msra.mxu0 %v1248
    %1615 = vmatprep.subr.mxu0 0.0
    %1616 = vmatpush1.xpose.msra.mxu0 %v1251
    %1617 = vmatprep.subr.mxu0 0.0
    %1618 = vmatpush1.xpose.msra.mxu0 %v1254
    %1619 = vmatprep.subr.mxu0 0.0
    %1620 = vmatpush1.xpose.msra.mxu0 %v1257
    %1621 = vmatprep.subr.mxu0 0.0
    %1622 = vmatpush1.xpose.msra.mxu0 %v1260
    %1623 = vmatprep.subr.mxu0 0.0
    %1624 = vmatpush1.xpose.msra.mxu0 %v1263
    %1625 = vmatprep.subr.mxu0 0.0
    %1626 = vmatpush1.xpose.msra.mxu0 %v1266
    %1627 = vmatprep.subr.mxu0 0.0
    %1628 = vmatpush1.xpose.msra.mxu0 %v1269
    %1629 = vmatprep.subr.mxu0 0.0
    %1630 = vmatpush1.xpose.msra.mxu0 %v1272
    %1631 = vmatprep.subr.mxu0 0.0
    %1632 = vmatpush1.xpose.msra.mxu0 %v1275
    %1633 = vmatprep.subr.mxu0 0.0
    %1634 = vmatpush1.xpose.msra.mxu0 %v1278
    %1635 = vmatprep.subr.mxu0 0.0
    %1636 = vmatpush1.xpose.msra.mxu0 %v1281
    %1637 = vmatprep.subr.mxu0 0.0
    %1638 = vmatpush1.xpose.msra.mxu0 %v1284
    %1639 = vmatprep.subr.mxu0 0.0
    %1640 = vmatpush1.xpose.msra.mxu0 %v1287
    %1641 = vmatprep.mubr.f32.mxu0 0.0
    %1642 = vmatmul.mubr.f32.gmra.mrb[0].mxu0 %v1191
    %v1643 = vpop.f32.mrb[0].mxu0
    %v1644 = vadd.f32 0.0, %v1643
    %v1645 = vpop.f32.mrb[0].mxu0
    %v1646 = vadd.f32 0.0, %v1645
    %1647 = vdwg.mxu0
    %1648 = vmatprep.subr.mxu0 0.0
    %1649 = vmatpush1.xpose.msra.mxu0 %v1290
    %1650 = vmatprep.subr.mxu0 0.0
    %1651 = vmatpush1.xpose.msra.mxu0 %v1293
    %1652 = vmatprep.subr.mxu0 0.0
    %1653 = vmatpush1.xpose.msra.mxu0 %v1296
    %1654 = vmatprep.subr.mxu0 0.0
    %1655 = vmatpush1.xpose.msra.mxu0 %v1299
    %1656 = vmatprep.subr.mxu0 0.0
    %1657 = vmatpush1.xpose.msra.mxu0 %v1302
    %1658 = vmatprep.subr.mxu0 0.0
    %1659 = vmatpush1.xpose.msra.mxu0 %v1305
    %1660 = vmatprep.subr.mxu0 0.0
    %1661 = vmatpush1.xpose.msra.mxu0 %v1308
    %1662 = vmatprep.subr.mxu0 0.0
    %1663 = vmatpush1.xpose.msra.mxu0 %v1311
    %1664 = vmatprep.subr.mxu0 0.0
    %1665 = vmatpush1.xpose.msra.mxu0 %v1314
    %1666 = vmatprep.subr.mxu0 0.0
    %1667 = vmatpush1.xpose.msra.mxu0 %v1317
    %1668 = vmatprep.subr.mxu0 0.0
    %1669 = vmatpush1.xpose.msra.mxu0 %v1320
    %1670 = vmatprep.subr.mxu0 0.0
    %1671 = vmatpush1.xpose.msra.mxu0 %v1323
    %1672 = vmatprep.subr.mxu0 0.0
    %1673 = vmatpush1.xpose.msra.mxu0 %v1326
    %1674 = vmatprep.subr.mxu0 0.0
    %1675 = vmatpush1.xpose.msra.mxu0 %v1329
    %1676 = vmatprep.subr.mxu0 0.0
    %1677 = vmatpush1.xpose.msra.mxu0 %v1332
    %1678 = vmatprep.subr.mxu0 0.0
    %1679 = vmatpush1.xpose.msra.mxu0 %v1335
    %1680 = vmatprep.subr.mxu0 0.0
    %1681 = vmatpush1.xpose.msra.mxu0 %v1338
    %1682 = vmatprep.subr.mxu0 0.0
    %1683 = vmatpush1.xpose.msra.mxu0 %v1341
    %1684 = vmatprep.subr.mxu0 0.0
    %1685 = vmatpush1.xpose.msra.mxu0 %v1344
    %1686 = vmatprep.subr.mxu0 0.0
    %1687 = vmatpush1.xpose.msra.mxu0 %v1347
    %1688 = vmatprep.subr.mxu0 0.0
    %1689 = vmatpush1.xpose.msra.mxu0 %v1350
    %1690 = vmatprep.subr.mxu0 0.0
    %1691 = vmatpush1.xpose.msra.mxu0 %v1353
    %1692 = vmatprep.subr.mxu0 0.0
    %1693 = vmatpush1.xpose.msra.mxu0 %v1356
    %1694 = vmatprep.subr.mxu0 0.0
    %1695 = vmatpush1.xpose.msra.mxu0 %v1359
    %1696 = vmatprep.subr.mxu0 0.0
    %1697 = vmatpush1.xpose.msra.mxu0 %v1362
    %1698 = vmatprep.subr.mxu0 0.0
    %1699 = vmatpush1.xpose.msra.mxu0 %v1365
    %1700 = vmatprep.subr.mxu0 0.0
    %1701 = vmatpush1.xpose.msra.mxu0 %v1368
    %1702 = vmatprep.subr.mxu0 0.0
    %1703 = vmatpush1.xpose.msra.mxu0 %v1371
    %1704 = vmatprep.subr.mxu0 0.0
    %1705 = vmatpush1.xpose.msra.mxu0 %v1374
    %1706 = vmatprep.subr.mxu0 0.0
    %1707 = vmatpush1.xpose.msra.mxu0 %v1377
    %1708 = vmatprep.subr.mxu0 0.0
    %1709 = vmatpush1.xpose.msra.mxu0 %v1380
    %1710 = vmatprep.subr.mxu0 0.0
    %1711 = vmatpush1.xpose.msra.mxu0 %v1383
    %1712 = vmatprep.mubr.f32.mxu0 0.0
    %1713 = vmatmul.mubr.f32.gmra.mrb[0].mxu0 %v1191
    %v1714 = vpop.f32.mrb[0].mxu0
    %v1715 = vadd.f32 0.0, %v1714
    %v1716 = vpop.f32.mrb[0].mxu0
    %v1717 = vadd.f32 0.0, %v1716
    %1718 = vdwg.mxu0
    %1719 = vmatprep.subr.mxu0 0.0
    %1720 = vmatpush1.xpose.msra.mxu0 %v1386
    %1721 = vmatprep.subr.mxu0 0.0
    %1722 = vmatpush1.xpose.msra.mxu0 %v1389
    %1723 = vmatprep.subr.mxu0 0.0
    %1724 = vmatpush1.xpose.msra.mxu0 %v1392
    %1725 = vmatprep.subr.mxu0 0.0
    %1726 = vmatpush1.xpose.msra.mxu0 %v1395
    %1727 = vmatprep.subr.mxu0 0.0
    %1728 = vmatpush1.xpose.msra.mxu0 %v1398
    %1729 = vmatprep.subr.mxu0 0.0
    %1730 = vmatpush1.xpose.msra.mxu0 %v1401
    %1731 = vmatprep.subr.mxu0 0.0
    %1732 = vmatpush1.xpose.msra.mxu0 %v1404
    %1733 = vmatprep.subr.mxu0 0.0
    %1734 = vmatpush1.xpose.msra.mxu0 %v1407
    %1735 = vmatprep.subr.mxu0 0.0
    %1736 = vmatpush1.xpose.msra.mxu0 %v1410
    %1737 = vmatprep.subr.mxu0 0.0
    %1738 = vmatpush1.xpose.msra.mxu0 %v1413
    %1739 = vmatprep.subr.mxu0 0.0
    %1740 = vmatpush1.xpose.msra.mxu0 %v1416
    %1741 = vmatprep.subr.mxu0 0.0
    %1742 = vmatpush1.xpose.msra.mxu0 %v1419
    %1743 = vmatprep.subr.mxu0 0.0
    %1744 = vmatpush1.xpose.msra.mxu0 %v1422
    %1745 = vmatprep.subr.mxu0 0.0
    %1746 = vmatpush1.xpose.msra.mxu0 %v1425
    %1747 = vmatprep.subr.mxu0 0.0
    %1748 = vmatpush1.xpose.msra.mxu0 %v1428
    %1749 = vmatprep.subr.mxu0 0.0
    %1750 = vmatpush1.xpose.msra.mxu0 %v1431
    %1751 = vmatprep.subr.mxu0 0.0
    %1752 = vmatpush1.xpose.msra.mxu0 %v1434
    %1753 = vmatprep.subr.mxu0 0.0
    %1754 = vmatpush1.xpose.msra.mxu0 %v1437
    %1755 = vmatprep.subr.mxu0 0.0
    %1756 = vmatpush1.xpose.msra.mxu0 %v1440
    %1757 = vmatprep.subr.mxu0 0.0
    %1758 = vmatpush1.xpose.msra.mxu0 %v1443
    %1759 = vmatprep.subr.mxu0 0.0
    %1760 = vmatpush1.xpose.msra.mxu0 %v1446
    %1761 = vmatprep.subr.mxu0 0.0
    %1762 = vmatpush1.xpose.msra.mxu0 %v1449
    %1763 = vmatprep.subr.mxu0 0.0
    %1764 = vmatpush1.xpose.msra.mxu0 %v1452
    %1765 = vmatprep.subr.mxu0 0.0
    %1766 = vmatpush1.xpose.msra.mxu0 %v1455
    %1767 = vmatprep.subr.mxu0 0.0
    %1768 = vmatpush1.xpose.msra.mxu0 %v1458
    %1769 = vmatprep.subr.mxu0 0.0
    %1770 = vmatpush1.xpose.msra.mxu0 %v1461
    %1771 = vmatprep.subr.mxu0 0.0
    %1772 = vmatpush1.xpose.msra.mxu0 %v1464
    %1773 = vmatprep.subr.mxu0 0.0
    %1774 = vmatpush1.xpose.msra.mxu0 %v1467
    %1775 = vmatprep.subr.mxu0 0.0
    %1776 = vmatpush1.xpose.msra.mxu0 %v1470
    %1777 = vmatprep.subr.mxu0 0.0
    %1778 = vmatpush1.xpose.msra.mxu0 %v1473
    %1779 = vmatprep.subr.mxu0 0.0
    %1780 = vmatpush1.xpose.msra.mxu0 %v1476
    %1781 = vmatprep.subr.mxu0 0.0
    %1782 = vmatpush1.xpose.msra.mxu0 %v1479
    %1783 = vmatprep.mubr.f32.mxu0 0.0
    %1784 = vmatmul.mubr.f32.gmra.mrb[0].mxu0 %v1191
    %v1785 = vpop.f32.mrb[0].mxu0
    %v1786 = vadd.f32 0.0, %v1785
    %v1787 = vpop.f32.mrb[0].mxu0
    %v1788 = vadd.f32 0.0, %v1787
    %1789 = vdwg.mxu0
    %1790 = vmatprep.subr.mxu0 0.0
    %1791 = vmatpush1.xpose.msra.mxu0 %v1482
    %1792 = vmatprep.subr.mxu0 0.0
    %1793 = vmatpush1.xpose.msra.mxu0 %v1485
    %1794 = vmatprep.subr.mxu0 0.0
    %1795 = vmatpush1.xpose.msra.mxu0 %v1488
    %1796 = vmatprep.subr.mxu0 0.0
    %1797 = vmatpush1.xpose.msra.mxu0 %v1491
    %1798 = vmatprep.subr.mxu0 0.0
    %1799 = vmatpush1.xpose.msra.mxu0 %v1494
    %1800 = vmatprep.subr.mxu0 0.0
    %1801 = vmatpush1.xpose.msra.mxu0 %v1497
    %1802 = vmatprep.subr.mxu0 0.0
    %1803 = vmatpush1.xpose.msra.mxu0 %v1500
    %1804 = vmatprep.subr.mxu0 0.0
    %1805 = vmatpush1.xpose.msra.mxu0 %v1503
    %1806 = vmatprep.subr.mxu0 0.0
    %1807 = vmatpush1.xpose.msra.mxu0 %v1506
    %1808 = vmatprep.subr.mxu0 0.0
    %1809 = vmatpush1.xpose.msra.mxu0 %v1509
    %1810 = vmatprep.subr.mxu0 0.0
    %1811 = vmatpush1.xpose.msra.mxu0 %v1512
    %1812 = vmatprep.subr.mxu0 0.0
    %1813 = vmatpush1.xpose.msra.mxu0 %v1515
    %1814 = vmatprep.subr.mxu0 0.0
    %1815 = vmatpush1.xpose.msra.mxu0 %v1518
    %1816 = vmatprep.subr.mxu0 0.0
    %1817 = vmatpush1.xpose.msra.mxu0 %v1521
    %1818 = vmatprep.subr.mxu0 0.0
    %1819 = vmatpush1.xpose.msra.mxu0 %v1524
    %1820 = vmatprep.subr.mxu0 0.0
    %1821 = vmatpush1.xpose.msra.mxu0 %v1527
    %1822 = vmatprep.subr.mxu0 0.0
    %1823 = vmatpush1.xpose.msra.mxu0 %v1530
    %1824 = vmatprep.subr.mxu0 0.0
    %1825 = vmatpush1.xpose.msra.mxu0 %v1533
    %1826 = vmatprep.subr.mxu0 0.0
    %1827 = vmatpush1.xpose.msra.mxu0 %v1536
    %1828 = vmatprep.subr.mxu0 0.0
    %1829 = vmatpush1.xpose.msra.mxu0 %v1539
    %1830 = vmatprep.subr.mxu0 0.0
    %1831 = vmatpush1.xpose.msra.mxu0 %v1542
    %1832 = vmatprep.subr.mxu0 0.0
    %1833 = vmatpush1.xpose.msra.mxu0 %v1545
    %1834 = vmatprep.subr.mxu0 0.0
    %1835 = vmatpush1.xpose.msra.mxu0 %v1548
    %1836 = vmatprep.subr.mxu0 0.0
    %1837 = vmatpush1.xpose.msra.mxu0 %v1551
    %1838 = vmatprep.subr.mxu0 0.0
    %1839 = vmatpush1.xpose.msra.mxu0 %v1554
    %1840 = vmatprep.subr.mxu0 0.0
    %1841 = vmatpush1.xpose.msra.mxu0 %v1557
    %1842 = vmatprep.subr.mxu0 0.0
    %1843 = vmatpush1.xpose.msra.mxu0 %v1560
    %1844 = vmatprep.subr.mxu0 0.0
    %1845 = vmatpush1.xpose.msra.mxu0 %v1563
    %1846 = vmatprep.subr.mxu0 0.0
    %1847 = vmatpush1.xpose.msra.mxu0 %v1566
    %1848 = vmatprep.subr.mxu0 0.0
    %1849 = vmatpush1.xpose.msra.mxu0 %v1569
    %1850 = vmatprep.subr.mxu0 0.0
    %1851 = vmatpush1.xpose.msra.mxu0 %v1572
    %1852 = vmatprep.subr.mxu0 0.0
    %1853 = vmatpush1.xpose.msra.mxu0 %v1575
    %1854 = vmatprep.mubr.f32.mxu0 0.0
    %1855 = vmatmul.mubr.f32.gmra.mrb[0].mxu0 %v1191
    %v1856 = vpop.f32.mrb[0].mxu0
    %v1857 = vadd.f32 0.0, %v1856
    %v1858 = vpop.f32.mrb[0].mxu0
    %v1859 = vadd.f32 0.0, %v1858
    %1860 = vdwg.mxu0
    %v1861 = vmul.f32 %v1644, %v100
    %v1862 = vmul.f32 %v1646, %v101
    %v1863 = vmul.f32 %v1715, %v102
    %v1864 = vmul.f32 %v1717, %v103
    %v1865 = vmul.f32 %v1786, %v104
    %v1866 = vmul.f32 %v1788, %v105
    %v1867 = vmul.f32 %v1857, %v106
    %v1868 = vmul.f32 %v1859, %v107
    %v1869 = vrot.slane %v1861, 4
    %v1870 = vadd.f32 %v1861, %v1869
    %v1871 = vrot.slane %v1870, 2
    %v1872 = vadd.f32 %v1870, %v1871
    %v1873 = vrot.slane %v1872, 1
    %v1874 = vadd.f32 %v1872, %v1873
    %v1875 = vrot.slane %v1862, 4
    %v1876 = vadd.f32 %v1862, %v1875
    %v1877 = vrot.slane %v1876, 2
    %v1878 = vadd.f32 %v1876, %v1877
    %v1879 = vrot.slane %v1878, 1
    %v1880 = vadd.f32 %v1878, %v1879
    %v1881 = vrot.slane %v1863, 4
    %v1882 = vadd.f32 %v1863, %v1881
    %v1883 = vrot.slane %v1882, 2
    %v1884 = vadd.f32 %v1882, %v1883
    %v1885 = vrot.slane %v1884, 1
    %v1886 = vadd.f32 %v1884, %v1885
    %v1887 = vrot.slane %v1864, 4
    %v1888 = vadd.f32 %v1864, %v1887
    %v1889 = vrot.slane %v1888, 2
    %v1890 = vadd.f32 %v1888, %v1889
    %v1891 = vrot.slane %v1890, 1
    %v1892 = vadd.f32 %v1890, %v1891
    %v1893 = vrot.slane %v1865, 4
    %v1894 = vadd.f32 %v1865, %v1893
    %v1895 = vrot.slane %v1894, 2
    %v1896 = vadd.f32 %v1894, %v1895
    %v1897 = vrot.slane %v1896, 1
    %v1898 = vadd.f32 %v1896, %v1897
    %v1899 = vrot.slane %v1866, 4
    %v1900 = vadd.f32 %v1866, %v1899
    %v1901 = vrot.slane %v1900, 2
    %v1902 = vadd.f32 %v1900, %v1901
    %v1903 = vrot.slane %v1902, 1
    %v1904 = vadd.f32 %v1902, %v1903
    %v1905 = vrot.slane %v1867, 4
    %v1906 = vadd.f32 %v1867, %v1905
    %v1907 = vrot.slane %v1906, 2
    %v1908 = vadd.f32 %v1906, %v1907
    %v1909 = vrot.slane %v1908, 1
    %v1910 = vadd.f32 %v1908, %v1909
    %v1911 = vrot.slane %v1868, 4
    %v1912 = vadd.f32 %v1868, %v1911
    %v1913 = vrot.slane %v1912, 2
    %v1914 = vadd.f32 %v1912, %v1913
    %v1915 = vrot.slane %v1914, 1
    %v1916 = vadd.f32 %v1914, %v1915
    %v1917 = vld [vmem:[%s1] sm:$0xff]
    %v1919 = vlaneseq
    %v1920 = vshrl.u32 %v1919, 7
    %v1921 = vsub.s32 0, %v1920
    %v1922 = vrot.slane %v1917, %v1921
    %v1923 = vlaneseq
    %v1924 = vshrl.u32 %v1923, 7
    %v1925 = vsub.s32 1, %v1924
    %v1926 = vrot.slane %v1917, %v1925
    %v1927 = vlaneseq
    %v1928 = vshrl.u32 %v1927, 7
    %v1929 = vsub.s32 2, %v1928
    %v1930 = vrot.slane %v1917, %v1929
    %v1931 = vlaneseq
    %v1932 = vshrl.u32 %v1931, 7
    %v1933 = vsub.s32 3, %v1932
    %v1934 = vrot.slane %v1917, %v1933
    %v1935 = vlaneseq
    %v1936 = vshrl.u32 %v1935, 7
    %v1937 = vsub.s32 4, %v1936
    %v1938 = vrot.slane %v1917, %v1937
    %v1939 = vlaneseq
    %v1940 = vshrl.u32 %v1939, 7
    %v1941 = vsub.s32 5, %v1940
    %v1942 = vrot.slane %v1917, %v1941
    %v1943 = vlaneseq
    %v1944 = vshrl.u32 %v1943, 7
    %v1945 = vsub.s32 6, %v1944
    %v1946 = vrot.slane %v1917, %v1945
    %v1947 = vlaneseq
    %v1948 = vshrl.u32 %v1947, 7
    %v1949 = vsub.s32 7, %v1948
    %v1950 = vrot.slane %v1917, %v1949
    %v1959 = vmul.f32 %v1874, %v1922
    %v1960 = vmul.f32 %v1880, %v1926
    %v1961 = vmul.f32 %v1886, %v1930
    %v1962 = vmul.f32 %v1892, %v1934
    %v1963 = vmul.f32 %v1898, %v1938
    %v1964 = vmul.f32 %v1904, %v1942
    %v1965 = vmul.f32 %v1910, %v1946
    %v1966 = vmul.f32 %v1916, %v1950
    %vm1967 = vcmask 1040384
    %v1968 = vsel %vm1967, %v1959, 0.0
    %v1969 = vsel %vm1967, %v1960, 0.0
    %v1970 = vadd.f32 %v1968, %v1969
    %v1971 = vsel %vm1967, %v1961, 0.0
    %v1972 = vadd.f32 %v1970, %v1971
    %v1973 = vsel %vm1967, %v1962, 0.0
    %v1974 = vadd.f32 %v1972, %v1973
    %v1975 = vsel %vm1967, %v1963, 0.0
    %v1976 = vadd.f32 %v1974, %v1975
    %v1977 = vsel %vm1967, %v1964, 0.0
    %v1978 = vadd.f32 %v1976, %v1977
    %v1979 = vsel %vm1967, %v1965, 0.0
    %v1980 = vadd.f32 %v1978, %v1979
    %v1981 = vsel %vm1967, %v1966, 0.0
    %v1982 = vadd.f32 %v1980, %v1981
    %1983 = vadd.xlane.f32.xlu0 %v1982
    %v1984 = vpop.xlane.xlu0 %1983
    %v1985 = vld [vmem:[#allocation2] sm:$0x1]
    %v1986 = vadd.f32 %v1984, %v1985
    %vm1987 = vcmask 0
    %1988 = vst.msk [vmem:[#allocation3] sm:$0x1] %vm1987, %v1986
    // Predicated region
    $region14: #{maxvit_attention_head.3} parent=1 // pred_check
      _
    $region15: #{maxvit_attention_head.3} parent=1 // pred_check_branch
      %1990 = sbr.rel (0) target = $region17
    $region16: #{maxvit_attention_head.3} parent=1 // pred_region
      %s1992 = ssub.s32 16, 16
      %1993 = vsyncadd [#allocation4], %s1992
      %s1995 = sshll.u32 [#allocation3], 4
      %s1996 = int_to_ptr.vmem [resolvable:$true] %s1995
      %1998 = dma.vmem_to_hbm [thread:$0]  %s1996, 16, %s3, [#allocation4]
    $region17: #{maxvit_attention_head.3} parent=1 // pred_fallthru
      _
    // Predicated region
    $region18: #{maxvit_attention_head.3} parent=1 // pred_check
      _
    $region19: #{maxvit_attention_head.3} parent=1 // pred_check_branch
      %2000 = sbr.rel (0) target = $region21
    $region20: #{maxvit_attention_head.3} parent=1 // pred_region
      %2001 = dma.done [#allocation4], 16
    $region21: #{maxvit_attention_head.3} parent=1 // pred_fallthru
      _
    %2002 = vsyncpa [#allocation4], 1

// kernel: maxvit_attention_head.2
$region0: #{maxvit_attention_head.2}
  #allocation0 [shape = 'u32[]', space=smem, size = 0x4, offset = 0x4, fixed_abs, tag = 'smem constant byte address 0x4 - core index']
  #allocation1 [shape = 'u32[144,128]{1,0:T(1,128)}', space=vmem, size = 0x12000, scoped, tag = 'internal scratch']
  %s0 = inlined_call_operand.vmem [shape: bf16[8,1000], index: 0, kind: input, shape index: {}]
  %s1 = inlined_call_operand.hbm [shape: bf16[3,1000,1024], index: 1, kind: input, shape index: {}]
  %s2 = inlined_call_operand.hbm [shape: f32[3,1,1024], index: 2, kind: input, shape index: {}]
  %s3 = inlined_call_operand.vmem [shape: f32[3,8,1024], index: 3, kind: output, shape index: {}]
  %s4 = sld [smem:[#allocation0]]
  $region53: #{maxvit_attention_head.2} parent=0
    _
  %s6 = ssub.s32 1, %s4
  %s7 = scalar_select 0, %s6, %s4
  $region1: #{maxvit_attention_head.2} parent=0
    #allocation2 [shape = 'u8[2048000]{0}', space=vmem, size = 0x1f4000, scoped, tag = 'input window, operand 1']
    #allocation3 [shape = 's32[2]{0}', space=sflag, size = 0x8, scoped, tag = 'scoped memory for maxvit_attention_head.2']
    #allocation4 [shape = 'u8[4096]{0}', space=vmem, size = 0x1000, scoped, tag = 'input window, operand 2']
    #allocation5 [shape = 's32[2]{0}', space=sflag, size = 0x8, scoped, tag = 'scoped memory for maxvit_attention_head.2']
    %8 = vsyncpa [#allocation3], 0
    %s9 = scalar_lea.sflag [#allocation3], 1
    %10 = vsyncpa %s9, 0
    %11 = vsyncpa [#allocation5], 0
    %s12 = scalar_lea.sflag [#allocation5], 1
    %13 = vsyncpa %s12, 0
    loop: start=0, step=1, limit=8
    $region2: #{maxvit_attention_head.2} parent=1 // loop_pre_header
      _
    $region3: #{maxvit_attention_head.2} parent=1 // loop_header
      %s15 = sphi 0, %s19
      %p16 = scmp.ge.s32.totalorder %s15, 8
      %s22 = sphi 0, %s34
      %s23 = sphi 0, %s30
      %s24 = sphi 0, %s22
      %s25 = sphi 0, %s23
      %s26 = sphi 0, %s24
      %s27 = sphi 0, %s25
      %s35 = sphi 0, %s35
      %s37 = sphi 0, %s35
      %s38 = sphi 0, %s37
      %s52 = sphi 0, %s38
      %s60 = sphi 0, %s62
      %s63 = sphi 0, %s60
      %s64 = sphi 0, %s63
      %s80 = sphi 0, %s64
      %s88 = sphi 0, %s90
      %s91 = sphi 0, %s88
      %s92 = sphi 0, %s91
      %s108 = sphi 0, %s92
      %s116 = sphi 0, %s118
      %s119 = sphi 0, %s116
      %s120 = sphi 0, %s119
      %s136 = sphi 0, %s120
    $region4: #{maxvit_attention_head.2} parent=1 // loop_header_branch
      %18 = sbr.rel (%p16) target = $region8
    $region5: #{maxvit_attention_head.2} parent=1 // loop_body
      %s20 = ssub.s32 %s15, 1
      %s21 = ssub.s32 %s15, 2
      %s28 = sadd.s32 1, %s23
      %p29 = scmp.ge.s32.totalorder %s28, 2
      %s30 = scalar_select %p29, 0, %s28
      %s31 = sadd.s32 1, %s22
      %s32 = scalar_select %p29, %s31, %s22
      %p33 = scmp.ge.s32.totalorder %s32, 3
      %s34 = scalar_select %p33, 0, %s32
      %s36 = sadd.s32 %s35, 1
      %p39 = scmp.eq.s32.totalorder %s15, 5
      %p40 = scmp.ne.s32.totalorder %s35, %s37
      %p41 = scmp.eq.s32.totalorder %s15, 0
      %p42 = por %p40, %p41
      %p43 = scmp.ne.s32.totalorder %s35, %s37
      %p44 = scmp.eq.s32.totalorder %s20, 5
      %p45 = por %p43, %p44
      %p46 = scmp.ne.s32.totalorder %s37, %s38
      %p47 = scmp.eq.s32.totalorder %s20, 0
      %p48 = por %p46, %p47
      %p49 = scmp.ne.s32.totalorder %s37, %s38
      %p50 = scmp.eq.s32.totalorder %s21, 5
      %p51 = por %p49, %p50
      %p53 = scmp.ne.s32.totalorder %s38, %s52
      %p54 = scmp.eq.s32.totalorder %s21, 0
      %p55 = por %p53, %p54
      %s56 = ssub.s32 %s22, %s34
      %s57 = ssub.s32 %s23, %s30
      %s58 = sor.u32 %s56, %s57
      %p59 = scmp.eq.s32.totalorder %s58, 0
      %s61 = sadd.s32 %s60, 1
      %s62 = scalar_select %p59, %s60, %s61
      %p65 = pneg %p59
      %p66 = scmp.eq.s32.totalorder %s15, 5
      %p67 = por %p65, %p66
      %p68 = scmp.ne.s32.totalorder %s60, %s63
      %p69 = scmp.eq.s32.totalorder %s15, 0
      %p70 = por %p68, %p69
      %p71 = scmp.ne.s32.totalorder %s60, %s63
      %p72 = scmp.eq.s32.totalorder %s20, 5
      %p73 = por %p71, %p72
      %p74 = scmp.ne.s32.totalorder %s63, %s64
      %p75 = scmp.eq.s32.totalorder %s20, 0
      %p76 = por %p74, %p75
      %p77 = scmp.ne.s32.totalorder %s63, %s64
      %p78 = scmp.eq.s32.totalorder %s21, 5
      %p79 = por %p77, %p78
      %p81 = scmp.ne.s32.totalorder %s64, %s80
      %p82 = scmp.eq.s32.totalorder %s21, 0
      %p83 = por %p81, %p82
      %s84 = ssub.s32 %s22, %s34
      %s85 = ssub.s32 %s23, %s30
      %s86 = sor.u32 %s84, %s85
      %p87 = scmp.eq.s32.totalorder %s86, 0
      %s89 = sadd.s32 %s88, 1
      %s90 = scalar_select %p87, %s88, %s89
      %p93 = pneg %p87
      %p94 = scmp.eq.s32.totalorder %s15, 5
      %p95 = por %p93, %p94
      %p96 = scmp.ne.s32.totalorder %s88, %s91
      %p97 = scmp.eq.s32.totalorder %s15, 0
      %p98 = por %p96, %p97
      %p99 = scmp.ne.s32.totalorder %s88, %s91
      %p100 = scmp.eq.s32.totalorder %s20, 5
      %p101 = por %p99, %p100
      %p102 = scmp.ne.s32.totalorder %s91, %s92
      %p103 = scmp.eq.s32.totalorder %s20, 0
      %p104 = por %p102, %p103
      %p105 = scmp.ne.s32.totalorder %s91, %s92
      %p106 = scmp.eq.s32.totalorder %s21, 5
      %p107 = por %p105, %p106
      %p109 = scmp.ne.s32.totalorder %s92, %s108
      %p110 = scmp.eq.s32.totalorder %s21, 0
      %p111 = por %p109, %p110
      %s112 = ssub.s32 %s22, %s34
      %s113 = ssub.s32 %s23, %s30
      %s114 = sor.u32 %s112, %s113
      %p115 = scmp.eq.s32.totalorder %s114, 0
      %s117 = sadd.s32 %s116, 1
      %s118 = scalar_select %p115, %s116, %s117
      %p121 = pneg %p115
      %p122 = scmp.eq.s32.totalorder %s15, 5
      %p123 = por %p121, %p122
      %p124 = scmp.ne.s32.totalorder %s116, %s119
      %p125 = scmp.eq.s32.totalorder %s15, 0
      %p126 = por %p124, %p125
      %p127 = scmp.ne.s32.totalorder %s116, %s119
      %p128 = scmp.eq.s32.totalorder %s20, 5
      %p129 = por %p127, %p128
      %p130 = scmp.ne.s32.totalorder %s119, %s120
      %p131 = scmp.eq.s32.totalorder %s20, 0
      %p132 = por %p130, %p131
      %p133 = scmp.ne.s32.totalorder %s119, %s120
      %p134 = scmp.eq.s32.totalorder %s21, 5
      %p135 = por %p133, %p134
      %p137 = scmp.ne.s32.totalorder %s120, %s136
      %p138 = scmp.eq.s32.totalorder %s21, 0
      %p139 = por %p137, %p138
      %p140 = scmp.le.s32.totalorder 1, %s15
      %p141 = scmp.lt.s32.totalorder %s15, 7
      %p142 = pnand %p140, %p141
      %p143 = pneg %p142
      // Predicated region
      $region9: #{maxvit_attention_head.2} parent=5 // pred_check
        _
      $region10: #{maxvit_attention_head.2} parent=5 // pred_check_branch
        %145 = sbr.rel (%p142) target = $region12
      $region11: #{maxvit_attention_head.2} parent=5 // pred_region
        %s146 = ssub.s32 %s15, 1
        // Predicated region
        $region13: #{maxvit_attention_head.2} parent=11 // pred_check
          %p147 = pneg %p48
        $region14: #{maxvit_attention_head.2} parent=11 // pred_check_branch
          %149 = sbr.rel (%p147) target = $region16
        $region15: #{maxvit_attention_head.2} parent=11 // pred_region
          _
        $region16: #{maxvit_attention_head.2} parent=11 // pred_fallthru
          _
      $region12: #{maxvit_attention_head.2} parent=5 // pred_fallthru
        _
      %p150 = scmp.lt.s32.totalorder %s15, 6
      // Predicated region
      $region17: #{maxvit_attention_head.2} parent=5 // pred_check
        %p151 = pneg %p150
      $region18: #{maxvit_attention_head.2} parent=5 // pred_check_branch
        %153 = sbr.rel (%p151) target = $region20
      $region19: #{maxvit_attention_head.2} parent=5 // pred_region
        // Predicated region
        $region21: #{maxvit_attention_head.2} parent=19 // pred_check
          %p154 = pneg %p70
        $region22: #{maxvit_attention_head.2} parent=19 // pred_check_branch
          %156 = sbr.rel (%p154) target = $region24
        $region23: #{maxvit_attention_head.2} parent=19 // pred_region
          %s157 = sand.u32 %s60, 1
          %s158 = scalar_lea.sflag [#allocation3], %s157
          %s159 = sand.u32 %s60, 1
          %s160 = smul.addr %s159, 2000
          %s161 = scalar_lea.vmem [#allocation2], %s160
          %s162 = smul.u32 4, %s23
          %s164 = ssub.s32 32000, 32000
          %165 = vsyncadd %s158, %s164
          %s166 = smul.addr %s22, 1000
          %s167 = sadd.s32 %s162, %s166
          %s168 = smul.addr %s167, 64
          %s169 = scalar_lea.hbm %s1, %s168
          %s170 = sshll.u32 %s161, 4
          %s171 = int_to_ptr.vmem [resolvable:$true] %s170
          %176 = dma.hbm_to_vmem [thread:$0]  %s169, 32000, %s171, %s158, 512, 256, 16
        $region24: #{maxvit_attention_head.2} parent=19 // pred_fallthru
          _
        // Predicated region
        $region25: #{maxvit_attention_head.2} parent=19 // pred_check
          %p177 = pneg %p98
        $region26: #{maxvit_attention_head.2} parent=19 // pred_check_branch
          %179 = sbr.rel (%p177) target = $region28
        $region27: #{maxvit_attention_head.2} parent=19 // pred_region
          %s180 = sand.u32 %s88, 1
          %s181 = scalar_lea.sflag [#allocation5], %s180
          %s182 = sand.u32 %s88, 1
          %s183 = smul.addr %s182, 4
          %s184 = scalar_lea.vmem [#allocation4], %s183
          %s185 = smul.u32 4, %s23
          %s187 = ssub.s32 64, 64
          %188 = vsyncadd %s181, %s187
          %s189 = smul.addr %s22, 8
          %s190 = sadd.s32 %s185, %s189
          %s191 = smul.addr %s190, 16
          %s192 = scalar_lea.hbm %s2, %s191
          %s194 = sshll.u32 %s184, 4
          %s195 = int_to_ptr.vmem [resolvable:$true] %s194
          %197 = dma.hbm_to_vmem [thread:$0]  %s192, 64, %s195, %s181
        $region28: #{maxvit_attention_head.2} parent=19 // pred_fallthru
          _
      $region20: #{maxvit_attention_head.2} parent=5 // pred_fallthru
        _
      %p198 = scmp.le.s32.totalorder 1, %s15
      %p199 = scmp.lt.s32.totalorder %s15, 7
      %p200 = pnand %p198, %p199
      %p201 = pneg %p200
      // Predicated region
      $region29: #{maxvit_attention_head.2} parent=5 // pred_check
        _
      $region30: #{maxvit_attention_head.2} parent=5 // pred_check_branch
        %203 = sbr.rel (%p200) target = $region32
      $region31: #{maxvit_attention_head.2} parent=5 // pred_region
        %s204 = ssub.s32 %s15, 1
        %s205 = sand.u32 %s63, 1
        %s206 = scalar_lea.sflag [#allocation3], %s205
        %s207 = sand.u32 %s63, 1
        %s208 = smul.addr %s207, 2000
        %s209 = scalar_lea.vmem [#allocation2], %s208
        // Predicated region
        $region33: #{maxvit_attention_head.2} parent=31 // pred_check
          %p210 = pneg %p76
        $region34: #{maxvit_attention_head.2} parent=31 // pred_check_branch
          %212 = sbr.rel (%p210) target = $region36
        $region35: #{maxvit_attention_head.2} parent=31 // pred_region
          %213 = dma.done %s206, 32000
        $region36: #{maxvit_attention_head.2} parent=31 // pred_fallthru
          _
        %s214 = sand.u32 %s91, 1
        %s215 = scalar_lea.sflag [#allocation5], %s214
        %s216 = sand.u32 %s91, 1
        %s217 = smul.addr %s216, 4
        %s218 = scalar_lea.vmem [#allocation4], %s217
        // Predicated region
        $region37: #{maxvit_attention_head.2} parent=31 // pred_check
          %p219 = pneg %p104
        $region38: #{maxvit_attention_head.2} parent=31 // pred_check_branch
          %221 = sbr.rel (%p219) target = $region40
        $region39: #{maxvit_attention_head.2} parent=31 // pred_region
          %222 = dma.done %s215, 64
        $region40: #{maxvit_attention_head.2} parent=31 // pred_fallthru
          _
        %p223 = pneg %p48
        %p224 = pneg %p45
        %s225 = sand.u32 %s63, 1
        %s226 = scalar_lea.sflag [#allocation3], %s225
        %s227 = sand.u32 %s63, 1
        %s228 = smul.addr %s227, 2000
        %s229 = scalar_lea.vmem [#allocation2], %s228
        %p230 = pneg %p76
        %p231 = pneg %p73
        %s232 = sand.u32 %s91, 1
        %s233 = scalar_lea.sflag [#allocation5], %s232
        %s234 = sand.u32 %s91, 1
        %s235 = smul.addr %s234, 4
        %s236 = scalar_lea.vmem [#allocation4], %s235
        %p237 = pneg %p104
        %p238 = pneg %p101
        %p239 = pneg %p132
        %p240 = pneg %p129
        %s241 = smul.u32 4, %s25
        %p242 = scmp.lt.s32.totalorder %s24, 2
        %s243 = scalar_select %p242, %s24, 2
        %p244 = scmp.lt.s32.totalorder %s241, 7
        %s245 = scalar_select %p244, %s241, 7
        %s246 = smul.addr %s243, 8
        %s247 = sadd.s32 %s245, %s246
        %s248 = smul.addr %s247, 8
        %s249 = scalar_lea.vmem %s3, %s248
        %s250 = smul.u32 4, %s25
        %s251 = smul.u32 4, %s25
        %s252 = smul.u32 4, %s25
        %p253 = scmp.lt.s32.totalorder %s24, 2
        %s254 = scalar_select %p253, %s24, 2
        %p255 = scmp.lt.s32.totalorder %s252, 7
        %s256 = scalar_select %p255, %s252, 7
        %s257 = smul.addr %s254, 8
        %s258 = sadd.s32 %s256, %s257
        %s259 = smul.addr %s258, 8
        %s260 = scalar_lea.vmem %s3, %s259
        %s261 = smul.u32 4, %s25
        %v263 = vld [vmem:[%s0] sm:$0xff]
        %v264 = vld [vmem:[%s0 + $0x8] sm:$0xff]
        %v265 = vld [vmem:[%s0 + $0x10] sm:$0xff]
        %v266 = vld [vmem:[%s0 + $0x18] sm:$0xff]
        %v267 = vld [vmem:[%s209] sm:$0xff]
        %v268 = vld [vmem:[%s209 + $0x8] sm:$0xff]
        %v269 = vld [vmem:[%s209 + $0x10] sm:$0xff]
        %v270 = vld [vmem:[%s209 + $0x18] sm:$0xff]
        %v271 = vld [vmem:[%s209 + $0x20] sm:$0xff]
        %v272 = vld [vmem:[%s209 + $0x28] sm:$0xff]
        %v273 = vld [vmem:[%s209 + $0x30] sm:$0xff]
        %v274 = vld [vmem:[%s209 + $0x38] sm:$0xff]
        %v275 = vld [vmem:[%s209 + $0x40] sm:$0xff]
        %v276 = vld [vmem:[%s209 + $0x48] sm:$0xff]
        %v277 = vld [vmem:[%s209 + $0x50] sm:$0xff]
        %v278 = vld [vmem:[%s209 + $0x58] sm:$0xff]
        %v279 = vld [vmem:[%s209 + $0x60] sm:$0xff]
        %v280 = vld [vmem:[%s209 + $0x68] sm:$0xff]
        %v281 = vld [vmem:[%s209 + $0x70] sm:$0xff]
        %v282 = vld [vmem:[%s209 + $0x78] sm:$0xff]
        %v283 = vld [vmem:[%s209 + $0x80] sm:$0xff]
        %v284 = vld [vmem:[%s209 + $0x88] sm:$0xff]
        %v285 = vld [vmem:[%s209 + $0x90] sm:$0xff]
        %v286 = vld [vmem:[%s209 + $0x98] sm:$0xff]
        %v287 = vld [vmem:[%s209 + $0xa0] sm:$0xff]
        %v288 = vld [vmem:[%s209 + $0xa8] sm:$0xff]
        %v289 = vld [vmem:[%s209 + $0xb0] sm:$0xff]
        %v290 = vld [vmem:[%s209 + $0xb8] sm:$0xff]
        %v291 = vld [vmem:[%s209 + $0xc0] sm:$0xff]
        %v292 = vld [vmem:[%s209 + $0xc8] sm:$0xff]
        %v293 = vld [vmem:[%s209 + $0xd0] sm:$0xff]
        %v294 = vld [vmem:[%s209 + $0xd8] sm:$0xff]
        %v295 = vld [vmem:[%s209 + $0xe0] sm:$0xff]
        %v296 = vld [vmem:[%s209 + $0xe8] sm:$0xff]
        %v297 = vld [vmem:[%s209 + $0xf0] sm:$0xff]
        %v298 = vld [vmem:[%s209 + $0xf8] sm:$0xff]
        %v299 = vld [vmem:[%s209 + $0x100] sm:$0xff]
        %v300 = vld [vmem:[%s209 + $0x108] sm:$0xff]
        %v301 = vld [vmem:[%s209 + $0x110] sm:$0xff]
        %v302 = vld [vmem:[%s209 + $0x118] sm:$0xff]
        %v303 = vld [vmem:[%s209 + $0x120] sm:$0xff]
        %v304 = vld [vmem:[%s209 + $0x128] sm:$0xff]
        %v305 = vld [vmem:[%s209 + $0x130] sm:$0xff]
        %v306 = vld [vmem:[%s209 + $0x138] sm:$0xff]
        %v307 = vld [vmem:[%s209 + $0x140] sm:$0xff]
        %v308 = vld [vmem:[%s209 + $0x148] sm:$0xff]
        %v309 = vld [vmem:[%s209 + $0x150] sm:$0xff]
        %v310 = vld [vmem:[%s209 + $0x158] sm:$0xff]
        %v311 = vld [vmem:[%s209 + $0x160] sm:$0xff]
        %v312 = vld [vmem:[%s209 + $0x168] sm:$0xff]
        %v313 = vld [vmem:[%s209 + $0x170] sm:$0xff]
        %v314 = vld [vmem:[%s209 + $0x178] sm:$0xff]
        %v315 = vld [vmem:[%s209 + $0x180] sm:$0xff]
        %v316 = vld [vmem:[%s209 + $0x188] sm:$0xff]
        %v317 = vld [vmem:[%s209 + $0x190] sm:$0xff]
        %v318 = vld [vmem:[%s209 + $0x198] sm:$0xff]
        %v319 = vld [vmem:[%s209 + $0x1a0] sm:$0xff]
        %v320 = vld [vmem:[%s209 + $0x1a8] sm:$0xff]
        %v321 = vld [vmem:[%s209 + $0x1b0] sm:$0xff]
        %v322 = vld [vmem:[%s209 + $0x1b8] sm:$0xff]
        %v323 = vld [vmem:[%s209 + $0x1c0] sm:$0xff]
        %v324 = vld [vmem:[%s209 + $0x1c8] sm:$0xff]
        %v325 = vld [vmem:[%s209 + $0x1d0] sm:$0xff]
        %v326 = vld [vmem:[%s209 + $0x1d8] sm:$0xff]
        %v327 = vld [vmem:[%s209 + $0x1e0] sm:$0xff]
        %v328 = vld [vmem:[%s209 + $0x1e8] sm:$0xff]
        %v329 = vld [vmem:[%s209 + $0x1f0] sm:$0xff]
        %v330 = vld [vmem:[%s209 + $0x1f8] sm:$0xff]
        %v331 = vld [vmem:[%s209 + $0x200] sm:$0xff]
        %v332 = vld [vmem:[%s209 + $0x208] sm:$0xff]
        %v333 = vld [vmem:[%s209 + $0x210] sm:$0xff]
        %v334 = vld [vmem:[%s209 + $0x218] sm:$0xff]
        %v335 = vld [vmem:[%s209 + $0x220] sm:$0xff]
        %v336 = vld [vmem:[%s209 + $0x228] sm:$0xff]
        %v337 = vld [vmem:[%s209 + $0x230] sm:$0xff]
        %v338 = vld [vmem:[%s209 + $0x238] sm:$0xff]
        %v339 = vld [vmem:[%s209 + $0x240] sm:$0xff]
        %v340 = vld [vmem:[%s209 + $0x248] sm:$0xff]
        %v341 = vld [vmem:[%s209 + $0x250] sm:$0xff]
        %v342 = vld [vmem:[%s209 + $0x258] sm:$0xff]
        %v343 = vld [vmem:[%s209 + $0x260] sm:$0xff]
        %v344 = vld [vmem:[%s209 + $0x268] sm:$0xff]
        %v345 = vld [vmem:[%s209 + $0x270] sm:$0xff]
        %v346 = vld [vmem:[%s209 + $0x278] sm:$0xff]
        %v347 = vld [vmem:[%s209 + $0x280] sm:$0xff]
        %v348 = vld [vmem:[%s209 + $0x288] sm:$0xff]
        %v349 = vld [vmem:[%s209 + $0x290] sm:$0xff]
        %v350 = vld [vmem:[%s209 + $0x298] sm:$0xff]
        %v351 = vld [vmem:[%s209 + $0x2a0] sm:$0xff]
        %v352 = vld [vmem:[%s209 + $0x2a8] sm:$0xff]
        %v353 = vld [vmem:[%s209 + $0x2b0] sm:$0xff]
        %v354 = vld [vmem:[%s209 + $0x2b8] sm:$0xff]
        %v355 = vld [vmem:[%s209 + $0x2c0] sm:$0xff]
        %v356 = vld [vmem:[%s209 + $0x2c8] sm:$0xff]
        %v357 = vld [vmem:[%s209 + $0x2d0] sm:$0xff]
        %v358 = vld [vmem:[%s209 + $0x2d8] sm:$0xff]
        %v359 = vld [vmem:[%s209 + $0x2e0] sm:$0xff]
        %v360 = vld [vmem:[%s209 + $0x2e8] sm:$0xff]
        %v361 = vld [vmem:[%s209 + $0x2f0] sm:$0xff]
        %v362 = vld [vmem:[%s209 + $0x2f8] sm:$0xff]
        %v363 = vld [vmem:[%s209 + $0x300] sm:$0xff]
        %v364 = vld [vmem:[%s209 + $0x308] sm:$0xff]
        %v365 = vld [vmem:[%s209 + $0x310] sm:$0xff]
        %v366 = vld [vmem:[%s209 + $0x318] sm:$0xff]
        %v367 = vld [vmem:[%s209 + $0x320] sm:$0xff]
        %v368 = vld [vmem:[%s209 + $0x328] sm:$0xff]
        %v369 = vld [vmem:[%s209 + $0x330] sm:$0xff]
        %v370 = vld [vmem:[%s209 + $0x338] sm:$0xff]
        %v371 = vld [vmem:[%s209 + $0x340] sm:$0xff]
        %v372 = vld [vmem:[%s209 + $0x348] sm:$0xff]
        %v373 = vld [vmem:[%s209 + $0x350] sm:$0xff]
        %v374 = vld [vmem:[%s209 + $0x358] sm:$0xff]
        %v375 = vld [vmem:[%s209 + $0x360] sm:$0xff]
        %v376 = vld [vmem:[%s209 + $0x368] sm:$0xff]
        %v377 = vld [vmem:[%s209 + $0x370] sm:$0xff]
        %v378 = vld [vmem:[%s209 + $0x378] sm:$0xff]
        %v379 = vld [vmem:[%s209 + $0x380] sm:$0xff]
        %v380 = vld [vmem:[%s209 + $0x388] sm:$0xff]
        %v381 = vld [vmem:[%s209 + $0x390] sm:$0xff]
        %v382 = vld [vmem:[%s209 + $0x398] sm:$0xff]
        %v383 = vld [vmem:[%s209 + $0x3a0] sm:$0xff]
        %v384 = vld [vmem:[%s209 + $0x3a8] sm:$0xff]
        %v385 = vld [vmem:[%s209 + $0x3b0] sm:$0xff]
        %v386 = vld [vmem:[%s209 + $0x3b8] sm:$0xff]
        %v387 = vld [vmem:[%s209 + $0x3c0] sm:$0xff]
        %v388 = vld [vmem:[%s209 + $0x3c8] sm:$0xff]
        %v389 = vld [vmem:[%s209 + $0x3d0] sm:$0xff]
        %v390 = vld [vmem:[%s209 + $0x3d8] sm:$0xff]
        %v391 = vld [vmem:[%s209 + $0x3e0] sm:$0xff]
        %v392 = vld [vmem:[%s209 + $0x3e8] sm:$0xff]
        %v393 = vld [vmem:[%s209 + $0x3f0] sm:$0xff]
        %v394 = vld [vmem:[%s209 + $0x3f8] sm:$0xff]
        %v395 = vld [vmem:[%s209 + $0x400] sm:$0xff]
        %v396 = vld [vmem:[%s209 + $0x408] sm:$0xff]
        %v397 = vld [vmem:[%s209 + $0x410] sm:$0xff]
        %v398 = vld [vmem:[%s209 + $0x418] sm:$0xff]
        %v399 = vld [vmem:[%s209 + $0x420] sm:$0xff]
        %v400 = vld [vmem:[%s209 + $0x428] sm:$0xff]
        %v401 = vld [vmem:[%s209 + $0x430] sm:$0xff]
        %v402 = vld [vmem:[%s209 + $0x438] sm:$0xff]
        %v403 = vld [vmem:[%s209 + $0x440] sm:$0xff]
        %v404 = vld [vmem:[%s209 + $0x448] sm:$0xff]
        %v405 = vld [vmem:[%s209 + $0x450] sm:$0xff]
        %v406 = vld [vmem:[%s209 + $0x458] sm:$0xff]
        %v407 = vld [vmem:[%s209 + $0x460] sm:$0xff]
        %v408 = vld [vmem:[%s209 + $0x468] sm:$0xff]
        %v409 = vld [vmem:[%s209 + $0x470] sm:$0xff]
        %v410 = vld [vmem:[%s209 + $0x478] sm:$0xff]
        %v411 = vld [vmem:[%s209 + $0x480] sm:$0xff]
        %v412 = vld [vmem:[%s209 + $0x488] sm:$0xff]
        %v413 = vld [vmem:[%s209 + $0x490] sm:$0xff]
        %v414 = vld [vmem:[%s209 + $0x498] sm:$0xff]
        %v415 = vld [vmem:[%s209 + $0x4a0] sm:$0xff]
        %v416 = vld [vmem:[%s209 + $0x4a8] sm:$0xff]
        %v417 = vld [vmem:[%s209 + $0x4b0] sm:$0xff]
        %v418 = vld [vmem:[%s209 + $0x4b8] sm:$0xff]
        %v419 = vld [vmem:[%s209 + $0x4c0] sm:$0xff]
        %v420 = vld [vmem:[%s209 + $0x4c8] sm:$0xff]
        %v421 = vld [vmem:[%s209 + $0x4d0] sm:$0xff]
        %v422 = vld [vmem:[%s209 + $0x4d8] sm:$0xff]
        %v423 = vld [vmem:[%s209 + $0x4e0] sm:$0xff]
        %v424 = vld [vmem:[%s209 + $0x4e8] sm:$0xff]
        %v425 = vld [vmem:[%s209 + $0x4f0] sm:$0xff]
        %v426 = vld [vmem:[%s209 + $0x4f8] sm:$0xff]
        %v427 = vld [vmem:[%s209 + $0x500] sm:$0xff]
        %v428 = vld [vmem:[%s209 + $0x508] sm:$0xff]
        %v429 = vld [vmem:[%s209 + $0x510] sm:$0xff]
        %v430 = vld [vmem:[%s209 + $0x518] sm:$0xff]
        %v431 = vld [vmem:[%s209 + $0x520] sm:$0xff]
        %v432 = vld [vmem:[%s209 + $0x528] sm:$0xff]
        %v433 = vld [vmem:[%s209 + $0x530] sm:$0xff]
        %v434 = vld [vmem:[%s209 + $0x538] sm:$0xff]
        %v435 = vld [vmem:[%s209 + $0x540] sm:$0xff]
        %v436 = vld [vmem:[%s209 + $0x548] sm:$0xff]
        %v437 = vld [vmem:[%s209 + $0x550] sm:$0xff]
        %v438 = vld [vmem:[%s209 + $0x558] sm:$0xff]
        %v439 = vld [vmem:[%s209 + $0x560] sm:$0xff]
        %v440 = vld [vmem:[%s209 + $0x568] sm:$0xff]
        %v441 = vld [vmem:[%s209 + $0x570] sm:$0xff]
        %v442 = vld [vmem:[%s209 + $0x578] sm:$0xff]
        %v443 = vld [vmem:[%s209 + $0x580] sm:$0xff]
        %v444 = vld [vmem:[%s209 + $0x588] sm:$0xff]
        %v445 = vld [vmem:[%s209 + $0x590] sm:$0xff]
        %v446 = vld [vmem:[%s209 + $0x598] sm:$0xff]
        %v447 = vld [vmem:[%s209 + $0x5a0] sm:$0xff]
        %v448 = vld [vmem:[%s209 + $0x5a8] sm:$0xff]
        %v449 = vld [vmem:[%s209 + $0x5b0] sm:$0xff]
        %v450 = vld [vmem:[%s209 + $0x5b8] sm:$0xff]
        %v451 = vld [vmem:[%s209 + $0x5c0] sm:$0xff]
        %v452 = vld [vmem:[%s209 + $0x5c8] sm:$0xff]
        %v453 = vld [vmem:[%s209 + $0x5d0] sm:$0xff]
        %v454 = vld [vmem:[%s209 + $0x5d8] sm:$0xff]
        %v455 = vld [vmem:[%s209 + $0x5e0] sm:$0xff]
        %v456 = vld [vmem:[%s209 + $0x5e8] sm:$0xff]
        %v457 = vld [vmem:[%s209 + $0x5f0] sm:$0xff]
        %v458 = vld [vmem:[%s209 + $0x5f8] sm:$0xff]
        %v459 = vld [vmem:[%s209 + $0x600] sm:$0xff]
        %v460 = vld [vmem:[%s209 + $0x608] sm:$0xff]
        %v461 = vld [vmem:[%s209 + $0x610] sm:$0xff]
        %v462 = vld [vmem:[%s209 + $0x618] sm:$0xff]
        %v463 = vld [vmem:[%s209 + $0x620] sm:$0xff]
        %v464 = vld [vmem:[%s209 + $0x628] sm:$0xff]
        %v465 = vld [vmem:[%s209 + $0x630] sm:$0xff]
        %v466 = vld [vmem:[%s209 + $0x638] sm:$0xff]
        %v467 = vld [vmem:[%s209 + $0x640] sm:$0xff]
        %v468 = vld [vmem:[%s209 + $0x648] sm:$0xff]
        %v469 = vld [vmem:[%s209 + $0x650] sm:$0xff]
        %v470 = vld [vmem:[%s209 + $0x658] sm:$0xff]
        %v471 = vld [vmem:[%s209 + $0x660] sm:$0xff]
        %v472 = vld [vmem:[%s209 + $0x668] sm:$0xff]
        %v473 = vld [vmem:[%s209 + $0x670] sm:$0xff]
        %v474 = vld [vmem:[%s209 + $0x678] sm:$0xff]
        %v475 = vld [vmem:[%s209 + $0x680] sm:$0xff]
        %v476 = vld [vmem:[%s209 + $0x688] sm:$0xff]
        %v477 = vld [vmem:[%s209 + $0x690] sm:$0xff]
        %v478 = vld [vmem:[%s209 + $0x698] sm:$0xff]
        %v479 = vld [vmem:[%s209 + $0x6a0] sm:$0xff]
        %v480 = vld [vmem:[%s209 + $0x6a8] sm:$0xff]
        %v481 = vld [vmem:[%s209 + $0x6b0] sm:$0xff]
        %v482 = vld [vmem:[%s209 + $0x6b8] sm:$0xff]
        %v483 = vld [vmem:[%s209 + $0x6c0] sm:$0xff]
        %v484 = vld [vmem:[%s209 + $0x6c8] sm:$0xff]
        %v485 = vld [vmem:[%s209 + $0x6d0] sm:$0xff]
        %v486 = vld [vmem:[%s209 + $0x6d8] sm:$0xff]
        %v487 = vld [vmem:[%s209 + $0x6e0] sm:$0xff]
        %v488 = vld [vmem:[%s209 + $0x6e8] sm:$0xff]
        %v489 = vld [vmem:[%s209 + $0x6f0] sm:$0xff]
        %v490 = vld [vmem:[%s209 + $0x6f8] sm:$0xff]
        %v491 = vld [vmem:[%s209 + $0x700] sm:$0xff]
        %v492 = vld [vmem:[%s209 + $0x708] sm:$0xff]
        %v493 = vld [vmem:[%s209 + $0x710] sm:$0xff]
        %v494 = vld [vmem:[%s209 + $0x718] sm:$0xff]
        %v495 = vld [vmem:[%s209 + $0x720] sm:$0xff]
        %v496 = vld [vmem:[%s209 + $0x728] sm:$0xff]
        %v497 = vld [vmem:[%s209 + $0x730] sm:$0xff]
        %v498 = vld [vmem:[%s209 + $0x738] sm:$0xff]
        %v499 = vld [vmem:[%s209 + $0x740] sm:$0xff]
        %v500 = vld [vmem:[%s209 + $0x748] sm:$0xff]
        %v501 = vld [vmem:[%s209 + $0x750] sm:$0xff]
        %v502 = vld [vmem:[%s209 + $0x758] sm:$0xff]
        %v503 = vld [vmem:[%s209 + $0x760] sm:$0xff]
        %v504 = vld [vmem:[%s209 + $0x768] sm:$0xff]
        %v505 = vld [vmem:[%s209 + $0x770] sm:$0xff]
        %v506 = vld [vmem:[%s209 + $0x778] sm:$0xff]
        %v507 = vld [vmem:[%s209 + $0x780] sm:$0xff]
        %v508 = vld [vmem:[%s209 + $0x788] sm:$0xff]
        %v509 = vld [vmem:[%s209 + $0x790] sm:$0xff]
        %v510 = vld [vmem:[%s209 + $0x798] sm:$0xff]
        %v511 = vld [vmem:[%s209 + $0x7a0] sm:$0xff]
        %v512 = vld [vmem:[%s209 + $0x7a8] sm:$0xff]
        %v513 = vld [vmem:[%s209 + $0x7b0] sm:$0xff]
        %v514 = vld [vmem:[%s209 + $0x7b8] sm:$0xff]
        %v515 = vld [vmem:[%s209 + $0x7c0] sm:$0xff]
        %v516 = vld [vmem:[%s209 + $0x7c8] sm:$0xff]
        %v517 = vld [vmem:[%s218] sm:$0xf]
        %v519 = vlaneseq
        %v520 = vshrl.u32 %v519, 7
        %v521 = vsub.s32 0, %v520
        %v522 = vrot.slane %v517, %v521
        %v523 = vlaneseq
        %v524 = vshrl.u32 %v523, 7
        %v525 = vsub.s32 1, %v524
        %v526 = vrot.slane %v517, %v525
        %v527 = vlaneseq
        %v528 = vshrl.u32 %v527, 7
        %v529 = vsub.s32 2, %v528
        %v530 = vrot.slane %v517, %v529
        %v531 = vlaneseq
        %v532 = vshrl.u32 %v531, 7
        %v533 = vsub.s32 3, %v532
        %v534 = vrot.slane %v517, %v533
        %v543 = vunpack.c.l.b16 %v263
        %v544 = vunpack.c.h.b16 %v263
        %v545 = vunpack.c.l.b16 %v264
        %v546 = vunpack.c.h.b16 %v264
        %v547 = vunpack.c.l.b16 %v265
        %v548 = vunpack.c.h.b16 %v265
        %v549 = vunpack.c.l.b16 %v266
        %v550 = vunpack.c.h.b16 %v266
        %v551 = vpack.c.b16 %v543, %v543
        %v552 = vpack.c.b16 %v544, %v544
        %v553 = vpack.c.b16 %v545, %v545
        %v554 = vpack.c.b16 %v546, %v546
        %v555 = vpack.c.b16 %v547, %v547
        %v556 = vpack.c.b16 %v548, %v548
        %v557 = vpack.c.b16 %v549, %v549
        %v558 = vpack.c.b16 %v550, %v550
        %v816 = vunpack.c.l.b16 %v267
        %v817 = vunpack.c.h.b16 %v267
        %v818 = vunpack.c.l.b16 %v268
        %v819 = vunpack.c.h.b16 %v268
        %v820 = vunpack.c.l.b16 %v269
        %v821 = vunpack.c.h.b16 %v269
        %v822 = vunpack.c.l.b16 %v270
        %v823 = vunpack.c.h.b16 %v270
        %v824 = vunpack.c.l.b16 %v271
        %v825 = vunpack.c.h.b16 %v271
        %v826 = vunpack.c.l.b16 %v272
        %v827 = vunpack.c.h.b16 %v272
        %v828 = vunpack.c.l.b16 %v273
        %v829 = vunpack.c.h.b16 %v273
        %v830 = vunpack.c.l.b16 %v274
        %v831 = vunpack.c.h.b16 %v274
        %v832 = vunpack.c.l.b16 %v275
        %v833 = vunpack.c.h.b16 %v275
        %v834 = vunpack.c.l.b16 %v276
        %v835 = vunpack.c.h.b16 %v276
        %v836 = vunpack.c.l.b16 %v277
        %v837 = vunpack.c.h.b16 %v277
        %v838 = vunpack.c.l.b16 %v278
        %v839 = vunpack.c.h.b16 %v278
        %v840 = vunpack.c.l.b16 %v279
        %v841 = vunpack.c.h.b16 %v279
        %v842 = vunpack.c.l.b16 %v280
        %v843 = vunpack.c.h.b16 %v280
        %v844 = vunpack.c.l.b16 %v281
        %v845 = vunpack.c.h.b16 %v281
        %v846 = vunpack.c.l.b16 %v282
        %v847 = vunpack.c.h.b16 %v282
        %v848 = vunpack.c.l.b16 %v283
        %v849 = vunpack.c.h.b16 %v283
        %v850 = vunpack.c.l.b16 %v284
        %v851 = vunpack.c.h.b16 %v284
        %v852 = vunpack.c.l.b16 %v285
        %v853 = vunpack.c.h.b16 %v285
        %v854 = vunpack.c.l.b16 %v286
        %v855 = vunpack.c.h.b16 %v286
        %v856 = vunpack.c.l.b16 %v287
        %v857 = vunpack.c.h.b16 %v287
        %v858 = vunpack.c.l.b16 %v288
        %v859 = vunpack.c.h.b16 %v288
        %v860 = vunpack.c.l.b16 %v289
        %v861 = vunpack.c.h.b16 %v289
        %v862 = vunpack.c.l.b16 %v290
        %v863 = vunpack.c.h.b16 %v290
        %v864 = vunpack.c.l.b16 %v291
        %v865 = vunpack.c.h.b16 %v291
        %v866 = vunpack.c.l.b16 %v292
        %v867 = vunpack.c.h.b16 %v292
        %v868 = vunpack.c.l.b16 %v293
        %v869 = vunpack.c.h.b16 %v293
        %v870 = vunpack.c.l.b16 %v294
        %v871 = vunpack.c.h.b16 %v294
        %v872 = vunpack.c.l.b16 %v295
        %v873 = vunpack.c.h.b16 %v295
        %v874 = vunpack.c.l.b16 %v296
        %v875 = vunpack.c.h.b16 %v296
        %v876 = vunpack.c.l.b16 %v297
        %v877 = vunpack.c.h.b16 %v297
        %v878 = vunpack.c.l.b16 %v298
        %v879 = vunpack.c.h.b16 %v298
        %v880 = vunpack.c.l.b16 %v299
        %v881 = vunpack.c.h.b16 %v299
        %v882 = vunpack.c.l.b16 %v300
        %v883 = vunpack.c.h.b16 %v300
        %v884 = vunpack.c.l.b16 %v301
        %v885 = vunpack.c.h.b16 %v301
        %v886 = vunpack.c.l.b16 %v302
        %v887 = vunpack.c.h.b16 %v302
        %v888 = vunpack.c.l.b16 %v303
        %v889 = vunpack.c.h.b16 %v303
        %v890 = vunpack.c.l.b16 %v304
        %v891 = vunpack.c.h.b16 %v304
        %v892 = vunpack.c.l.b16 %v305
        %v893 = vunpack.c.h.b16 %v305
        %v894 = vunpack.c.l.b16 %v306
        %v895 = vunpack.c.h.b16 %v306
        %v896 = vunpack.c.l.b16 %v307
        %v897 = vunpack.c.h.b16 %v307
        %v898 = vunpack.c.l.b16 %v308
        %v899 = vunpack.c.h.b16 %v308
        %v900 = vunpack.c.l.b16 %v309
        %v901 = vunpack.c.h.b16 %v309
        %v902 = vunpack.c.l.b16 %v310
        %v903 = vunpack.c.h.b16 %v310
        %v904 = vunpack.c.l.b16 %v311
        %v905 = vunpack.c.h.b16 %v311
        %v906 = vunpack.c.l.b16 %v312
        %v907 = vunpack.c.h.b16 %v312
        %v908 = vunpack.c.l.b16 %v313
        %v909 = vunpack.c.h.b16 %v313
        %v910 = vunpack.c.l.b16 %v314
        %v911 = vunpack.c.h.b16 %v314
        %v912 = vunpack.c.l.b16 %v315
        %v913 = vunpack.c.h.b16 %v315
        %v914 = vunpack.c.l.b16 %v316
        %v915 = vunpack.c.h.b16 %v316
        %v916 = vunpack.c.l.b16 %v317
        %v917 = vunpack.c.h.b16 %v317
        %v918 = vunpack.c.l.b16 %v318
        %v919 = vunpack.c.h.b16 %v318
        %v920 = vunpack.c.l.b16 %v319
        %v921 = vunpack.c.h.b16 %v319
        %v922 = vunpack.c.l.b16 %v320
        %v923 = vunpack.c.h.b16 %v320
        %v924 = vunpack.c.l.b16 %v321
        %v925 = vunpack.c.h.b16 %v321
        %v926 = vunpack.c.l.b16 %v322
        %v927 = vunpack.c.h.b16 %v322
        %v928 = vunpack.c.l.b16 %v323
        %v929 = vunpack.c.h.b16 %v323
        %v930 = vunpack.c.l.b16 %v324
        %v931 = vunpack.c.h.b16 %v324
        %v932 = vunpack.c.l.b16 %v325
        %v933 = vunpack.c.h.b16 %v325
        %v934 = vunpack.c.l.b16 %v326
        %v935 = vunpack.c.h.b16 %v326
        %v936 = vunpack.c.l.b16 %v327
        %v937 = vunpack.c.h.b16 %v327
        %v938 = vunpack.c.l.b16 %v328
        %v939 = vunpack.c.h.b16 %v328
        %v940 = vunpack.c.l.b16 %v329
        %v941 = vunpack.c.h.b16 %v329
        %v942 = vunpack.c.l.b16 %v330
        %v943 = vunpack.c.h.b16 %v330
        %v944 = vunpack.c.l.b16 %v331
        %v945 = vunpack.c.h.b16 %v331
        %v946 = vunpack.c.l.b16 %v332
        %v947 = vunpack.c.h.b16 %v332
        %v948 = vunpack.c.l.b16 %v333
        %v949 = vunpack.c.h.b16 %v333
        %v950 = vunpack.c.l.b16 %v334
        %v951 = vunpack.c.h.b16 %v334
        %v952 = vunpack.c.l.b16 %v335
        %v953 = vunpack.c.h.b16 %v335
        %v954 = vunpack.c.l.b16 %v336
        %v955 = vunpack.c.h.b16 %v336
        %v956 = vunpack.c.l.b16 %v337
        %v957 = vunpack.c.h.b16 %v337
        %v958 = vunpack.c.l.b16 %v338
        %v959 = vunpack.c.h.b16 %v338
        %v960 = vunpack.c.l.b16 %v339
        %v961 = vunpack.c.h.b16 %v339
        %v962 = vunpack.c.l.b16 %v340
        %v963 = vunpack.c.h.b16 %v340
        %v964 = vunpack.c.l.b16 %v341
        %v965 = vunpack.c.h.b16 %v341
        %v966 = vunpack.c.l.b16 %v342
        %v967 = vunpack.c.h.b16 %v342
        %v968 = vunpack.c.l.b16 %v343
        %v969 = vunpack.c.h.b16 %v343
        %v970 = vunpack.c.l.b16 %v344
        %v971 = vunpack.c.h.b16 %v344
        %v972 = vunpack.c.l.b16 %v345
        %v973 = vunpack.c.h.b16 %v345
        %v974 = vunpack.c.l.b16 %v346
        %v975 = vunpack.c.h.b16 %v346
        %v976 = vunpack.c.l.b16 %v347
        %v977 = vunpack.c.h.b16 %v347
        %v978 = vunpack.c.l.b16 %v348
        %v979 = vunpack.c.h.b16 %v348
        %v980 = vunpack.c.l.b16 %v349
        %v981 = vunpack.c.h.b16 %v349
        %v982 = vunpack.c.l.b16 %v350
        %v983 = vunpack.c.h.b16 %v350
        %v984 = vunpack.c.l.b16 %v351
        %v985 = vunpack.c.h.b16 %v351
        %v986 = vunpack.c.l.b16 %v352
        %v987 = vunpack.c.h.b16 %v352
        %v988 = vunpack.c.l.b16 %v353
        %v989 = vunpack.c.h.b16 %v353
        %v990 = vunpack.c.l.b16 %v354
        %v991 = vunpack.c.h.b16 %v354
        %v992 = vunpack.c.l.b16 %v355
        %v993 = vunpack.c.h.b16 %v355
        %v994 = vunpack.c.l.b16 %v356
        %v995 = vunpack.c.h.b16 %v356
        %v996 = vunpack.c.l.b16 %v357
        %v997 = vunpack.c.h.b16 %v357
        %v998 = vunpack.c.l.b16 %v358
        %v999 = vunpack.c.h.b16 %v358
        %v1000 = vunpack.c.l.b16 %v359
        %v1001 = vunpack.c.h.b16 %v359
        %v1002 = vunpack.c.l.b16 %v360
        %v1003 = vunpack.c.h.b16 %v360
        %v1004 = vunpack.c.l.b16 %v361
        %v1005 = vunpack.c.h.b16 %v361
        %v1006 = vunpack.c.l.b16 %v362
        %v1007 = vunpack.c.h.b16 %v362
        %v1008 = vunpack.c.l.b16 %v363
        %v1009 = vunpack.c.h.b16 %v363
        %v1010 = vunpack.c.l.b16 %v364
        %v1011 = vunpack.c.h.b16 %v364
        %v1012 = vunpack.c.l.b16 %v365
        %v1013 = vunpack.c.h.b16 %v365
        %v1014 = vunpack.c.l.b16 %v366
        %v1015 = vunpack.c.h.b16 %v366
        %v1016 = vunpack.c.l.b16 %v367
        %v1017 = vunpack.c.h.b16 %v367
        %v1018 = vunpack.c.l.b16 %v368
        %v1019 = vunpack.c.h.b16 %v368
        %v1020 = vunpack.c.l.b16 %v369
        %v1021 = vunpack.c.h.b16 %v369
        %v1022 = vunpack.c.l.b16 %v370
        %v1023 = vunpack.c.h.b16 %v370
        %v1024 = vunpack.c.l.b16 %v371
        %v1025 = vunpack.c.h.b16 %v371
        %v1026 = vunpack.c.l.b16 %v372
        %v1027 = vunpack.c.h.b16 %v372
        %v1028 = vunpack.c.l.b16 %v373
        %v1029 = vunpack.c.h.b16 %v373
        %v1030 = vunpack.c.l.b16 %v374
        %v1031 = vunpack.c.h.b16 %v374
        %v1032 = vunpack.c.l.b16 %v375
        %v1033 = vunpack.c.h.b16 %v375
        %v1034 = vunpack.c.l.b16 %v376
        %v1035 = vunpack.c.h.b16 %v376
        %v1036 = vunpack.c.l.b16 %v377
        %v1037 = vunpack.c.h.b16 %v377
        %v1038 = vunpack.c.l.b16 %v378
        %v1039 = vunpack.c.h.b16 %v378
        %v1040 = vunpack.c.l.b16 %v379
        %v1041 = vunpack.c.h.b16 %v379
        %v1042 = vunpack.c.l.b16 %v380
        %v1043 = vunpack.c.h.b16 %v380
        %v1044 = vunpack.c.l.b16 %v381
        %v1045 = vunpack.c.h.b16 %v381
        %v1046 = vunpack.c.l.b16 %v382
        %v1047 = vunpack.c.h.b16 %v382
        %v1048 = vunpack.c.l.b16 %v383
        %v1049 = vunpack.c.h.b16 %v383
        %v1050 = vunpack.c.l.b16 %v384
        %v1051 = vunpack.c.h.b16 %v384
        %v1052 = vunpack.c.l.b16 %v385
        %v1053 = vunpack.c.h.b16 %v385
        %v1054 = vunpack.c.l.b16 %v386
        %v1055 = vunpack.c.h.b16 %v386
        %v1056 = vunpack.c.l.b16 %v387
        %v1057 = vunpack.c.h.b16 %v387
        %v1058 = vunpack.c.l.b16 %v388
        %v1059 = vunpack.c.h.b16 %v388
        %v1060 = vunpack.c.l.b16 %v389
        %v1061 = vunpack.c.h.b16 %v389
        %v1062 = vunpack.c.l.b16 %v390
        %v1063 = vunpack.c.h.b16 %v390
        %v1064 = vunpack.c.l.b16 %v391
        %v1065 = vunpack.c.h.b16 %v391
        %v1066 = vunpack.c.l.b16 %v392
        %v1067 = vunpack.c.h.b16 %v392
        %v1068 = vunpack.c.l.b16 %v393
        %v1069 = vunpack.c.h.b16 %v393
        %v1070 = vunpack.c.l.b16 %v394
        %v1071 = vunpack.c.h.b16 %v394
        %v1072 = vunpack.c.l.b16 %v395
        %v1073 = vunpack.c.h.b16 %v395
        %v1074 = vunpack.c.l.b16 %v396
        %v1075 = vunpack.c.h.b16 %v396
        %v1076 = vunpack.c.l.b16 %v397
        %v1077 = vunpack.c.h.b16 %v397
        %v1078 = vunpack.c.l.b16 %v398
        %v1079 = vunpack.c.h.b16 %v398
        %v1080 = vunpack.c.l.b16 %v399
        %v1081 = vunpack.c.h.b16 %v399
        %v1082 = vunpack.c.l.b16 %v400
        %v1083 = vunpack.c.h.b16 %v400
        %v1084 = vunpack.c.l.b16 %v401
        %v1085 = vunpack.c.h.b16 %v401
        %v1086 = vunpack.c.l.b16 %v402
        %v1087 = vunpack.c.h.b16 %v402
        %v1088 = vunpack.c.l.b16 %v403
        %v1089 = vunpack.c.h.b16 %v403
        %v1090 = vunpack.c.l.b16 %v404
        %v1091 = vunpack.c.h.b16 %v404
        %v1092 = vunpack.c.l.b16 %v405
        %v1093 = vunpack.c.h.b16 %v405
        %v1094 = vunpack.c.l.b16 %v406
        %v1095 = vunpack.c.h.b16 %v406
        %v1096 = vunpack.c.l.b16 %v407
        %v1097 = vunpack.c.h.b16 %v407
        %v1098 = vunpack.c.l.b16 %v408
        %v1099 = vunpack.c.h.b16 %v408
        %v1100 = vunpack.c.l.b16 %v409
        %v1101 = vunpack.c.h.b16 %v409
        %v1102 = vunpack.c.l.b16 %v410
        %v1103 = vunpack.c.h.b16 %v410
        %v1104 = vunpack.c.l.b16 %v411
        %v1105 = vunpack.c.h.b16 %v411
        %v1106 = vunpack.c.l.b16 %v412
        %v1107 = vunpack.c.h.b16 %v412
        %v1108 = vunpack.c.l.b16 %v413
        %v1109 = vunpack.c.h.b16 %v413
        %v1110 = vunpack.c.l.b16 %v414
        %v1111 = vunpack.c.h.b16 %v414
        %v1112 = vunpack.c.l.b16 %v415
        %v1113 = vunpack.c.h.b16 %v415
        %v1114 = vunpack.c.l.b16 %v416
        %v1115 = vunpack.c.h.b16 %v416
        %v1116 = vunpack.c.l.b16 %v417
        %v1117 = vunpack.c.h.b16 %v417
        %v1118 = vunpack.c.l.b16 %v418
        %v1119 = vunpack.c.h.b16 %v418
        %v1120 = vunpack.c.l.b16 %v419
        %v1121 = vunpack.c.h.b16 %v419
        %v1122 = vunpack.c.l.b16 %v420
        %v1123 = vunpack.c.h.b16 %v420
        %v1124 = vunpack.c.l.b16 %v421
        %v1125 = vunpack.c.h.b16 %v421
        %v1126 = vunpack.c.l.b16 %v422
        %v1127 = vunpack.c.h.b16 %v422
        %v1128 = vunpack.c.l.b16 %v423
        %v1129 = vunpack.c.h.b16 %v423
        %v1130 = vunpack.c.l.b16 %v424
        %v1131 = vunpack.c.h.b16 %v424
        %v1132 = vunpack.c.l.b16 %v425
        %v1133 = vunpack.c.h.b16 %v425
        %v1134 = vunpack.c.l.b16 %v426
        %v1135 = vunpack.c.h.b16 %v426
        %v1136 = vunpack.c.l.b16 %v427
        %v1137 = vunpack.c.h.b16 %v427
        %v1138 = vunpack.c.l.b16 %v428
        %v1139 = vunpack.c.h.b16 %v428
        %v1140 = vunpack.c.l.b16 %v429
        %v1141 = vunpack.c.h.b16 %v429
        %v1142 = vunpack.c.l.b16 %v430
        %v1143 = vunpack.c.h.b16 %v430
        %v1144 = vunpack.c.l.b16 %v431
        %v1145 = vunpack.c.h.b16 %v431
        %v1146 = vunpack.c.l.b16 %v432
        %v1147 = vunpack.c.h.b16 %v432
        %v1148 = vunpack.c.l.b16 %v433
        %v1149 = vunpack.c.h.b16 %v433
        %v1150 = vunpack.c.l.b16 %v434
        %v1151 = vunpack.c.h.b16 %v434
        %v1152 = vunpack.c.l.b16 %v435
        %v1153 = vunpack.c.h.b16 %v435
        %v1154 = vunpack.c.l.b16 %v436
        %v1155 = vunpack.c.h.b16 %v436
        %v1156 = vunpack.c.l.b16 %v437
        %v1157 = vunpack.c.h.b16 %v437
        %v1158 = vunpack.c.l.b16 %v438
        %v1159 = vunpack.c.h.b16 %v438
        %v1160 = vunpack.c.l.b16 %v439
        %v1161 = vunpack.c.h.b16 %v439
        %v1162 = vunpack.c.l.b16 %v440
        %v1163 = vunpack.c.h.b16 %v440
        %v1164 = vunpack.c.l.b16 %v441
        %v1165 = vunpack.c.h.b16 %v441
        %v1166 = vunpack.c.l.b16 %v442
        %v1167 = vunpack.c.h.b16 %v442
        %v1168 = vunpack.c.l.b16 %v443
        %v1169 = vunpack.c.h.b16 %v443
        %v1170 = vunpack.c.l.b16 %v444
        %v1171 = vunpack.c.h.b16 %v444
        %v1172 = vunpack.c.l.b16 %v445
        %v1173 = vunpack.c.h.b16 %v445
        %v1174 = vunpack.c.l.b16 %v446
        %v1175 = vunpack.c.h.b16 %v446
        %v1176 = vunpack.c.l.b16 %v447
        %v1177 = vunpack.c.h.b16 %v447
        %v1178 = vunpack.c.l.b16 %v448
        %v1179 = vunpack.c.h.b16 %v448
        %v1180 = vunpack.c.l.b16 %v449
        %v1181 = vunpack.c.h.b16 %v449
        %v1182 = vunpack.c.l.b16 %v450
        %v1183 = vunpack.c.h.b16 %v450
        %v1184 = vunpack.c.l.b16 %v451
        %v1185 = vunpack.c.h.b16 %v451
        %v1186 = vunpack.c.l.b16 %v452
        %v1187 = vunpack.c.h.b16 %v452
        %v1188 = vunpack.c.l.b16 %v453
        %v1189 = vunpack.c.h.b16 %v453
        %v1190 = vunpack.c.l.b16 %v454
        %v1191 = vunpack.c.h.b16 %v454
        %v1192 = vunpack.c.l.b16 %v455
        %v1193 = vunpack.c.h.b16 %v455
        %v1194 = vunpack.c.l.b16 %v456
        %v1195 = vunpack.c.h.b16 %v456
        %v1196 = vunpack.c.l.b16 %v457
        %v1197 = vunpack.c.h.b16 %v457
        %v1198 = vunpack.c.l.b16 %v458
        %v1199 = vunpack.c.h.b16 %v458
        %v1200 = vunpack.c.l.b16 %v459
        %v1201 = vunpack.c.h.b16 %v459
        %v1202 = vunpack.c.l.b16 %v460
        %v1203 = vunpack.c.h.b16 %v460
        %v1204 = vunpack.c.l.b16 %v461
        %v1205 = vunpack.c.h.b16 %v461
        %v1206 = vunpack.c.l.b16 %v462
        %v1207 = vunpack.c.h.b16 %v462
        %v1208 = vunpack.c.l.b16 %v463
        %v1209 = vunpack.c.h.b16 %v463
        %v1210 = vunpack.c.l.b16 %v464
        %v1211 = vunpack.c.h.b16 %v464
        %v1212 = vunpack.c.l.b16 %v465
        %v1213 = vunpack.c.h.b16 %v465
        %v1214 = vunpack.c.l.b16 %v466
        %v1215 = vunpack.c.h.b16 %v466
        %v1216 = vunpack.c.l.b16 %v467
        %v1217 = vunpack.c.h.b16 %v467
        %v1218 = vunpack.c.l.b16 %v468
        %v1219 = vunpack.c.h.b16 %v468
        %v1220 = vunpack.c.l.b16 %v469
        %v1221 = vunpack.c.h.b16 %v469
        %v1222 = vunpack.c.l.b16 %v470
        %v1223 = vunpack.c.h.b16 %v470
        %v1224 = vunpack.c.l.b16 %v471
        %v1225 = vunpack.c.h.b16 %v471
        %v1226 = vunpack.c.l.b16 %v472
        %v1227 = vunpack.c.h.b16 %v472
        %v1228 = vunpack.c.l.b16 %v473
        %v1229 = vunpack.c.h.b16 %v473
        %v1230 = vunpack.c.l.b16 %v474
        %v1231 = vunpack.c.h.b16 %v474
        %v1232 = vunpack.c.l.b16 %v475
        %v1233 = vunpack.c.h.b16 %v475
        %v1234 = vunpack.c.l.b16 %v476
        %v1235 = vunpack.c.h.b16 %v476
        %v1236 = vunpack.c.l.b16 %v477
        %v1237 = vunpack.c.h.b16 %v477
        %v1238 = vunpack.c.l.b16 %v478
        %v1239 = vunpack.c.h.b16 %v478
        %v1240 = vunpack.c.l.b16 %v479
        %v1241 = vunpack.c.h.b16 %v479
        %v1242 = vunpack.c.l.b16 %v480
        %v1243 = vunpack.c.h.b16 %v480
        %v1244 = vunpack.c.l.b16 %v481
        %v1245 = vunpack.c.h.b16 %v481
        %v1246 = vunpack.c.l.b16 %v482
        %v1247 = vunpack.c.h.b16 %v482
        %v1248 = vunpack.c.l.b16 %v483
        %v1249 = vunpack.c.h.b16 %v483
        %v1250 = vunpack.c.l.b16 %v484
        %v1251 = vunpack.c.h.b16 %v484
        %v1252 = vunpack.c.l.b16 %v485
        %v1253 = vunpack.c.h.b16 %v485
        %v1254 = vunpack.c.l.b16 %v486
        %v1255 = vunpack.c.h.b16 %v486
        %v1256 = vunpack.c.l.b16 %v487
        %v1257 = vunpack.c.h.b16 %v487
        %v1258 = vunpack.c.l.b16 %v488
        %v1259 = vunpack.c.h.b16 %v488
        %v1260 = vunpack.c.l.b16 %v489
        %v1261 = vunpack.c.h.b16 %v489
        %v1262 = vunpack.c.l.b16 %v490
        %v1263 = vunpack.c.h.b16 %v490
        %v1264 = vunpack.c.l.b16 %v491
        %v1265 = vunpack.c.h.b16 %v491
        %v1266 = vunpack.c.l.b16 %v492
        %v1267 = vunpack.c.h.b16 %v492
        %v1268 = vunpack.c.l.b16 %v493
        %v1269 = vunpack.c.h.b16 %v493
        %v1270 = vunpack.c.l.b16 %v494
        %v1271 = vunpack.c.h.b16 %v494
        %v1272 = vunpack.c.l.b16 %v495
        %v1273 = vunpack.c.h.b16 %v495
        %v1274 = vunpack.c.l.b16 %v496
        %v1275 = vunpack.c.h.b16 %v496
        %v1276 = vunpack.c.l.b16 %v497
        %v1277 = vunpack.c.h.b16 %v497
        %v1278 = vunpack.c.l.b16 %v498
        %v1279 = vunpack.c.h.b16 %v498
        %v1280 = vunpack.c.l.b16 %v499
        %v1281 = vunpack.c.h.b16 %v499
        %v1282 = vunpack.c.l.b16 %v500
        %v1283 = vunpack.c.h.b16 %v500
        %v1284 = vunpack.c.l.b16 %v501
        %v1285 = vunpack.c.h.b16 %v501
        %v1286 = vunpack.c.l.b16 %v502
        %v1287 = vunpack.c.h.b16 %v502
        %v1288 = vunpack.c.l.b16 %v503
        %v1289 = vunpack.c.h.b16 %v503
        %v1290 = vunpack.c.l.b16 %v504
        %v1291 = vunpack.c.h.b16 %v504
        %v1292 = vunpack.c.l.b16 %v505
        %v1293 = vunpack.c.h.b16 %v505
        %v1294 = vunpack.c.l.b16 %v506
        %v1295 = vunpack.c.h.b16 %v506
        %v1296 = vunpack.c.l.b16 %v507
        %v1297 = vunpack.c.h.b16 %v507
        %v1298 = vunpack.c.l.b16 %v508
        %v1299 = vunpack.c.h.b16 %v508
        %v1300 = vunpack.c.l.b16 %v509
        %v1301 = vunpack.c.h.b16 %v509
        %v1302 = vunpack.c.l.b16 %v510
        %v1303 = vunpack.c.h.b16 %v510
        %v1304 = vunpack.c.l.b16 %v511
        %v1305 = vunpack.c.h.b16 %v511
        %v1306 = vunpack.c.l.b16 %v512
        %v1307 = vunpack.c.h.b16 %v512
        %v1308 = vunpack.c.l.b16 %v513
        %v1309 = vunpack.c.h.b16 %v513
        %v1310 = vunpack.c.l.b16 %v514
        %v1311 = vunpack.c.h.b16 %v514
        %v1312 = vunpack.c.l.b16 %v515
        %v1313 = vunpack.c.h.b16 %v515
        %v1314 = vunpack.c.l.b16 %v516
        %v1315 = vunpack.c.h.b16 %v516
        %v1316 = vpack.c.b16 %v820, %v816
        %v1317 = vpack.c.b16 %v821, %v817
        %v1318 = vpack.c.b16 %v822, %v818
        %v1319 = vpack.c.b16 %v823, %v819
        %v1320 = vpack.c.b16 %v828, %v824
        %v1321 = vpack.c.b16 %v829, %v825
        %v1322 = vpack.c.b16 %v830, %v826
        %v1323 = vpack.c.b16 %v831, %v827
        %v1324 = vpack.c.b16 %v836, %v832
        %v1325 = vpack.c.b16 %v837, %v833
        %v1326 = vpack.c.b16 %v838, %v834
        %v1327 = vpack.c.b16 %v839, %v835
        %v1328 = vpack.c.b16 %v844, %v840
        %v1329 = vpack.c.b16 %v845, %v841
        %v1330 = vpack.c.b16 %v846, %v842
        %v1331 = vpack.c.b16 %v847, %v843
        %v1332 = vpack.c.b16 %v852, %v848
        %v1333 = vpack.c.b16 %v853, %v849
        %v1334 = vpack.c.b16 %v854, %v850
        %v1335 = vpack.c.b16 %v855, %v851
        %v1336 = vpack.c.b16 %v860, %v856
        %v1337 = vpack.c.b16 %v861, %v857
        %v1338 = vpack.c.b16 %v862, %v858
        %v1339 = vpack.c.b16 %v863, %v859
        %v1340 = vpack.c.b16 %v868, %v864
        %v1341 = vpack.c.b16 %v869, %v865
        %v1342 = vpack.c.b16 %v870, %v866
        %v1343 = vpack.c.b16 %v871, %v867
        %v1344 = vpack.c.b16 %v876, %v872
        %v1345 = vpack.c.b16 %v877, %v873
        %v1346 = vpack.c.b16 %v878, %v874
        %v1347 = vpack.c.b16 %v879, %v875
        %v1348 = vpack.c.b16 %v884, %v880
        %v1349 = vpack.c.b16 %v885, %v881
        %v1350 = vpack.c.b16 %v886, %v882
        %v1351 = vpack.c.b16 %v887, %v883
        %v1352 = vpack.c.b16 %v892, %v888
        %v1353 = vpack.c.b16 %v893, %v889
        %v1354 = vpack.c.b16 %v894, %v890
        %v1355 = vpack.c.b16 %v895, %v891
        %v1356 = vpack.c.b16 %v900, %v896
        %v1357 = vpack.c.b16 %v901, %v897
        %v1358 = vpack.c.b16 %v902, %v898
        %v1359 = vpack.c.b16 %v903, %v899
        %v1360 = vpack.c.b16 %v908, %v904
        %v1361 = vpack.c.b16 %v909, %v905
        %v1362 = vpack.c.b16 %v910, %v906
        %v1363 = vpack.c.b16 %v911, %v907
        %v1364 = vpack.c.b16 %v916, %v912
        %v1365 = vpack.c.b16 %v917, %v913
        %v1366 = vpack.c.b16 %v918, %v914
        %v1367 = vpack.c.b16 %v919, %v915
        %v1368 = vpack.c.b16 %v924, %v920
        %v1369 = vpack.c.b16 %v925, %v921
        %v1370 = vpack.c.b16 %v926, %v922
        %v1371 = vpack.c.b16 %v927, %v923
        %v1372 = vpack.c.b16 %v932, %v928
        %v1373 = vpack.c.b16 %v933, %v929
        %v1374 = vpack.c.b16 %v934, %v930
        %v1375 = vpack.c.b16 %v935, %v931
        %v1376 = vpack.c.b16 %v940, %v936
        %v1377 = vpack.c.b16 %v941, %v937
        %v1378 = vpack.c.b16 %v942, %v938
        %v1379 = vpack.c.b16 %v943, %v939
        %v1380 = vpack.c.b16 %v948, %v944
        %v1381 = vpack.c.b16 %v949, %v945
        %v1382 = vpack.c.b16 %v950, %v946
        %v1383 = vpack.c.b16 %v951, %v947
        %v1384 = vpack.c.b16 %v956, %v952
        %v1385 = vpack.c.b16 %v957, %v953
        %v1386 = vpack.c.b16 %v958, %v954
        %v1387 = vpack.c.b16 %v959, %v955
        %v1388 = vpack.c.b16 %v964, %v960
        %v1389 = vpack.c.b16 %v965, %v961
        %v1390 = vpack.c.b16 %v966, %v962
        %v1391 = vpack.c.b16 %v967, %v963
        %v1392 = vpack.c.b16 %v972, %v968
        %v1393 = vpack.c.b16 %v973, %v969
        %v1394 = vpack.c.b16 %v974, %v970
        %v1395 = vpack.c.b16 %v975, %v971
        %v1396 = vpack.c.b16 %v980, %v976
        %v1397 = vpack.c.b16 %v981, %v977
        %v1398 = vpack.c.b16 %v982, %v978
        %v1399 = vpack.c.b16 %v983, %v979
        %v1400 = vpack.c.b16 %v988, %v984
        %v1401 = vpack.c.b16 %v989, %v985
        %v1402 = vpack.c.b16 %v990, %v986
        %v1403 = vpack.c.b16 %v991, %v987
        %v1404 = vpack.c.b16 %v996, %v992
        %v1405 = vpack.c.b16 %v997, %v993
        %v1406 = vpack.c.b16 %v998, %v994
        %v1407 = vpack.c.b16 %v999, %v995
        %v1408 = vpack.c.b16 %v1004, %v1000
        %v1409 = vpack.c.b16 %v1005, %v1001
        %v1410 = vpack.c.b16 %v1006, %v1002
        %v1411 = vpack.c.b16 %v1007, %v1003
        %v1412 = vpack.c.b16 %v1012, %v1008
        %v1413 = vpack.c.b16 %v1013, %v1009
        %v1414 = vpack.c.b16 %v1014, %v1010
        %v1415 = vpack.c.b16 %v1015, %v1011
        %v1416 = vpack.c.b16 %v1020, %v1016
        %v1417 = vpack.c.b16 %v1021, %v1017
        %v1418 = vpack.c.b16 %v1022, %v1018
        %v1419 = vpack.c.b16 %v1023, %v1019
        %v1420 = vpack.c.b16 %v1028, %v1024
        %v1421 = vpack.c.b16 %v1029, %v1025
        %v1422 = vpack.c.b16 %v1030, %v1026
        %v1423 = vpack.c.b16 %v1031, %v1027
        %v1424 = vpack.c.b16 %v1036, %v1032
        %v1425 = vpack.c.b16 %v1037, %v1033
        %v1426 = vpack.c.b16 %v1038, %v1034
        %v1427 = vpack.c.b16 %v1039, %v1035
        %v1428 = vpack.c.b16 %v1044, %v1040
        %v1429 = vpack.c.b16 %v1045, %v1041
        %v1430 = vpack.c.b16 %v1046, %v1042
        %v1431 = vpack.c.b16 %v1047, %v1043
        %v1432 = vpack.c.b16 %v1052, %v1048
        %v1433 = vpack.c.b16 %v1053, %v1049
        %v1434 = vpack.c.b16 %v1054, %v1050
        %v1435 = vpack.c.b16 %v1055, %v1051
        %v1436 = vpack.c.b16 %v1060, %v1056
        %v1437 = vpack.c.b16 %v1061, %v1057
        %v1438 = vpack.c.b16 %v1062, %v1058
        %v1439 = vpack.c.b16 %v1063, %v1059
        %v1440 = vpack.c.b16 %v1068, %v1064
        %v1441 = vpack.c.b16 %v1069, %v1065
        %v1442 = vpack.c.b16 %v1070, %v1066
        %v1443 = vpack.c.b16 %v1071, %v1067
        %v1444 = vpack.c.b16 %v1076, %v1072
        %v1445 = vpack.c.b16 %v1077, %v1073
        %v1446 = vpack.c.b16 %v1078, %v1074
        %v1447 = vpack.c.b16 %v1079, %v1075
        %v1448 = vpack.c.b16 %v1084, %v1080
        %v1449 = vpack.c.b16 %v1085, %v1081
        %v1450 = vpack.c.b16 %v1086, %v1082
        %v1451 = vpack.c.b16 %v1087, %v1083
        %v1452 = vpack.c.b16 %v1092, %v1088
        %v1453 = vpack.c.b16 %v1093, %v1089
        %v1454 = vpack.c.b16 %v1094, %v1090
        %v1455 = vpack.c.b16 %v1095, %v1091
        %v1456 = vpack.c.b16 %v1100, %v1096
        %v1457 = vpack.c.b16 %v1101, %v1097
        %v1458 = vpack.c.b16 %v1102, %v1098
        %v1459 = vpack.c.b16 %v1103, %v1099
        %v1460 = vpack.c.b16 %v1108, %v1104
        %v1461 = vpack.c.b16 %v1109, %v1105
        %v1462 = vpack.c.b16 %v1110, %v1106
        %v1463 = vpack.c.b16 %v1111, %v1107
        %v1464 = vpack.c.b16 %v1116, %v1112
        %v1465 = vpack.c.b16 %v1117, %v1113
        %v1466 = vpack.c.b16 %v1118, %v1114
        %v1467 = vpack.c.b16 %v1119, %v1115
        %v1468 = vpack.c.b16 %v1124, %v1120
        %v1469 = vpack.c.b16 %v1125, %v1121
        %v1470 = vpack.c.b16 %v1126, %v1122
        %v1471 = vpack.c.b16 %v1127, %v1123
        %v1472 = vpack.c.b16 %v1132, %v1128
        %v1473 = vpack.c.b16 %v1133, %v1129
        %v1474 = vpack.c.b16 %v1134, %v1130
        %v1475 = vpack.c.b16 %v1135, %v1131
        %v1476 = vpack.c.b16 %v1140, %v1136
        %v1477 = vpack.c.b16 %v1141, %v1137
        %v1478 = vpack.c.b16 %v1142, %v1138
        %v1479 = vpack.c.b16 %v1143, %v1139
        %v1480 = vpack.c.b16 %v1148, %v1144
        %v1481 = vpack.c.b16 %v1149, %v1145
        %v1482 = vpack.c.b16 %v1150, %v1146
        %v1483 = vpack.c.b16 %v1151, %v1147
        %v1484 = vpack.c.b16 %v1156, %v1152
        %v1485 = vpack.c.b16 %v1157, %v1153
        %v1486 = vpack.c.b16 %v1158, %v1154
        %v1487 = vpack.c.b16 %v1159, %v1155
        %v1488 = vpack.c.b16 %v1164, %v1160
        %v1489 = vpack.c.b16 %v1165, %v1161
        %v1490 = vpack.c.b16 %v1166, %v1162
        %v1491 = vpack.c.b16 %v1167, %v1163
        %v1492 = vpack.c.b16 %v1172, %v1168
        %v1493 = vpack.c.b16 %v1173, %v1169
        %v1494 = vpack.c.b16 %v1174, %v1170
        %v1495 = vpack.c.b16 %v1175, %v1171
        %v1496 = vpack.c.b16 %v1180, %v1176
        %v1497 = vpack.c.b16 %v1181, %v1177
        %v1498 = vpack.c.b16 %v1182, %v1178
        %v1499 = vpack.c.b16 %v1183, %v1179
        %v1500 = vpack.c.b16 %v1188, %v1184
        %v1501 = vpack.c.b16 %v1189, %v1185
        %v1502 = vpack.c.b16 %v1190, %v1186
        %v1503 = vpack.c.b16 %v1191, %v1187
        %v1504 = vpack.c.b16 %v1196, %v1192
        %v1505 = vpack.c.b16 %v1197, %v1193
        %v1506 = vpack.c.b16 %v1198, %v1194
        %v1507 = vpack.c.b16 %v1199, %v1195
        %v1508 = vpack.c.b16 %v1204, %v1200
        %v1509 = vpack.c.b16 %v1205, %v1201
        %v1510 = vpack.c.b16 %v1206, %v1202
        %v1511 = vpack.c.b16 %v1207, %v1203
        %v1512 = vpack.c.b16 %v1212, %v1208
        %v1513 = vpack.c.b16 %v1213, %v1209
        %v1514 = vpack.c.b16 %v1214, %v1210
        %v1515 = vpack.c.b16 %v1215, %v1211
        %v1516 = vpack.c.b16 %v1220, %v1216
        %v1517 = vpack.c.b16 %v1221, %v1217
        %v1518 = vpack.c.b16 %v1222, %v1218
        %v1519 = vpack.c.b16 %v1223, %v1219
        %v1520 = vpack.c.b16 %v1228, %v1224
        %v1521 = vpack.c.b16 %v1229, %v1225
        %v1522 = vpack.c.b16 %v1230, %v1226
        %v1523 = vpack.c.b16 %v1231, %v1227
        %v1524 = vpack.c.b16 %v1236, %v1232
        %v1525 = vpack.c.b16 %v1237, %v1233
        %v1526 = vpack.c.b16 %v1238, %v1234
        %v1527 = vpack.c.b16 %v1239, %v1235
        %v1528 = vpack.c.b16 %v1244, %v1240
        %v1529 = vpack.c.b16 %v1245, %v1241
        %v1530 = vpack.c.b16 %v1246, %v1242
        %v1531 = vpack.c.b16 %v1247, %v1243
        %v1532 = vpack.c.b16 %v1252, %v1248
        %v1533 = vpack.c.b16 %v1253, %v1249
        %v1534 = vpack.c.b16 %v1254, %v1250
        %v1535 = vpack.c.b16 %v1255, %v1251
        %v1536 = vpack.c.b16 %v1260, %v1256
        %v1537 = vpack.c.b16 %v1261, %v1257
        %v1538 = vpack.c.b16 %v1262, %v1258
        %v1539 = vpack.c.b16 %v1263, %v1259
        %v1540 = vpack.c.b16 %v1268, %v1264
        %v1541 = vpack.c.b16 %v1269, %v1265
        %v1542 = vpack.c.b16 %v1270, %v1266
        %v1543 = vpack.c.b16 %v1271, %v1267
        %v1544 = vpack.c.b16 %v1276, %v1272
        %v1545 = vpack.c.b16 %v1277, %v1273
        %v1546 = vpack.c.b16 %v1278, %v1274
        %v1547 = vpack.c.b16 %v1279, %v1275
        %v1548 = vpack.c.b16 %v1284, %v1280
        %v1549 = vpack.c.b16 %v1285, %v1281
        %v1550 = vpack.c.b16 %v1286, %v1282
        %v1551 = vpack.c.b16 %v1287, %v1283
        %v1552 = vpack.c.b16 %v1292, %v1288
        %v1553 = vpack.c.b16 %v1293, %v1289
        %v1554 = vpack.c.b16 %v1294, %v1290
        %v1555 = vpack.c.b16 %v1295, %v1291
        %v1556 = vpack.c.b16 %v1300, %v1296
        %v1557 = vpack.c.b16 %v1301, %v1297
        %v1558 = vpack.c.b16 %v1302, %v1298
        %v1559 = vpack.c.b16 %v1303, %v1299
        %v1560 = vpack.c.b16 %v1308, %v1304
        %v1561 = vpack.c.b16 %v1309, %v1305
        %v1562 = vpack.c.b16 %v1310, %v1306
        %v1563 = vpack.c.b16 %v1311, %v1307
        %v1564 = vpack.c.b16 %v1312, %v1312
        %v1565 = vpack.c.b16 %v1313, %v1313
        %v1566 = vpack.c.b16 %v1314, %v1314
        %v1567 = vpack.c.b16 %v1315, %v1315
        %vm1816 = vcmask 850944
        %v1818 = vsel %vm1816, %v558, 0
        %vm1820 = vcmask 1043456
        %v1822 = vsel %vm1820, %v1564, 0
        %v1825 = vsel %vm1820, %v1565, 0
        %v1828 = vsel %vm1820, %v1566, 0
        %v1831 = vsel %vm1820, %v1567, 0
        %1833 = vmatprep.subr.bf16.mxu0 %v1317
        %1834 = vmatpush1.bf16.msra.mxu0 %v1316
        %1835 = vmatprep.subr.bf16.mxu0 %v1321
        %1836 = vmatpush1.bf16.msra.mxu0 %v1320
        %1837 = vmatprep.subr.bf16.mxu0 %v1325
        %1838 = vmatpush1.bf16.msra.mxu0 %v1324
        %1839 = vmatprep.subr.bf16.mxu0 %v1329
        %1840 = vmatpush1.bf16.msra.mxu0 %v1328
        %1841 = vmatprep.subr.bf16.mxu0 %v1333
        %1842 = vmatpush1.bf16.msra.mxu0 %v1332
        %1843 = vmatprep.subr.bf16.mxu0 %v1337
        %1844 = vmatpush1.bf16.msra.mxu0 %v1336
        %1845 = vmatprep.subr.bf16.mxu0 %v1341
        %1846 = vmatpush1.bf16.msra.mxu0 %v1340
        %1847 = vmatprep.subr.bf16.mxu0 %v1345
        %1848 = vmatpush1.bf16.msra.mxu0 %v1344
        %1849 = vmatprep.subr.bf16.mxu0 %v1349
        %1850 = vmatpush1.bf16.msra.mxu0 %v1348
        %1851 = vmatprep.subr.bf16.mxu0 %v1353
        %1852 = vmatpush1.bf16.msra.mxu0 %v1352
        %1853 = vmatprep.subr.bf16.mxu0 %v1357
        %1854 = vmatpush1.bf16.msra.mxu0 %v1356
        %1855 = vmatprep.subr.bf16.mxu0 %v1361
        %1856 = vmatpush1.bf16.msra.mxu0 %v1360
        %1857 = vmatprep.subr.bf16.mxu0 %v1365
        %1858 = vmatpush1.bf16.msra.mxu0 %v1364
        %1859 = vmatprep.subr.bf16.mxu0 %v1369
        %1860 = vmatpush1.bf16.msra.mxu0 %v1368
        %1861 = vmatprep.subr.bf16.mxu0 %v1373
        %1862 = vmatpush1.bf16.msra.mxu0 %v1372
        %1863 = vmatprep.subr.bf16.mxu0 %v1377
        %1864 = vmatpush1.bf16.msra.mxu0 %v1376
        %1865 = vmatprep.mubr.bf16.mxu0 %v552
        %1866 = vmatmul.mubr.bf16.gmra.mrb[0].mxu0 %v551
        %v1867 = vpop.f32.mrb[0].mxu0
        %v1868 = vadd.f32 %v522, %v1867
        %v1869 = vpop.f32.mrb[0].mxu0
        %v1870 = vadd.f32 %v526, %v1869
        %v1871 = vpop.f32.mrb[0].mxu0
        %v1872 = vpop.f32.mrb[0].mxu0
        %1873 = vdwg.mxu0
        %1874 = vmatprep.subr.bf16.mxu0 %v1381
        %1875 = vmatpush1.bf16.msra.mxu0 %v1380
        %1876 = vmatprep.subr.bf16.mxu0 %v1385
        %1877 = vmatpush1.bf16.msra.mxu0 %v1384
        %1878 = vmatprep.subr.bf16.mxu0 %v1389
        %1879 = vmatpush1.bf16.msra.mxu0 %v1388
        %1880 = vmatprep.subr.bf16.mxu0 %v1393
        %1881 = vmatpush1.bf16.msra.mxu0 %v1392
        %1882 = vmatprep.subr.bf16.mxu0 %v1397
        %1883 = vmatpush1.bf16.msra.mxu0 %v1396
        %1884 = vmatprep.subr.bf16.mxu0 %v1401
        %1885 = vmatpush1.bf16.msra.mxu0 %v1400
        %1886 = vmatprep.subr.bf16.mxu0 %v1405
        %1887 = vmatpush1.bf16.msra.mxu0 %v1404
        %1888 = vmatprep.subr.bf16.mxu0 %v1409
        %1889 = vmatpush1.bf16.msra.mxu0 %v1408
        %1890 = vmatprep.subr.bf16.mxu0 %v1413
        %1891 = vmatpush1.bf16.msra.mxu0 %v1412
        %1892 = vmatprep.subr.bf16.mxu0 %v1417
        %1893 = vmatpush1.bf16.msra.mxu0 %v1416
        %1894 = vmatprep.subr.bf16.mxu0 %v1421
        %1895 = vmatpush1.bf16.msra.mxu0 %v1420
        %1896 = vmatprep.subr.bf16.mxu0 %v1425
        %1897 = vmatpush1.bf16.msra.mxu0 %v1424
        %1898 = vmatprep.subr.bf16.mxu0 %v1429
        %1899 = vmatpush1.bf16.msra.mxu0 %v1428
        %1900 = vmatprep.subr.bf16.mxu0 %v1433
        %1901 = vmatpush1.bf16.msra.mxu0 %v1432
        %1902 = vmatprep.subr.bf16.mxu0 %v1437
        %1903 = vmatpush1.bf16.msra.mxu0 %v1436
        %1904 = vmatprep.subr.bf16.mxu0 %v1441
        %1905 = vmatpush1.bf16.msra.mxu0 %v1440
        %1906 = vmatprep.mubr.bf16.mxu0 %v554
        %1907 = vmatmul.mubr.bf16.gmra.mrb[0].mxu0 %v553
        %v1908 = vpop.f32.mrb[0].mxu0
        %v1909 = vadd.f32 %v1868, %v1908
        %v1910 = vpop.f32.mrb[0].mxu0
        %v1911 = vadd.f32 %v1870, %v1910
        %v1912 = vpop.f32.mrb[0].mxu0
        %v1913 = vpop.f32.mrb[0].mxu0
        %1914 = vdwg.mxu0
        %1915 = vmatprep.subr.bf16.mxu0 %v1445
        %1916 = vmatpush1.bf16.msra.mxu0 %v1444
        %1917 = vmatprep.subr.bf16.mxu0 %v1449
        %1918 = vmatpush1.bf16.msra.mxu0 %v1448
        %1919 = vmatprep.subr.bf16.mxu0 %v1453
        %1920 = vmatpush1.bf16.msra.mxu0 %v1452
        %1921 = vmatprep.subr.bf16.mxu0 %v1457
        %1922 = vmatpush1.bf16.msra.mxu0 %v1456
        %1923 = vmatprep.subr.bf16.mxu0 %v1461
        %1924 = vmatpush1.bf16.msra.mxu0 %v1460
        %1925 = vmatprep.subr.bf16.mxu0 %v1465
        %1926 = vmatpush1.bf16.msra.mxu0 %v1464
        %1927 = vmatprep.subr.bf16.mxu0 %v1469
        %1928 = vmatpush1.bf16.msra.mxu0 %v1468
        %1929 = vmatprep.subr.bf16.mxu0 %v1473
        %1930 = vmatpush1.bf16.msra.mxu0 %v1472
        %1931 = vmatprep.subr.bf16.mxu0 %v1477
        %1932 = vmatpush1.bf16.msra.mxu0 %v1476
        %1933 = vmatprep.subr.bf16.mxu0 %v1481
        %1934 = vmatpush1.bf16.msra.mxu0 %v1480
        %1935 = vmatprep.subr.bf16.mxu0 %v1485
        %1936 = vmatpush1.bf16.msra.mxu0 %v1484
        %1937 = vmatprep.subr.bf16.mxu0 %v1489
        %1938 = vmatpush1.bf16.msra.mxu0 %v1488
        %1939 = vmatprep.subr.bf16.mxu0 %v1493
        %1940 = vmatpush1.bf16.msra.mxu0 %v1492
        %1941 = vmatprep.subr.bf16.mxu0 %v1497
        %1942 = vmatpush1.bf16.msra.mxu0 %v1496
        %1943 = vmatprep.subr.bf16.mxu0 %v1501
        %1944 = vmatpush1.bf16.msra.mxu0 %v1500
        %1945 = vmatprep.subr.bf16.mxu0 %v1505
        %1946 = vmatpush1.bf16.msra.mxu0 %v1504
        %1947 = vmatprep.mubr.bf16.mxu0 %v556
        %1948 = vmatmul.mubr.bf16.gmra.mrb[0].mxu0 %v555
        %v1949 = vpop.f32.mrb[0].mxu0
        %v1950 = vadd.f32 %v1909, %v1949
        %v1951 = vpop.f32.mrb[0].mxu0
        %v1952 = vadd.f32 %v1911, %v1951
        %v1953 = vpop.f32.mrb[0].mxu0
        %v1954 = vpop.f32.mrb[0].mxu0
        %1955 = vdwg.mxu0
        %1956 = vmatprep.subr.bf16.mxu0 %v1509
        %1957 = vmatpush1.bf16.msra.mxu0 %v1508
        %1958 = vmatprep.subr.bf16.mxu0 %v1513
        %1959 = vmatpush1.bf16.msra.mxu0 %v1512
        %1960 = vmatprep.subr.bf16.mxu0 %v1517
        %1961 = vmatpush1.bf16.msra.mxu0 %v1516
        %1962 = vmatprep.subr.bf16.mxu0 %v1521
        %1963 = vmatpush1.bf16.msra.mxu0 %v1520
        %1964 = vmatprep.subr.bf16.mxu0 %v1525
        %1965 = vmatpush1.bf16.msra.mxu0 %v1524
        %1966 = vmatprep.subr.bf16.mxu0 %v1529
        %1967 = vmatpush1.bf16.msra.mxu0 %v1528
        %1968 = vmatprep.subr.bf16.mxu0 %v1533
        %1969 = vmatpush1.bf16.msra.mxu0 %v1532
        %1970 = vmatprep.subr.bf16.mxu0 %v1537
        %1971 = vmatpush1.bf16.msra.mxu0 %v1536
        %1972 = vmatprep.subr.bf16.mxu0 %v1541
        %1973 = vmatpush1.bf16.msra.mxu0 %v1540
        %1974 = vmatprep.subr.bf16.mxu0 %v1545
        %1975 = vmatpush1.bf16.msra.mxu0 %v1544
        %1976 = vmatprep.subr.bf16.mxu0 %v1549
        %1977 = vmatpush1.bf16.msra.mxu0 %v1548
        %1978 = vmatprep.subr.bf16.mxu0 %v1553
        %1979 = vmatpush1.bf16.msra.mxu0 %v1552
        %1980 = vmatprep.subr.bf16.mxu0 %v1557
        %1981 = vmatpush1.bf16.msra.mxu0 %v1556
        %1982 = vmatprep.subr.bf16.mxu0 %v1561
        %1983 = vmatpush1.bf16.msra.mxu0 %v1560
        %1984 = vmatprep.subr.bf16.mxu0 %v1825
        %1985 = vmatpush1.bf16.msra.mxu0 %v1822
        %1986 = vmatprep.subr.bf16.mxu0 0
        %1987 = vmatpush1.bf16.msra.mxu0 0
        %1988 = vmatprep.mubr.bf16.mxu0 %v1818
        %1989 = vmatmul.mubr.bf16.gmra.mrb[0].mxu0 %v557
        %v1990 = vpop.f32.mrb[0].mxu0
        %v1991 = vadd.f32 %v1950, %v1990
        %v1992 = vpop.f32.mrb[0].mxu0
        %v1993 = vadd.f32 %v1952, %v1992
        %v1994 = vpop.f32.mrb[0].mxu0
        %v1995 = vpop.f32.mrb[0].mxu0
        %1996 = vdwg.mxu0
        %1997 = vmatprep.subr.bf16.mxu0 %v1319
        %1998 = vmatpush1.bf16.msra.mxu0 %v1318
        %1999 = vmatprep.subr.bf16.mxu0 %v1323
        %2000 = vmatpush1.bf16.msra.mxu0 %v1322
        %2001 = vmatprep.subr.bf16.mxu0 %v1327
        %2002 = vmatpush1.bf16.msra.mxu0 %v1326
        %2003 = vmatprep.subr.bf16.mxu0 %v1331
        %2004 = vmatpush1.bf16.msra.mxu0 %v1330
        %2005 = vmatprep.subr.bf16.mxu0 %v1335
        %2006 = vmatpush1.bf16.msra.mxu0 %v1334
        %2007 = vmatprep.subr.bf16.mxu0 %v1339
        %2008 = vmatpush1.bf16.msra.mxu0 %v1338
        %2009 = vmatprep.subr.bf16.mxu0 %v1343
        %2010 = vmatpush1.bf16.msra.mxu0 %v1342
        %2011 = vmatprep.subr.bf16.mxu0 %v1347
        %2012 = vmatpush1.bf16.msra.mxu0 %v1346
        %2013 = vmatprep.subr.bf16.mxu0 %v1351
        %2014 = vmatpush1.bf16.msra.mxu0 %v1350
        %2015 = vmatprep.subr.bf16.mxu0 %v1355
        %2016 = vmatpush1.bf16.msra.mxu0 %v1354
        %2017 = vmatprep.subr.bf16.mxu0 %v1359
        %2018 = vmatpush1.bf16.msra.mxu0 %v1358
        %2019 = vmatprep.subr.bf16.mxu0 %v1363
        %2020 = vmatpush1.bf16.msra.mxu0 %v1362
        %2021 = vmatprep.subr.bf16.mxu0 %v1367
        %2022 = vmatpush1.bf16.msra.mxu0 %v1366
        %2023 = vmatprep.subr.bf16.mxu0 %v1371
        %2024 = vmatpush1.bf16.msra.mxu0 %v1370
        %2025 = vmatprep.subr.bf16.mxu0 %v1375
        %2026 = vmatpush1.bf16.msra.mxu0 %v1374
        %2027 = vmatprep.subr.bf16.mxu0 %v1379
        %2028 = vmatpush1.bf16.msra.mxu0 %v1378
        %2029 = vmatprep.mubr.bf16.mxu0 %v552
        %2030 = vmatmul.mubr.bf16.gmra.mrb[0].mxu0 %v551
        %v2031 = vpop.f32.mrb[0].mxu0
        %v2032 = vadd.f32 %v530, %v2031
        %v2033 = vpop.f32.mrb[0].mxu0
        %v2034 = vadd.f32 %v534, %v2033
        %v2035 = vpop.f32.mrb[0].mxu0
        %v2036 = vpop.f32.mrb[0].mxu0
        %2037 = vdwg.mxu0
        %2038 = vmatprep.subr.bf16.mxu0 %v1383
        %2039 = vmatpush1.bf16.msra.mxu0 %v1382
        %2040 = vmatprep.subr.bf16.mxu0 %v1387
        %2041 = vmatpush1.bf16.msra.mxu0 %v1386
        %2042 = vmatprep.subr.bf16.mxu0 %v1391
        %2043 = vmatpush1.bf16.msra.mxu0 %v1390
        %2044 = vmatprep.subr.bf16.mxu0 %v1395
        %2045 = vmatpush1.bf16.msra.mxu0 %v1394
        %2046 = vmatprep.subr.bf16.mxu0 %v1399
        %2047 = vmatpush1.bf16.msra.mxu0 %v1398
        %2048 = vmatprep.subr.bf16.mxu0 %v1403
        %2049 = vmatpush1.bf16.msra.mxu0 %v1402
        %2050 = vmatprep.subr.bf16.mxu0 %v1407
        %2051 = vmatpush1.bf16.msra.mxu0 %v1406
        %2052 = vmatprep.subr.bf16.mxu0 %v1411
        %2053 = vmatpush1.bf16.msra.mxu0 %v1410
        %2054 = vmatprep.subr.bf16.mxu0 %v1415
        %2055 = vmatpush1.bf16.msra.mxu0 %v1414
        %2056 = vmatprep.subr.bf16.mxu0 %v1419
        %2057 = vmatpush1.bf16.msra.mxu0 %v1418
        %2058 = vmatprep.subr.bf16.mxu0 %v1423
        %2059 = vmatpush1.bf16.msra.mxu0 %v1422
        %2060 = vmatprep.subr.bf16.mxu0 %v1427
        %2061 = vmatpush1.bf16.msra.mxu0 %v1426
        %2062 = vmatprep.subr.bf16.mxu0 %v1431
        %2063 = vmatpush1.bf16.msra.mxu0 %v1430
        %2064 = vmatprep.subr.bf16.mxu0 %v1435
        %2065 = vmatpush1.bf16.msra.mxu0 %v1434
        %2066 = vmatprep.subr.bf16.mxu0 %v1439
        %2067 = vmatpush1.bf16.msra.mxu0 %v1438
        %2068 = vmatprep.subr.bf16.mxu0 %v1443
        %2069 = vmatpush1.bf16.msra.mxu0 %v1442
        %2070 = vmatprep.mubr.bf16.mxu0 %v554
        %2071 = vmatmul.mubr.bf16.gmra.mrb[0].mxu0 %v553
        %v2072 = vpop.f32.mrb[0].mxu0
        %v2073 = vadd.f32 %v2032, %v2072
        %v2074 = vpop.f32.mrb[0].mxu0
        %v2075 = vadd.f32 %v2034, %v2074
        %v2076 = vpop.f32.mrb[0].mxu0
        %v2077 = vpop.f32.mrb[0].mxu0
        %2078 = vdwg.mxu0
        %2079 = vmatprep.subr.bf16.mxu0 %v1447
        %2080 = vmatpush1.bf16.msra.mxu0 %v1446
        %2081 = vmatprep.subr.bf16.mxu0 %v1451
        %2082 = vmatpush1.bf16.msra.mxu0 %v1450
        %2083 = vmatprep.subr.bf16.mxu0 %v1455
        %2084 = vmatpush1.bf16.msra.mxu0 %v1454
        %2085 = vmatprep.subr.bf16.mxu0 %v1459
        %2086 = vmatpush1.bf16.msra.mxu0 %v1458
        %2087 = vmatprep.subr.bf16.mxu0 %v1463
        %2088 = vmatpush1.bf16.msra.mxu0 %v1462
        %2089 = vmatprep.subr.bf16.mxu0 %v1467
        %2090 = vmatpush1.bf16.msra.mxu0 %v1466
        %2091 = vmatprep.subr.bf16.mxu0 %v1471
        %2092 = vmatpush1.bf16.msra.mxu0 %v1470
        %2093 = vmatprep.subr.bf16.mxu0 %v1475
        %2094 = vmatpush1.bf16.msra.mxu0 %v1474
        %2095 = vmatprep.subr.bf16.mxu0 %v1479
        %2096 = vmatpush1.bf16.msra.mxu0 %v1478
        %2097 = vmatprep.subr.bf16.mxu0 %v1483
        %2098 = vmatpush1.bf16.msra.mxu0 %v1482
        %2099 = vmatprep.subr.bf16.mxu0 %v1487
        %2100 = vmatpush1.bf16.msra.mxu0 %v1486
        %2101 = vmatprep.subr.bf16.mxu0 %v1491
        %2102 = vmatpush1.bf16.msra.mxu0 %v1490
        %2103 = vmatprep.subr.bf16.mxu0 %v1495
        %2104 = vmatpush1.bf16.msra.mxu0 %v1494
        %2105 = vmatprep.subr.bf16.mxu0 %v1499
        %2106 = vmatpush1.bf16.msra.mxu0 %v1498
        %2107 = vmatprep.subr.bf16.mxu0 %v1503
        %2108 = vmatpush1.bf16.msra.mxu0 %v1502
        %2109 = vmatprep.subr.bf16.mxu0 %v1507
        %2110 = vmatpush1.bf16.msra.mxu0 %v1506
        %2111 = vmatprep.mubr.bf16.mxu0 %v556
        %2112 = vmatmul.mubr.bf16.gmra.mrb[0].mxu0 %v555
        %v2113 = vpop.f32.mrb[0].mxu0
        %v2114 = vadd.f32 %v2073, %v2113
        %v2115 = vpop.f32.mrb[0].mxu0
        %v2116 = vadd.f32 %v2075, %v2115
        %v2117 = vpop.f32.mrb[0].mxu0
        %v2118 = vpop.f32.mrb[0].mxu0
        %2119 = vdwg.mxu0
        %2120 = vmatprep.subr.bf16.mxu0 %v1511
        %2121 = vmatpush1.bf16.msra.mxu0 %v1510
        %2122 = vmatprep.subr.bf16.mxu0 %v1515
        %2123 = vmatpush1.bf16.msra.mxu0 %v1514
        %2124 = vmatprep.subr.bf16.mxu0 %v1519
        %2125 = vmatpush1.bf16.msra.mxu0 %v1518
        %2126 = vmatprep.subr.bf16.mxu0 %v1523
        %2127 = vmatpush1.bf16.msra.mxu0 %v1522
        %2128 = vmatprep.subr.bf16.mxu0 %v1527
        %2129 = vmatpush1.bf16.msra.mxu0 %v1526
        %2130 = vmatprep.subr.bf16.mxu0 %v1531
        %2131 = vmatpush1.bf16.msra.mxu0 %v1530
        %2132 = vmatprep.subr.bf16.mxu0 %v1535
        %2133 = vmatpush1.bf16.msra.mxu0 %v1534
        %2134 = vmatprep.subr.bf16.mxu0 %v1539
        %2135 = vmatpush1.bf16.msra.mxu0 %v1538
        %2136 = vmatprep.subr.bf16.mxu0 %v1543
        %2137 = vmatpush1.bf16.msra.mxu0 %v1542
        %2138 = vmatprep.subr.bf16.mxu0 %v1547
        %2139 = vmatpush1.bf16.msra.mxu0 %v1546
        %2140 = vmatprep.subr.bf16.mxu0 %v1551
        %2141 = vmatpush1.bf16.msra.mxu0 %v1550
        %2142 = vmatprep.subr.bf16.mxu0 %v1555
        %2143 = vmatpush1.bf16.msra.mxu0 %v1554
        %2144 = vmatprep.subr.bf16.mxu0 %v1559
        %2145 = vmatpush1.bf16.msra.mxu0 %v1558
        %2146 = vmatprep.subr.bf16.mxu0 %v1563
        %2147 = vmatpush1.bf16.msra.mxu0 %v1562
        %2148 = vmatprep.subr.bf16.mxu0 %v1831
        %2149 = vmatpush1.bf16.msra.mxu0 %v1828
        %2150 = vmatprep.subr.bf16.mxu0 0
        %2151 = vmatpush1.bf16.msra.mxu0 0
        %2152 = vmatprep.mubr.bf16.mxu0 %v1818
        %2153 = vmatmul.mubr.bf16.gmra.mrb[0].mxu0 %v557
        %v2154 = vpop.f32.mrb[0].mxu0
        %v2155 = vadd.f32 %v2114, %v2154
        %v2156 = vpop.f32.mrb[0].mxu0
        %v2157 = vadd.f32 %v2116, %v2156
        %v2158 = vpop.f32.mrb[0].mxu0
        %v2159 = vpop.f32.mrb[0].mxu0
        %2160 = vdwg.mxu0
        %2161 = vst [vmem:[%s260] sm:$0xff] %v1991
        %2162 = vst [vmem:[%s260 + $0x8] sm:$0xff] %v1993
        %2163 = vst [vmem:[%s260 + $0x10] sm:$0xff] %v2155
        %2164 = vst [vmem:[%s260 + $0x18] sm:$0xff] %v2157
        %s2165 = smul.u32 4, %s25
        %p2166 = scmp.lt.s32.totalorder %s24, 2
        %s2167 = scalar_select %p2166, %s24, 2
        %p2168 = scmp.lt.s32.totalorder %s2165, 7
        %s2169 = scalar_select %p2168, %s2165, 7
        %s2170 = smul.addr %s2167, 8
        %s2171 = sadd.s32 %s2169, %s2170
        %s2172 = smul.addr %s2171, 8
        %s2173 = scalar_lea.vmem %s3, %s2172
        // Predicated region
        $region41: #{maxvit_attention_head.2} parent=31 // pred_check
          %p2174 = pneg %p129
        $region42: #{maxvit_attention_head.2} parent=31 // pred_check_branch
          %2176 = sbr.rel (%p2174) target = $region44
        $region43: #{maxvit_attention_head.2} parent=31 // pred_region
          %s2177 = smul.u32 4, %s25
        $region44: #{maxvit_attention_head.2} parent=31 // pred_fallthru
          _
      $region32: #{maxvit_attention_head.2} parent=5 // pred_fallthru
        _
      %p2178 = scmp.le.s32.totalorder 2, %s15
      // Predicated region
      $region45: #{maxvit_attention_head.2} parent=5 // pred_check
        %p2179 = pneg %p2178
      $region46: #{maxvit_attention_head.2} parent=5 // pred_check_branch
        %2181 = sbr.rel (%p2179) target = $region48
      $region47: #{maxvit_attention_head.2} parent=5 // pred_region
        %s2182 = ssub.s32 %s15, 2
        // Predicated region
        $region49: #{maxvit_attention_head.2} parent=47 // pred_check
          %p2183 = pneg %p135
        $region50: #{maxvit_attention_head.2} parent=47 // pred_check_branch
          %2185 = sbr.rel (%p2183) target = $region52
        $region51: #{maxvit_attention_head.2} parent=47 // pred_region
          %s2186 = smul.u32 4, %s27
          %p2187 = scmp.lt.s32.totalorder %s26, 2
          %s2188 = scalar_select %p2187, %s26, 2
          %p2189 = scmp.lt.s32.totalorder %s2186, 7
          %s2190 = scalar_select %p2189, %s2186, 7
          %s2191 = smul.addr %s2188, 8
          %s2192 = sadd.s32 %s2190, %s2191
          %s2193 = smul.addr %s2192, 8
          %s2194 = scalar_lea.vmem %s3, %s2193
        $region52: #{maxvit_attention_head.2} parent=47 // pred_fallthru
          _
      $region48: #{maxvit_attention_head.2} parent=5 // pred_fallthru
        _
    $region6: #{maxvit_attention_head.2} parent=1 // loop_footer
      %s19 = sadd.s32 1, %s15
    $region7: #{maxvit_attention_head.2} parent=1 // loop_footer_branch
      %14 = sbr.rel target = $region3
    $region8: #{maxvit_attention_head.2} parent=1 // loop_exit
      _
    %2195 = vsyncpa [#allocation3], 1
    %s2196 = scalar_lea.sflag [#allocation3], 1
    %2197 = vsyncpa %s2196, 1
    %2198 = vsyncpa [#allocation5], 1
    %s2199 = scalar_lea.sflag [#allocation5], 1
    %2200 = vsyncpa %s2199, 1

</llo_original>
